<compile_context>
chip_gen: v7x
topology: tpu7x:2x2x1
jax: 0.10.0
libtpu: 0.0.40
codegen_flags: <defaults>
</compile_context>

<pallas_src>
import math
import functools

import jax
import jax.numpy as jnp
from jax import lax
from jax.experimental import pallas as pl
from jax.experimental.pallas import tpu as pltpu


# ----------------------------------------------------------------------------
# Small helpers
# ----------------------------------------------------------------------------

_SQRT1_2 = 0.7071067811865476


def _erf_approx(x):
    # Abramowitz & Stegun 7.1.26 (max abs err ~1.5e-7); exp lands on the EUP,
    # the inner divide uses the approximate EUP reciprocal to keep the VALU free.
    a1, a2, a3, a4, a5 = (0.254829592, -0.284496736, 1.421413741,
                          -1.453152027, 1.061405429)
    p = 0.3275911
    sgn = jnp.where(x >= 0.0, 1.0, -1.0)
    ax = jnp.abs(x)
    t = pl.reciprocal(1.0 + p * ax, approx=True)
    poly = ((((a5 * t + a4) * t + a3) * t + a2) * t + a1) * t
    return sgn * (1.0 - poly * jnp.exp(-ax * ax))


def _gelu(x):
    # erf-based GELU (matches torch nn.GELU() closely)
    return 0.5 * x * (1.0 + _erf_approx(x * _SQRT1_2))


def _fit_tile(dim, target, align):
    """Largest tile <= target that divides dim (falls back to the full dim)."""
    if dim <= target:
        return dim
    t = target
    while t > align and dim % t != 0:
        t //= 2
    return t if dim % t == 0 else dim


# ----------------------------------------------------------------------------
# Tiled linear (matmul): y = act(x @ w + b [+ s*vrow]) [+ residual] [- mean(y)]
# w is pre-transposed [K, N] and stored in bf16; accumulation is f32.
# ----------------------------------------------------------------------------

def _mm_kernel(*refs, n_k, activation, center, has_residual, has_rank1):
    o_ref, acc_ref = refs[-2], refs[-1]
    x_ref, w_ref, b_ref = refs[0], refs[1], refs[2]
    pos = 3
    if has_rank1:
        s_ref, vrow_ref = refs[pos], refs[pos + 1]
        pos += 2
    if has_residual:
        r_ref = refs[pos]
        pos += 1

    @pl.when(pl.program_id(2) == 0)
    def _():
        acc_ref[...] = jnp.zeros_like(acc_ref)

    acc_ref[...] += jnp.dot(x_ref[...], w_ref[...],
                            preferred_element_type=jnp.float32)

    @pl.when(pl.program_id(2) == n_k - 1)
    def _():
        y = acc_ref[...] + b_ref[...]
        if has_rank1:
            y = y + s_ref[...] * vrow_ref[...]
        if activation == "gelu":
            y = _gelu(y)
        if has_residual:
            y = y + r_ref[...].astype(jnp.float32)
        if center:
            y = y - jnp.mean(y, axis=-1, keepdims=True)
        o_ref[...] = y.astype(o_ref.dtype)


def linear(x, w, b=None, *, activation=None, residual=None, rank1=None,
           center=False, x_offset=0, out_dtype=jnp.bfloat16,
           tm=512, tn=512, tk=1024):
    """y = act(x[:, off:off+K] @ w + b [+ rank1]) [+ residual]; w is [K, N] bf16."""
    M = x.shape[0]
    K, N = w.shape
    tm = _fit_tile(M, tm, 8)
    tn = _fit_tile(N, tn, 128)
    tk = _fit_tile(K, tk, 128)

    # Column-offset view of a wider buffer (free when tiles are 128-aligned);
    # otherwise fall back to a (small) explicit slice.
    if x.shape[1] != K or x_offset != 0:
        if not (x_offset % tk == 0 and tk % 128 == 0):
            x = lax.slice(x, (0, x_offset), (M, x_offset + K))
            x_offset = 0
    off_blk = x_offset // tk

    grid = (M // tm, N // tn, K // tk)
    n_k = grid[2]
    fuse_center = center and grid[1] == 1   # centering needs the full N row

    if b is None:
        b = jnp.zeros((N,), jnp.float32)
    b2 = b.reshape(1, N).astype(jnp.float32)
    xb = x.astype(jnp.bfloat16)
    wb = w.astype(jnp.bfloat16)

    in_specs = [
        pl.BlockSpec((tm, tk), lambda i, j, k: (i, k + off_blk)),
        pl.BlockSpec((tk, tn), lambda i, j, k: (k, j)),
        pl.BlockSpec((1, tn), lambda i, j, k: (0, j)),
    ]
    args = [xb, wb, b2]

    has_rank1 = rank1 is not None
    if has_rank1:
        s_col, v_row = rank1
        in_specs += [pl.BlockSpec((tm, 1), lambda i, j, k: (i, 0)),
                     pl.BlockSpec((1, tn), lambda i, j, k: (0, j))]
        args += [s_col.reshape(M, 1).astype(jnp.float32),
                 v_row.reshape(1, N).astype(jnp.float32)]

    has_residual = residual is not None
    if has_residual:
        in_specs.append(pl.BlockSpec((tm, tn), lambda i, j, k: (i, j)))
        args.append(residual)   # native dtype; upcast inside the kernel

    kern = functools.partial(_mm_kernel, n_k=n_k, activation=activation,
                             center=fuse_center, has_residual=has_residual,
                             has_rank1=has_rank1)

    out = pl.pallas_call(
        kern,
        grid=grid,
        in_specs=in_specs,
        out_specs=pl.BlockSpec((tm, tn), lambda i, j, k: (i, j)),
        out_shape=jax.ShapeDtypeStruct((M, N), out_dtype),
        scratch_shapes=[pltpu.VMEM((tm, tn), jnp.float32)],
        compiler_params=pltpu.CompilerParams(
            dimension_semantics=("parallel", "parallel", "arbitrary")),
    )(*args)

    if center and not fuse_center:
        # TODO(synk): for production vocab sizes fuse this via per-tile partial
        # row-sums instead of a second full pass over the logits.
        o32 = out.astype(jnp.float32)
        out = (o32 - jnp.mean(o32, axis=-1, keepdims=True)).astype(out_dtype)
    return out


# ----------------------------------------------------------------------------
# LayerNorm kernel (optionally fuses the "y - mean(y) + 1.0" post-step)
# ----------------------------------------------------------------------------

def _ln_kernel(x_ref, w_ref, b_ref, o_ref, *, post_center):
    x = x_ref[...].astype(jnp.float32)
    mean = jnp.mean(x, axis=-1, keepdims=True)
    xc = x - mean
    var = jnp.mean(xc * xc, axis=-1, keepdims=True)
    y = xc * lax.rsqrt(var + 1e-5) * w_ref[...] + b_ref[...]
    if post_center:
        y = y - jnp.mean(y, axis=-1, keepdims=True) + 1.0
    o_ref[...] = y.astype(o_ref.dtype)


def layernorm(x2d, w, b, *, post_center=False, out_dtype=jnp.bfloat16):
    M, H = x2d.shape
    tm = _fit_tile(M, 256, 8)
    kern = functools.partial(_ln_kernel, post_center=post_center)
    return pl.pallas_call(
        kern,
        grid=(M // tm,),
        in_specs=[pl.BlockSpec((tm, H), lambda i: (i, 0)),
                  pl.BlockSpec((1, H), lambda i: (0, 0)),
                  pl.BlockSpec((1, H), lambda i: (0, 0))],
        out_specs=pl.BlockSpec((tm, H), lambda i: (i, 0)),
        out_shape=jax.ShapeDtypeStruct((M, H), out_dtype),
        compiler_params=pltpu.CompilerParams(dimension_semantics=("parallel",)),
    )(x2d,
      w.reshape(1, H).astype(jnp.float32),
      b.reshape(1, H).astype(jnp.float32))


# ----------------------------------------------------------------------------
# Flash-style attention: grid (B, q-tiles, kv-tiles), [B, S, heads*dim] layout,
# online softmax in VMEM scratch; heads handled by a static in-kernel loop.
# ----------------------------------------------------------------------------

def _attn_kernel(q_ref, kv_ref, o_ref, m_scr, l_scr, acc_scr, *,
                 nh, hd, dq, scale, n_kv):
    kv_i = pl.program_id(2)

    @pl.when(kv_i == 0)
    def _():
        m_scr[...] = jnp.full(m_scr.shape, -jnp.inf, m_scr.dtype)
        l_scr[...] = jnp.zeros(l_scr.shape, l_scr.dtype)
        acc_scr[...] = jnp.zeros(acc_scr.shape, acc_scr.dtype)

    q = q_ref[0]      # [tq,  nh*dq]          bf16
    kv = kv_ref[0]    # [tkv, nh*dq + nh*hd]  bf16 (keys | values)
    v_off = nh * dq

    # TODO(synk): for very large head counts, tile heads via an extra grid axis
    # instead of this static unroll.
    for h in range(nh):
        qh = q[:, h * dq:(h + 1) * dq]
        kh = kv[:, h * dq:(h + 1) * dq]
        vh = kv[:, v_off + h * hd: v_off + (h + 1) * hd]
        s = jnp.dot(qh, kh.T, preferred_element_type=jnp.float32) * scale
        m_prev = m_scr[h]
        m_new = jnp.maximum(m_prev, jnp.max(s, axis=-1, keepdims=True))
        alpha = jnp.exp(m_prev - m_new)
        p = jnp.exp(s - m_new)
        l_scr[h] = alpha * l_scr[h] + jnp.sum(p, axis=-1, keepdims=True)
        acc_scr[h] = alpha * acc_scr[h] + jnp.dot(
            p.astype(kv.dtype), vh, preferred_element_type=jnp.float32)
        m_scr[h] = m_new

    @pl.when(kv_i == n_kv - 1)
    def _():
        outs = []
        for h in range(nh):
            inv = pl.reciprocal(l_scr[h], approx=True)
            outs.append(acc_scr[h] * inv)
        o_ref[0] = jnp.concatenate(outs, axis=-1).astype(o_ref.dtype)


def attention(q_buf, kv_buf, *, B, S, nh, hd, rd):
    """q_buf: [T, nh*(hd+rd)] bf16; kv_buf: [T, nh*(hd+rd)+nh*hd] bf16
    (per-head [key|key_rope] columns then per-head value columns).
    Returns [T, nh*hd] bf16 context in the same token order."""
    dq = hd + rd
    scale = 1.0 / math.sqrt(dq)
    fq = nh * dq
    fkv = nh * dq + nh * hd
    q3 = q_buf.reshape(B, S, fq)
    kv3 = kv_buf.reshape(B, S, fkv)
    tq = _fit_tile(S, 256, 8)
    tkv = _fit_tile(S, 256, 8)
    n_kv = S // tkv
    kern = functools.partial(_attn_kernel, nh=nh, hd=hd, dq=dq, scale=scale,
                             n_kv=n_kv)
    out = pl.pallas_call(
        kern,
        grid=(B, S // tq, n_kv),
        in_specs=[pl.BlockSpec((1, tq, fq), lambda b, qi, ki: (b, qi, 0)),
                  pl.BlockSpec((1, tkv, fkv), lambda b, qi, ki: (b, ki, 0))],
        out_specs=pl.BlockSpec((1, tq, nh * hd), lambda b, qi, ki: (b, qi, 0)),
        out_shape=jax.ShapeDtypeStruct((B, S, nh * hd), jnp.bfloat16),
        scratch_shapes=[pltpu.VMEM((nh, tq, 1), jnp.float32),
                        pltpu.VMEM((nh, tq, 1), jnp.float32),
                        pltpu.VMEM((nh, tq, hd), jnp.float32)],
        compiler_params=pltpu.CompilerParams(
            dimension_semantics=("parallel", "parallel", "arbitrary")),
    )(q3, kv3)
    return out.reshape(B * S, nh * hd)


# ----------------------------------------------------------------------------
# MoE kernel: grid (token-tiles, experts+shared, inter-tiles); fused FFN +
# dispatch weight + 0.1 scale + max-abs normalization + residual add.
# ----------------------------------------------------------------------------

def _moe_kernel(x_ref, up_w_ref, up_b_ref, dn_w_ref, dn_b_ref, wd_ref, res_ref,
                o_ref, acc_ref, *, n_e, n_ki):
    e = pl.program_id(1)
    ki = pl.program_id(2)

    @pl.when((e == 0) & (ki == 0))
    def _():
        acc_ref[...] = jnp.zeros_like(acc_ref)

    x = x_ref[...]                                                   # [tm, H] bf16
    h = jnp.dot(x, up_w_ref[0], preferred_element_type=jnp.float32) + up_b_ref[0]
    h = _gelu(h)                                                     # [tm, tki]
    y = jnp.dot(h.astype(jnp.bfloat16), dn_w_ref[0],
                preferred_element_type=jnp.float32)                  # [tm, H]
    y = y + jnp.where(ki == 0, 1.0, 0.0) * dn_b_ref[0]
    acc_ref[...] += y * wd_ref[0]                                    # wd already *0.1

    @pl.when((e == n_e - 1) & (ki == n_ki - 1))
    def _():
        acc = acc_ref[...]
        denom = jnp.max(jnp.abs(acc), axis=-1, keepdims=True) + 1e-6
        o_ref[...] = (res_ref[...] + acc / denom).astype(o_ref.dtype)


def moe_forward(x2d, residual2d, p, cfg):
    """x2d: normalized MoE input [T, H] bf16; residual2d: pre-norm x (f32).
    Returns residual + normalized MoE output (f32)."""
    num_experts = cfg["num_experts"]
    top_k = cfg["activated_experts"]
    T, H = x2d.shape

    # Router (tiny N=num_experts output -> plain JAX to avoid narrow stores).
    gate_logits = jnp.dot(x2d.astype(jnp.float32), p["gate_w"],
                          preferred_element_type=jnp.float32)
    scores = jax.nn.sigmoid(gate_logits + p["bias"][None, :])
    top_scores, top_idx = lax.top_k(scores, top_k)
    top_scores = top_scores / (jnp.sum(top_scores, axis=-1, keepdims=True) + 1e-6)
    onehot = (top_idx[..., None] ==
              jnp.arange(num_experts)[None, None, :]).astype(jnp.float32)
    w_routed = jnp.sum(top_scores[..., None] * onehot, axis=1)        # [T, E]
    w_all = jnp.concatenate([w_routed, jnp.ones((T, 1), jnp.float32)], axis=-1)
    # [ne, T, 1] per-row scalars, 0.1 scale folded in (shared expert weight 1.0).
    w_disp = (0.1 * w_all).T.reshape(num_experts + 1, T, 1)

    # TODO(synk): the reference also updates self.bias / expert_load running
    # state in-place during forward; these are training-time side effects that
    # do not affect this forward's output, so they are omitted.
    # TODO(synk): for production expert counts use a grouped/ragged matmul
    # (sort tokens by expert + scalar-prefetch offsets) instead of the dense
    # (all tokens x all experts) accumulation used here.

    ne = num_experts + 1
    inter = p["up_w"].shape[-1]
    tm = _fit_tile(T, 512, 8)
    tki = _fit_tile(inter, 512, 128)
    grid = (T // tm, ne, inter // tki)
    kern = functools.partial(_moe_kernel, n_e=ne, n_ki=grid[2])
    out = pl.pallas_call(
        kern,
        grid=grid,
        in_specs=[
            pl.BlockSpec((tm, H), lambda m, e, ki: (m, 0)),
            pl.BlockSpec((1, H, tki), lambda m, e, ki: (e, 0, ki)),
            pl.BlockSpec((1, 1, tki), lambda m, e, ki: (e, 0, ki)),
            pl.BlockSpec((1, tki, H), lambda m, e, ki: (e, ki, 0)),
            pl.BlockSpec((1, 1, H), lambda m, e, ki: (e, 0, 0)),
            pl.BlockSpec((1, tm, 1), lambda m, e, ki: (e, m, 0)),
            pl.BlockSpec((tm, H), lambda m, e, ki: (m, 0)),
        ],
        out_specs=pl.BlockSpec((tm, H), lambda m, e, ki: (m, 0)),
        out_shape=jax.ShapeDtypeStruct((T, H), jnp.float32),
        scratch_shapes=[pltpu.VMEM((tm, H), jnp.float32)],
        compiler_params=pltpu.CompilerParams(
            dimension_semantics=("parallel", "arbitrary", "arbitrary")),
    )(x2d.astype(jnp.bfloat16), p["up_w"], p["up_b"], p["down_w"], p["down_b"],
      w_disp, residual2d)
    return out


# ----------------------------------------------------------------------------
# MLA (multi-head latent attention)
# ----------------------------------------------------------------------------

def _make_rope_tables(nh, hd, rd, extra_cols=0):
    """Per-(head, pair) cos/sin for buffers laid out per head as [hd | rd]
    (identity on the hd part) plus `extra_cols` trailing identity (value)
    columns. Reproduces the reference RotaryPositionalEmbedding quirk: for
    [B, S, nh, rd] inputs its 'positions' iterate the heads axis, so the phase
    depends on the head index, not the sequence position."""
    assert hd % 2 == 0 and rd % 2 == 0 and extra_cols % 2 == 0
    inv_freq = 1.0 / (10000.0 ** (jnp.arange(0, rd, 2, dtype=jnp.float32) / rd))
    ang = jnp.arange(nh, dtype=jnp.float32)[:, None] * inv_freq[None, :]
    cos = jnp.concatenate([jnp.ones((nh, hd // 2), jnp.float32),
                           jnp.cos(ang)], axis=-1).reshape(-1)
    sin = jnp.concatenate([jnp.zeros((nh, hd // 2), jnp.float32),
                           jnp.sin(ang)], axis=-1).reshape(-1)
    if extra_cols:
        cos = jnp.concatenate([cos, jnp.ones((extra_cols // 2,), jnp.float32)])
        sin = jnp.concatenate([sin, jnp.zeros((extra_cols // 2,), jnp.float32)])
    return cos[None, :], sin[None, :]


def _apply_rope_2d(x2d, cos, sin):
    # TODO(synk): could be fused into the attention kernel, but XLA fuses this
    # single elementwise pass with the bf16 cast already.
    T, F = x2d.shape
    xr = x2d.astype(jnp.float32).reshape(T, F // 2, 2)
    x1, x2 = xr[..., 0], xr[..., 1]
    y = jnp.stack([x1 * cos - x2 * sin, x1 * sin + x2 * cos], axis=-1)
    return y.reshape(T, F).astype(jnp.bfloat16)


def mla_forward(x2d, residual2d, p, cfg, B, S):
    """x2d: normalized attention input [T, H] bf16; residual2d: pre-norm x (f32).
    Returns residual + output_proj(attention(x)) as [T, H] f32."""
    nh, hd, rd = cfg["num_heads"], cfg["head_dim"], cfg["rope_dim"]
    kvc = cfg["kv_compression_dim"]
    dq = hd + rd

    # fused kv_down | query_down
    down = linear(x2d, p["down_w"], p["down_b"])                 # [T, kvc+qc] bf16
    # fused per-head [key | key_rope] columns, then per-head value columns
    kv_up = linear(down, p["kv_up_w"], p["kv_up_b"])             # [T, nh*dq + nh*hd]
    # fused per-head [query | query_rope] columns (reads down[:, kvc:] in place)
    q_up = linear(down, p["q_up_w"], p["q_up_b"], x_offset=kvc)  # [T, nh*dq]

    cos_q, sin_q = _make_rope_tables(nh, hd, rd, extra_cols=0)
    cos_kv, sin_kv = _make_rope_tables(nh, hd, rd, extra_cols=nh * hd)
    q_buf = _apply_rope_2d(q_up, cos_q, sin_q)
    kv_buf = _apply_rope_2d(kv_up, cos_kv, sin_kv)

    ctx = attention(q_buf, kv_buf, B=B, S=S, nh=nh, hd=hd, rd=rd)  # [T, nh*hd]

    # output projection with fused residual add (x + attn_out); residual stream f32
    return linear(ctx, p["out_w"], p["out_b"], residual=residual2d,
                  out_dtype=jnp.float32)


# ----------------------------------------------------------------------------
# Multi-token prediction head
# ----------------------------------------------------------------------------

def mtp_forward(hidden2d, targets, p, B, S, depth=1):
    H = hidden2d.shape[-1]
    preds = []
    hs = hidden2d                                  # [T, H] bf16
    for d in range(depth):
        tsl = targets[:, d * S:(d + 1) * S].reshape(B * S, 1).astype(jnp.float32)
        lp = p["layers"][d]
        # concat([h, target]) @ W0 == h @ W0[:H] + target * W0[H]; the rank-1
        # term is fused into the matmul epilogue so K stays lane-aligned at H.
        h1 = linear(hs, lp["w0"], lp["b0"], activation="gelu",
                    rank1=(tsl, lp["w0_t"]))
        proj = linear(h1, lp["w2"], lp["b2"])
        norm = layernorm(proj, p["norm_w"], p["norm_b"], out_dtype=jnp.float32)
        preds.append(norm.reshape(B, S, H))
        hs = proj
    return jnp.stack(preds, axis=1)


# ----------------------------------------------------------------------------
# Full forward
# ----------------------------------------------------------------------------

def deepseek_forward(params, input_ids, target_ids, config):
    B, S = input_ids.shape
    H = config["hidden_dim"]
    # TODO(synk): embedding gather left to XLA (data-dependent row gather).
    x2 = params["embedding"][input_ids].reshape(B * S, H)          # f32 residual stream

    for lp in params["layers"]:
        # attn_norm + (a - mean(a) + 1.0) fused in one LN kernel (bf16 out)
        a_in = layernorm(x2, lp["attn_norm_w"], lp["attn_norm_b"],
                         post_center=True)
        x2 = mla_forward(a_in, x2, lp["attn"], config, B, S)        # includes residual

        m_in = layernorm(x2, lp["moe_norm_w"], lp["moe_norm_b"])
        x2 = moe_forward(m_in, x2, lp["moe"], config)               # includes residual

    xn = layernorm(x2, params["final_norm_w"], params["final_norm_b"])
    # output head with fused "logits - mean(logits)" epilogue (f32 logits)
    logits = linear(xn, params["head_w"], params["head_b"], center=True,
                    out_dtype=jnp.float32)
    logits = logits.reshape(B, S, -1)

    if target_ids is not None:
        mtp_out = mtp_forward(xn, target_ids, params["mtp"], B, S, depth=1)
        return logits, mtp_out
    return logits


# ----------------------------------------------------------------------------
# Parameter initialization: matmul weights pre-transposed ([in, out]) in bf16,
# fused along the output dim where projections share an input; biases/norms f32.
# ----------------------------------------------------------------------------

def init_params(key, cfg):
    H = cfg["hidden_dim"]
    V = cfg["vocab_size"]
    E = cfg["num_experts"]
    nh, hd, rd = cfg["num_heads"], cfg["head_dim"], cfg["rope_dim"]
    kvc, qc = cfg["kv_compression_dim"], cfg["query_compression_dim"]
    dq = hd + rd
    inter = 4 * H
    std = 0.02 / math.sqrt(H)

    keys = iter(jax.random.split(key, 1024))
    nk = lambda: next(keys)

    def nrm(shape, s=std, mean=0.0, dtype=jnp.float32):
        return (mean + s * jax.random.normal(nk(), shape, dtype=jnp.float32)).astype(dtype)

    def zeros(shape, dtype=jnp.float32):
        return jnp.zeros(shape, dtype)

    w16 = functools.partial(nrm, dtype=jnp.bfloat16)   # matmul weights [in, out] bf16

    def mla():
        return dict(
            down_w=w16((H, kvc + qc)), down_b=zeros((kvc + qc,)),
            kv_up_w=w16((kvc, nh * dq + nh * hd)),
            kv_up_b=zeros((nh * dq + nh * hd,)),
            q_up_w=w16((qc, nh * dq)), q_up_b=zeros((nh * dq,)),
            out_w=w16((nh * hd, H)), out_b=zeros((H,)),
        )

    def moe():
        # routed experts 0..E-1; shared expert stacked at index E
        return dict(
            gate_w=nrm((H, E)),
            bias=zeros((E,)),
            up_w=w16((E + 1, H, inter)), up_b=zeros((E + 1, 1, inter)),
            down_w=w16((E + 1, inter, H)), down_b=zeros((E + 1, 1, H)),
        )

    layers = []
    for _ in range(cfg["num_layers"]):
        layers.append(dict(
            attn_norm_w=nrm((H,), 0.02, 1.0), attn_norm_b=nrm((H,), 0.02, 0.0),
            attn=mla(),
            moe_norm_w=nrm((H,), 0.02, 1.0), moe_norm_b=nrm((H,), 0.02, 0.0),
            moe=moe(),
        ))

    mtp = dict(
        layers=[dict(w0=w16((H, 2 * H)), w0_t=nrm((2 * H,)), b0=zeros((2 * H,)),
                     w2=w16((2 * H, H)), b2=zeros((H,)))],
        norm_w=jnp.ones((H,), jnp.float32), norm_b=zeros((H,)),
    )

    return dict(
        embedding=nrm((V, H)),
        layers=layers,
        final_norm_w=nrm((H,), 0.02, 1.0), final_norm_b=nrm((H,), 0.02, 0.0),
        head_w=w16((H, V)), head_b=zeros((V,)),
        mtp=mtp,
    )


# ----------------------------------------------------------------------------
# Main
# ----------------------------------------------------------------------------

if __name__ == "__main__":
    config = dict(
        vocab_size=128,
        hidden_dim=64,
        num_heads=4,
        head_dim=16,
        kv_compression_dim=32,
        query_compression_dim=32,
        rope_dim=16,
        num_experts=4,
        activated_experts=2,
        num_layers=2,
    )

    key = jax.random.PRNGKey(0)
    kp, ki, kt = jax.random.split(key, 3)
    params = init_params(kp, config)

    B, S = 2, 8
    input_ids = jax.random.randint(ki, (B, S), 0, config["vocab_size"], dtype=jnp.int32)
    target_ids = jax.random.randint(kt, (B, S), 0, config["vocab_size"], dtype=jnp.int32)

    fwd = jax.jit(lambda p, ids, tgt: deepseek_forward(p, ids, tgt, config))
    logits, mtp_out = fwd(params, input_ids, target_ids)
    jax.block_until_ready((logits, mtp_out))

    assert logits.shape == (B, S, config["vocab_size"])
    assert mtp_out.shape == (B, 1, S, config["hidden_dim"])
    assert bool(jnp.all(jnp.isfinite(logits))) and bool(jnp.all(jnp.isfinite(mtp_out)))
    print("KERNEL_OK")
</pallas_src>

<mosaic_0001>
module attributes {stable_mosaic.version = 11 : i64} {
  func.func @_mm_kernel(%arg0: i32, %arg1: i32, %arg2: i32, %arg3: memref<16x64xbf16, #tpu.memory_space<vmem>>, %arg4: memref<64x64xbf16, #tpu.memory_space<vmem>>, %arg5: memref<1x64xf32, #tpu.memory_space<vmem>>, %arg6: memref<16x64xbf16, #tpu.memory_space<vmem>>, %arg7: memref<16x64xf32, #tpu.memory_space<vmem>>) attributes {dimension_semantics = [#tpu.dimension_semantics<parallel>, #tpu.dimension_semantics<parallel>, #tpu.dimension_semantics<arbitrary>], iteration_bounds = array<i64: 1, 1, 1>, scalar_prefetch = 0 : i64, scratch_operands = 1 : i64, tpu.core_type = #tpu.core_type<tc>, window_params = [{transform_indices = @transform_0, window_bounds = array<i64: 16, 64>}, {transform_indices = @transform_1, window_bounds = array<i64: 64, 64>}, {transform_indices = @transform_2, window_bounds = array<i64: 1, 64>}, {transform_indices = @transform_3, window_bounds = array<i64: 16, 64>}]} {
    %c0_i32 = arith.constant 0 : i32
    %0 = arith.cmpi eq, %arg2, %c0_i32 : i32
    %1 = arith.extui %0 : i1 to i32
    %c0_i32_0 = arith.constant 0 : i32
    %2 = arith.cmpi ne, %1, %c0_i32_0 : i32
    scf.if %2 {
      %cst_10 = arith.constant 0.000000e+00 : f32
      %12 = vector.broadcast %cst_10 : f32 to vector<16x64xf32>
      %c0_11 = arith.constant 0 : index
      %c0_12 = arith.constant 0 : index
      %13 = vector.load %arg7[%c0_11, %c0_12] : memref<16x64xf32, #tpu.memory_space<vmem>>, vector<16x64xf32>
      tpu.vector_store %arg7[%c0_11, %c0_12], %12 {strides = array<i32>} : memref<16x64xf32, #tpu.memory_space<vmem>>, vector<16x64xf32>,
    } else {
    }
    %c0 = arith.constant 0 : index
    %c0_1 = arith.constant 0 : index
    %3 = vector.load %arg7[%c0, %c0_1] : memref<16x64xf32, #tpu.memory_space<vmem>>, vector<16x64xf32>
    %c0_2 = arith.constant 0 : index
    %c0_3 = arith.constant 0 : index
    %4 = vector.load %arg3[%c0_2, %c0_3] : memref<16x64xbf16, #tpu.memory_space<vmem>>, vector<16x64xbf16>
    %c0_4 = arith.constant 0 : index
    %c0_5 = arith.constant 0 : index
    %5 = vector.load %arg4[%c0_4, %c0_5] : memref<64x64xbf16, #tpu.memory_space<vmem>>, vector<64x64xbf16>
    %cst = arith.constant dense<0.000000e+00> : vector<16x64xf32>
    %6 = tpu.matmul %4, %5, %cst {dimension_numbers = #tpu.dot_dimension_numbers<[1], [0], [0], [1], [0, 0, 1, 1], [], []>} : vector<16x64xbf16>, vector<64x64xbf16>, vector<16x64xf32> -> vector<16x64xf32>
    %7 = arith.addf %3, %6 : vector<16x64xf32>
    %c0_6 = arith.constant 0 : index
    %c0_7 = arith.constant 0 : index
    %8 = vector.load %arg7[%c0_6, %c0_7] : memref<16x64xf32, #tpu.memory_space<vmem>>, vector<16x64xf32>
    tpu.vector_store %arg7[%c0_6, %c0_7], %7 {strides = array<i32>} : memref<16x64xf32, #tpu.memory_space<vmem>>, vector<16x64xf32>,
    %c0_i32_8 = arith.constant 0 : i32
    %9 = arith.cmpi eq, %arg2, %c0_i32_8 : i32
    %10 = arith.extui %9 : i1 to i32
    %c0_i32_9 = arith.constant 0 : i32
    %11 = arith.cmpi ne, %10, %c0_i32_9 : i32
    scf.if %11 {
      %c0_10 = arith.constant 0 : index
      %c0_11 = arith.constant 0 : index
      %12 = vector.load %arg7[%c0_10, %c0_11] : memref<16x64xf32, #tpu.memory_space<vmem>>, vector<16x64xf32>
      %c0_12 = arith.constant 0 : index
      %c0_13 = arith.constant 0 : index
      %13 = vector.load %arg5[%c0_12, %c0_13] : memref<1x64xf32, #tpu.memory_space<vmem>>, vector<1x64xf32>
      %14 = vector.broadcast %13 : vector<1x64xf32> to vector<16x64xf32>
      %15 = arith.addf %12, %14 : vector<16x64xf32>
      %16 = arith.truncf %15 : vector<16x64xf32> to vector<16x64xbf16>
      %c0_14 = arith.constant 0 : index
      %c0_15 = arith.constant 0 : index
      %17 = vector.load %arg6[%c0_14, %c0_15] : memref<16x64xbf16, #tpu.memory_space<vmem>>, vector<16x64xbf16>
      tpu.vector_store %arg6[%c0_14, %c0_15], %16 {strides = array<i32>} : memref<16x64xbf16, #tpu.memory_space<vmem>>, vector<16x64xbf16>,
    } else {
    }
    return
  }
  func.func @transform_0(%arg0: i32, %arg1: i32, %arg2: i32) -> (i32, i32) {
    %c0_i32 = arith.constant 0 : i32
    %0 = arith.addi %arg2, %c0_i32 : i32
    %c0_i32_0 = arith.constant 0 : i32
    return %arg0, %0 : i32, i32
  }
  func.func @transform_1(%arg0: i32, %arg1: i32, %arg2: i32) -> (i32, i32) {
    %c0_i32 = arith.constant 0 : i32
    return %arg2, %arg1 : i32, i32
  }
  func.func @transform_2(%arg0: i32, %arg1: i32, %arg2: i32) -> (i32, i32) {
    %c0_i32 = arith.constant 0 : i32
    %c0_i32_0 = arith.constant 0 : i32
    return %c0_i32, %arg1 : i32, i32
  }
  func.func @transform_3(%arg0: i32, %arg1: i32, %arg2: i32) -> (i32, i32) {
    %c0_i32 = arith.constant 0 : i32
    return %arg0, %arg1 : i32, i32
  }
}

module attributes {stable_mosaic.version = 11 : i64} {
  func.func @_ln_kernel(%arg0: i32, %arg1: memref<16x64xf32, #tpu.memory_space<vmem>>, %arg2: memref<1x64xf32, #tpu.memory_space<vmem>>, %arg3: memref<1x64xf32, #tpu.memory_space<vmem>>, %arg4: memref<16x64xbf16, #tpu.memory_space<vmem>>) attributes {dimension_semantics = [#tpu.dimension_semantics<parallel>], iteration_bounds = array<i64: 1>, scalar_prefetch = 0 : i64, scratch_operands = 0 : i64, tpu.core_type = #tpu.core_type<tc>, window_params = [{transform_indices = @transform_0, window_bounds = array<i64: 16, 64>}, {pipeline_mode = #tpu.pipeline_mode<synchronous>, transform_indices = @transform_1, window_bounds = array<i64: 1, 64>}, {pipeline_mode = #tpu.pipeline_mode<synchronous>, transform_indices = @transform_2, window_bounds = array<i64: 1, 64>}, {transform_indices = @transform_3, window_bounds = array<i64: 16, 64>}]} {
    %c0 = arith.constant 0 : index
    %c0_0 = arith.constant 0 : index
    %0 = vector.load %arg1[%c0, %c0_0] : memref<16x64xf32, #tpu.memory_space<vmem>>, vector<16x64xf32>
    %cst = arith.constant dense<0.000000e+00> : vector<16xf32>
    %1 = vector.multi_reduction <add>, %0, %cst [1] : vector<16x64xf32> to vector<16xf32>
    %2 = vector.shape_cast %1 : vector<16xf32> to vector<16x1xf32>
    %cst_1 = arith.constant 6.400000e+01 : f32
    %3 = vector.broadcast %cst_1 : f32 to vector<16x1xf32>
    %4 = arith.divf %2, %3 : vector<16x1xf32>
    %5 = vector.broadcast %4 : vector<16x1xf32> to vector<16x64xf32>
    %6 = arith.subf %0, %5 : vector<16x64xf32>
    %7 = arith.mulf %6, %6 : vector<16x64xf32>
    %cst_2 = arith.constant dense<0.000000e+00> : vector<16xf32>
    %8 = vector.multi_reduction <add>, %7, %cst_2 [1] : vector<16x64xf32> to vector<16xf32>
    %9 = vector.shape_cast %8 : vector<16xf32> to vector<16x1xf32>
    %cst_3 = arith.constant 6.400000e+01 : f32
    %10 = vector.broadcast %cst_3 : f32 to vector<16x1xf32>
    %11 = arith.divf %9, %10 : vector<16x1xf32>
    %cst_4 = arith.constant 9.99999974E-6 : f32
    %12 = vector.broadcast %cst_4 : f32 to vector<16x1xf32>
    %13 = arith.addf %11, %12 : vector<16x1xf32>
    %14 = math.rsqrt %13 : vector<16x1xf32>
    %15 = vector.broadcast %14 : vector<16x1xf32> to vector<16x64xf32>
    %16 = arith.mulf %6, %15 : vector<16x64xf32>
    %c0_5 = arith.constant 0 : index
    %c0_6 = arith.constant 0 : index
    %17 = vector.load %arg2[%c0_5, %c0_6] : memref<1x64xf32, #tpu.memory_space<vmem>>, vector<1x64xf32>
    %18 = vector.broadcast %17 : vector<1x64xf32> to vector<16x64xf32>
    %19 = arith.mulf %16, %18 : vector<16x64xf32>
    %c0_7 = arith.constant 0 : index
    %c0_8 = arith.constant 0 : index
    %20 = vector.load %arg3[%c0_7, %c0_8] : memref<1x64xf32, #tpu.memory_space<vmem>>, vector<1x64xf32>
    %21 = vector.broadcast %20 : vector<1x64xf32> to vector<16x64xf32>
    %22 = arith.addf %19, %21 : vector<16x64xf32>
    %cst_9 = arith.constant dense<0.000000e+00> : vector<16xf32>
    %23 = vector.multi_reduction <add>, %22, %cst_9 [1] : vector<16x64xf32> to vector<16xf32>
    %24 = vector.shape_cast %23 : vector<16xf32> to vector<16x1xf32>
    %cst_10 = arith.constant 6.400000e+01 : f32
    %25 = vector.broadcast %cst_10 : f32 to vector<16x1xf32>
    %26 = arith.divf %24, %25 : vector<16x1xf32>
    %27 = vector.broadcast %26 : vector<16x1xf32> to vector<16x64xf32>
    %28 = arith.subf %22, %27 : vector<16x64xf32>
    %cst_11 = arith.constant 1.000000e+00 : f32
    %29 = vector.broadcast %cst_11 : f32 to vector<16x64xf32>
    %30 = arith.addf %28, %29 : vector<16x64xf32>
    %31 = arith.truncf %30 : vector<16x64xf32> to vector<16x64xbf16>
    %c0_12 = arith.constant 0 : index
    %c0_13 = arith.constant 0 : index
    %32 = vector.load %arg4[%c0_12, %c0_13] : memref<16x64xbf16, #tpu.memory_space<vmem>>, vector<16x64xbf16>
    tpu.vector_store %arg4[%c0_12, %c0_13], %31 {strides = array<i32>} : memref<16x64xbf16, #tpu.memory_space<vmem>>, vector<16x64xbf16>,
    return
  }
  func.func @transform_0(%arg0: i32) -> (i32, i32) {
    %c0_i32 = arith.constant 0 : i32
    %c0_i32_0 = arith.constant 0 : i32
    return %arg0, %c0_i32 : i32, i32
  }
  func.func @transform_1(%arg0: i32) -> (i32, i32) {
    %c0_i32 = arith.constant 0 : i32
    %c0_i32_0 = arith.constant 0 : i32
    %c0_i32_1 = arith.constant 0 : i32
    return %c0_i32, %c0_i32_0 : i32, i32
  }
  func.func @transform_2(%arg0: i32) -> (i32, i32) {
    %c0_i32 = arith.constant 0 : i32
    %c0_i32_0 = arith.constant 0 : i32
    %c0_i32_1 = arith.constant 0 : i32
    return %c0_i32, %c0_i32_0 : i32, i32
  }
  func.func @transform_3(%arg0: i32) -> (i32, i32) {
    %c0_i32 = arith.constant 0 : i32
    %c0_i32_0 = arith.constant 0 : i32
    return %arg0, %c0_i32 : i32, i32
  }
}

module attributes {stable_mosaic.version = 11 : i64} {
  func.func @_mm_kernel(%arg0: i32, %arg1: i32, %arg2: i32, %arg3: memref<16x32xbf16, #tpu.memory_space<vmem>>, %arg4: memref<32x192xbf16, #tpu.memory_space<vmem>>, %arg5: memref<1x192xf32, #tpu.memory_space<vmem>>, %arg6: memref<16x192xbf16, #tpu.memory_space<vmem>>, %arg7: memref<16x192xf32, #tpu.memory_space<vmem>>) attributes {dimension_semantics = [#tpu.dimension_semantics<parallel>, #tpu.dimension_semantics<parallel>, #tpu.dimension_semantics<arbitrary>], iteration_bounds = array<i64: 1, 1, 1>, scalar_prefetch = 0 : i64, scratch_operands = 1 : i64, tpu.core_type = #tpu.core_type<tc>, window_params = [{transform_indices = @transform_0, window_bounds = array<i64: 16, 32>}, {transform_indices = @transform_1, window_bounds = array<i64: 32, 192>}, {transform_indices = @transform_2, window_bounds = array<i64: 1, 192>}, {transform_indices = @transform_3, window_bounds = array<i64: 16, 192>}]} {
    %c0_i32 = arith.constant 0 : i32
    %0 = arith.cmpi eq, %arg2, %c0_i32 : i32
    %1 = arith.extui %0 : i1 to i32
    %c0_i32_0 = arith.constant 0 : i32
    %2 = arith.cmpi ne, %1, %c0_i32_0 : i32
    scf.if %2 {
      %cst_10 = arith.constant 0.000000e+00 : f32
      %12 = vector.broadcast %cst_10 : f32 to vector<16x192xf32>
      %c0_11 = arith.constant 0 : index
      %c0_12 = arith.constant 0 : index
      %13 = vector.load %arg7[%c0_11, %c0_12] : memref<16x192xf32, #tpu.memory_space<vmem>>, vector<16x192xf32>
      tpu.vector_store %arg7[%c0_11, %c0_12], %12 {strides = array<i32>} : memref<16x192xf32, #tpu.memory_space<vmem>>, vector<16x192xf32>,
    } else {
    }
    %c0 = arith.constant 0 : index
    %c0_1 = arith.constant 0 : index
    %3 = vector.load %arg7[%c0, %c0_1] : memref<16x192xf32, #tpu.memory_space<vmem>>, vector<16x192xf32>
    %c0_2 = arith.constant 0 : index
    %c0_3 = arith.constant 0 : index
    %4 = vector.load %arg3[%c0_2, %c0_3] : memref<16x32xbf16, #tpu.memory_space<vmem>>, vector<16x32xbf16>
    %c0_4 = arith.constant 0 : index
    %c0_5 = arith.constant 0 : index
    %5 = vector.load %arg4[%c0_4, %c0_5] : memref<32x192xbf16, #tpu.memory_space<vmem>>, vector<32x192xbf16>
    %cst = arith.constant dense<0.000000e+00> : vector<16x192xf32>
    %6 = tpu.matmul %4, %5, %cst {dimension_numbers = #tpu.dot_dimension_numbers<[1], [0], [0], [1], [0, 0, 1, 1], [], []>} : vector<16x32xbf16>, vector<32x192xbf16>, vector<16x192xf32> -> vector<16x192xf32>
    %7 = arith.addf %3, %6 : vector<16x192xf32>
    %c0_6 = arith.constant 0 : index
    %c0_7 = arith.constant 0 : index
    %8 = vector.load %arg7[%c0_6, %c0_7] : memref<16x192xf32, #tpu.memory_space<vmem>>, vector<16x192xf32>
    tpu.vector_store %arg7[%c0_6, %c0_7], %7 {strides = array<i32>} : memref<16x192xf32, #tpu.memory_space<vmem>>, vector<16x192xf32>,
    %c0_i32_8 = arith.constant 0 : i32
    %9 = arith.cmpi eq, %arg2, %c0_i32_8 : i32
    %10 = arith.extui %9 : i1 to i32
    %c0_i32_9 = arith.constant 0 : i32
    %11 = arith.cmpi ne, %10, %c0_i32_9 : i32
    scf.if %11 {
      %c0_10 = arith.constant 0 : index
      %c0_11 = arith.constant 0 : index
      %12 = vector.load %arg7[%c0_10, %c0_11] : memref<16x192xf32, #tpu.memory_space<vmem>>, vector<16x192xf32>
      %c0_12 = arith.constant 0 : index
      %c0_13 = arith.constant 0 : index
      %13 = vector.load %arg5[%c0_12, %c0_13] : memref<1x192xf32, #tpu.memory_space<vmem>>, vector<1x192xf32>
      %14 = vector.broadcast %13 : vector<1x192xf32> to vector<16x192xf32>
      %15 = arith.addf %12, %14 : vector<16x192xf32>
      %16 = arith.truncf %15 : vector<16x192xf32> to vector<16x192xbf16>
      %c0_14 = arith.constant 0 : index
      %c0_15 = arith.constant 0 : index
      %17 = vector.load %arg6[%c0_14, %c0_15] : memref<16x192xbf16, #tpu.memory_space<vmem>>, vector<16x192xbf16>
      tpu.vector_store %arg6[%c0_14, %c0_15], %16 {strides = array<i32>} : memref<16x192xbf16, #tpu.memory_space<vmem>>, vector<16x192xbf16>,
    } else {
    }
    return
  }
  func.func @transform_0(%arg0: i32, %arg1: i32, %arg2: i32) -> (i32, i32) {
    %c0_i32 = arith.constant 0 : i32
    %0 = arith.addi %arg2, %c0_i32 : i32
    %c0_i32_0 = arith.constant 0 : i32
    return %arg0, %0 : i32, i32
  }
  func.func @transform_1(%arg0: i32, %arg1: i32, %arg2: i32) -> (i32, i32) {
    %c0_i32 = arith.constant 0 : i32
    return %arg2, %arg1 : i32, i32
  }
  func.func @transform_2(%arg0: i32, %arg1: i32, %arg2: i32) -> (i32, i32) {
    %c0_i32 = arith.constant 0 : i32
    %c0_i32_0 = arith.constant 0 : i32
    return %c0_i32, %arg1 : i32, i32
  }
  func.func @transform_3(%arg0: i32, %arg1: i32, %arg2: i32) -> (i32, i32) {
    %c0_i32 = arith.constant 0 : i32
    return %arg0, %arg1 : i32, i32
  }
}

module attributes {stable_mosaic.version = 11 : i64} {
  func.func @_mm_kernel(%arg0: i32, %arg1: i32, %arg2: i32, %arg3: memref<16x32xbf16, #tpu.memory_space<vmem>>, %arg4: memref<32x128xbf16, #tpu.memory_space<vmem>>, %arg5: memref<1x128xf32, #tpu.memory_space<vmem>>, %arg6: memref<16x128xbf16, #tpu.memory_space<vmem>>, %arg7: memref<16x128xf32, #tpu.memory_space<vmem>>) attributes {dimension_semantics = [#tpu.dimension_semantics<parallel>, #tpu.dimension_semantics<parallel>, #tpu.dimension_semantics<arbitrary>], iteration_bounds = array<i64: 1, 1, 1>, scalar_prefetch = 0 : i64, scratch_operands = 1 : i64, tpu.core_type = #tpu.core_type<tc>, window_params = [{transform_indices = @transform_0, window_bounds = array<i64: 16, 32>}, {transform_indices = @transform_1, window_bounds = array<i64: 32, 128>}, {transform_indices = @transform_2, window_bounds = array<i64: 1, 128>}, {transform_indices = @transform_3, window_bounds = array<i64: 16, 128>}]} {
    %c0_i32 = arith.constant 0 : i32
    %0 = arith.cmpi eq, %arg2, %c0_i32 : i32
    %1 = arith.extui %0 : i1 to i32
    %c0_i32_0 = arith.constant 0 : i32
    %2 = arith.cmpi ne, %1, %c0_i32_0 : i32
    scf.if %2 {
      %cst_10 = arith.constant 0.000000e+00 : f32
      %12 = vector.broadcast %cst_10 : f32 to vector<16x128xf32>
      %c0_11 = arith.constant 0 : index
      %c0_12 = arith.constant 0 : index
      %13 = vector.load %arg7[%c0_11, %c0_12] : memref<16x128xf32, #tpu.memory_space<vmem>>, vector<16x128xf32>
      tpu.vector_store %arg7[%c0_11, %c0_12], %12 {strides = array<i32>} : memref<16x128xf32, #tpu.memory_space<vmem>>, vector<16x128xf32>,
    } else {
    }
    %c0 = arith.constant 0 : index
    %c0_1 = arith.constant 0 : index
    %3 = vector.load %arg7[%c0, %c0_1] : memref<16x128xf32, #tpu.memory_space<vmem>>, vector<16x128xf32>
    %c0_2 = arith.constant 0 : index
    %c0_3 = arith.constant 0 : index
    %4 = vector.load %arg3[%c0_2, %c0_3] : memref<16x32xbf16, #tpu.memory_space<vmem>>, vector<16x32xbf16>
    %c0_4 = arith.constant 0 : index
    %c0_5 = arith.constant 0 : index
    %5 = vector.load %arg4[%c0_4, %c0_5] : memref<32x128xbf16, #tpu.memory_space<vmem>>, vector<32x128xbf16>
    %cst = arith.constant dense<0.000000e+00> : vector<16x128xf32>
    %6 = tpu.matmul %4, %5, %cst {dimension_numbers = #tpu.dot_dimension_numbers<[1], [0], [0], [1], [0, 0, 1, 1], [], []>} : vector<16x32xbf16>, vector<32x128xbf16>, vector<16x128xf32> -> vector<16x128xf32>
    %7 = arith.addf %3, %6 : vector<16x128xf32>
    %c0_6 = arith.constant 0 : index
    %c0_7 = arith.constant 0 : index
    %8 = vector.load %arg7[%c0_6, %c0_7] : memref<16x128xf32, #tpu.memory_space<vmem>>, vector<16x128xf32>
    tpu.vector_store %arg7[%c0_6, %c0_7], %7 {strides = array<i32>} : memref<16x128xf32, #tpu.memory_space<vmem>>, vector<16x128xf32>,
    %c0_i32_8 = arith.constant 0 : i32
    %9 = arith.cmpi eq, %arg2, %c0_i32_8 : i32
    %10 = arith.extui %9 : i1 to i32
    %c0_i32_9 = arith.constant 0 : i32
    %11 = arith.cmpi ne, %10, %c0_i32_9 : i32
    scf.if %11 {
      %c0_10 = arith.constant 0 : index
      %c0_11 = arith.constant 0 : index
      %12 = vector.load %arg7[%c0_10, %c0_11] : memref<16x128xf32, #tpu.memory_space<vmem>>, vector<16x128xf32>
      %c0_12 = arith.constant 0 : index
      %c0_13 = arith.constant 0 : index
      %13 = vector.load %arg5[%c0_12, %c0_13] : memref<1x128xf32, #tpu.memory_space<vmem>>, vector<1x128xf32>
      %14 = vector.broadcast %13 : vector<1x128xf32> to vector<16x128xf32>
      %15 = arith.addf %12, %14 : vector<16x128xf32>
      %16 = arith.truncf %15 : vector<16x128xf32> to vector<16x128xbf16>
      %c0_14 = arith.constant 0 : index
      %c0_15 = arith.constant 0 : index
      %17 = vector.load %arg6[%c0_14, %c0_15] : memref<16x128xbf16, #tpu.memory_space<vmem>>, vector<16x128xbf16>
      tpu.vector_store %arg6[%c0_14, %c0_15], %16 {strides = array<i32>} : memref<16x128xbf16, #tpu.memory_space<vmem>>, vector<16x128xbf16>,
    } else {
    }
    return
  }
  func.func @transform_0(%arg0: i32, %arg1: i32, %arg2: i32) -> (i32, i32) {
    %c0_i32 = arith.constant 0 : i32
    %0 = arith.addi %arg2, %c0_i32 : i32
    %c0_i32_0 = arith.constant 0 : i32
    return %arg0, %0 : i32, i32
  }
  func.func @transform_1(%arg0: i32, %arg1: i32, %arg2: i32) -> (i32, i32) {
    %c0_i32 = arith.constant 0 : i32
    return %arg2, %arg1 : i32, i32
  }
  func.func @transform_2(%arg0: i32, %arg1: i32, %arg2: i32) -> (i32, i32) {
    %c0_i32 = arith.constant 0 : i32
    %c0_i32_0 = arith.constant 0 : i32
    return %c0_i32, %arg1 : i32, i32
  }
  func.func @transform_3(%arg0: i32, %arg1: i32, %arg2: i32) -> (i32, i32) {
    %c0_i32 = arith.constant 0 : i32
    return %arg0, %arg1 : i32, i32
  }
}

module attributes {stable_mosaic.version = 11 : i64} {
  func.func @_mm_kernel(%arg0: i32, %arg1: i32, %arg2: i32, %arg3: memref<16x64xbf16, #tpu.memory_space<vmem>>, %arg4: memref<64x64xbf16, #tpu.memory_space<vmem>>, %arg5: memref<1x64xf32, #tpu.memory_space<vmem>>, %arg6: memref<16x64xf32, #tpu.memory_space<vmem>>, %arg7: memref<16x64xf32, #tpu.memory_space<vmem>>, %arg8: memref<16x64xf32, #tpu.memory_space<vmem>>) attributes {dimension_semantics = [#tpu.dimension_semantics<parallel>, #tpu.dimension_semantics<parallel>, #tpu.dimension_semantics<arbitrary>], iteration_bounds = array<i64: 1, 1, 1>, scalar_prefetch = 0 : i64, scratch_operands = 1 : i64, tpu.core_type = #tpu.core_type<tc>, window_params = [{transform_indices = @transform_0, window_bounds = array<i64: 16, 64>}, {transform_indices = @transform_1, window_bounds = array<i64: 64, 64>}, {transform_indices = @transform_2, window_bounds = array<i64: 1, 64>}, {transform_indices = @transform_3, window_bounds = array<i64: 16, 64>}, {transform_indices = @transform_4, window_bounds = array<i64: 16, 64>}]} {
    %c0_i32 = arith.constant 0 : i32
    %0 = arith.cmpi eq, %arg2, %c0_i32 : i32
    %1 = arith.extui %0 : i1 to i32
    %c0_i32_0 = arith.constant 0 : i32
    %2 = arith.cmpi ne, %1, %c0_i32_0 : i32
    scf.if %2 {
      %cst_10 = arith.constant 0.000000e+00 : f32
      %12 = vector.broadcast %cst_10 : f32 to vector<16x64xf32>
      %c0_11 = arith.constant 0 : index
      %c0_12 = arith.constant 0 : index
      %13 = vector.load %arg8[%c0_11, %c0_12] : memref<16x64xf32, #tpu.memory_space<vmem>>, vector<16x64xf32>
      tpu.vector_store %arg8[%c0_11, %c0_12], %12 {strides = array<i32>} : memref<16x64xf32, #tpu.memory_space<vmem>>, vector<16x64xf32>,
    } else {
    }
    %c0 = arith.constant 0 : index
    %c0_1 = arith.constant 0 : index
    %3 = vector.load %arg8[%c0, %c0_1] : memref<16x64xf32, #tpu.memory_space<vmem>>, vector<16x64xf32>
    %c0_2 = arith.constant 0 : index
    %c0_3 = arith.constant 0 : index
    %4 = vector.load %arg3[%c0_2, %c0_3] : memref<16x64xbf16, #tpu.memory_space<vmem>>, vector<16x64xbf16>
    %c0_4 = arith.constant 0 : index
    %c0_5 = arith.constant 0 : index
    %5 = vector.load %arg4[%c0_4, %c0_5] : memref<64x64xbf16, #tpu.memory_space<vmem>>, vector<64x64xbf16>
    %cst = arith.constant dense<0.000000e+00> : vector<16x64xf32>
    %6 = tpu.matmul %4, %5, %cst {dimension_numbers = #tpu.dot_dimension_numbers<[1], [0], [0], [1], [0, 0, 1, 1], [], []>} : vector<16x64xbf16>, vector<64x64xbf16>, vector<16x64xf32> -> vector<16x64xf32>
    %7 = arith.addf %3, %6 : vector<16x64xf32>
    %c0_6 = arith.constant 0 : index
    %c0_7 = arith.constant 0 : index
    %8 = vector.load %arg8[%c0_6, %c0_7] : memref<16x64xf32, #tpu.memory_space<vmem>>, vector<16x64xf32>
    tpu.vector_store %arg8[%c0_6, %c0_7], %7 {strides = array<i32>} : memref<16x64xf32, #tpu.memory_space<vmem>>, vector<16x64xf32>,
    %c0_i32_8 = arith.constant 0 : i32
    %9 = arith.cmpi eq, %arg2, %c0_i32_8 : i32
    %10 = arith.extui %9 : i1 to i32
    %c0_i32_9 = arith.constant 0 : i32
    %11 = arith.cmpi ne, %10, %c0_i32_9 : i32
    scf.if %11 {
      %c0_10 = arith.constant 0 : index
      %c0_11 = arith.constant 0 : index
      %12 = vector.load %arg8[%c0_10, %c0_11] : memref<16x64xf32, #tpu.memory_space<vmem>>, vector<16x64xf32>
      %c0_12 = arith.constant 0 : index
      %c0_13 = arith.constant 0 : index
      %13 = vector.load %arg5[%c0_12, %c0_13] : memref<1x64xf32, #tpu.memory_space<vmem>>, vector<1x64xf32>
      %14 = vector.broadcast %13 : vector<1x64xf32> to vector<16x64xf32>
      %15 = arith.addf %12, %14 : vector<16x64xf32>
      %c0_14 = arith.constant 0 : index
      %c0_15 = arith.constant 0 : index
      %16 = vector.load %arg6[%c0_14, %c0_15] : memref<16x64xf32, #tpu.memory_space<vmem>>, vector<16x64xf32>
      %17 = arith.addf %15, %16 : vector<16x64xf32>
      %c0_16 = arith.constant 0 : index
      %c0_17 = arith.constant 0 : index
      %18 = vector.load %arg7[%c0_16, %c0_17] : memref<16x64xf32, #tpu.memory_space<vmem>>, vector<16x64xf32>
      tpu.vector_store %arg7[%c0_16, %c0_17], %17 {strides = array<i32>} : memref<16x64xf32, #tpu.memory_space<vmem>>, vector<16x64xf32>,
    } else {
    }
    return
  }
  func.func @transform_0(%arg0: i32, %arg1: i32, %arg2: i32) -> (i32, i32) {
    %c0_i32 = arith.constant 0 : i32
    %0 = arith.addi %arg2, %c0_i32 : i32
    %c0_i32_0 = arith.constant 0 : i32
    return %arg0, %0 : i32, i32
  }
  func.func @transform_1(%arg0: i32, %arg1: i32, %arg2: i32) -> (i32, i32) {
    %c0_i32 = arith.constant 0 : i32
    return %arg2, %arg1 : i32, i32
  }
  func.func @transform_2(%arg0: i32, %arg1: i32, %arg2: i32) -> (i32, i32) {
    %c0_i32 = arith.constant 0 : i32
    %c0_i32_0 = arith.constant 0 : i32
    return %c0_i32, %arg1 : i32, i32
  }
  func.func @transform_3(%arg0: i32, %arg1: i32, %arg2: i32) -> (i32, i32) {
    %c0_i32 = arith.constant 0 : i32
    return %arg0, %arg1 : i32, i32
  }
  func.func @transform_4(%arg0: i32, %arg1: i32, %arg2: i32) -> (i32, i32) {
    %c0_i32 = arith.constant 0 : i32
    return %arg0, %arg1 : i32, i32
  }
}

module attributes {stable_mosaic.version = 11 : i64} {
  func.func @_ln_kernel(%arg0: i32, %arg1: memref<16x64xf32, #tpu.memory_space<vmem>>, %arg2: memref<1x64xf32, #tpu.memory_space<vmem>>, %arg3: memref<1x64xf32, #tpu.memory_space<vmem>>, %arg4: memref<16x64xbf16, #tpu.memory_space<vmem>>) attributes {dimension_semantics = [#tpu.dimension_semantics<parallel>], iteration_bounds = array<i64: 1>, scalar_prefetch = 0 : i64, scratch_operands = 0 : i64, tpu.core_type = #tpu.core_type<tc>, window_params = [{transform_indices = @transform_0, window_bounds = array<i64: 16, 64>}, {pipeline_mode = #tpu.pipeline_mode<synchronous>, transform_indices = @transform_1, window_bounds = array<i64: 1, 64>}, {pipeline_mode = #tpu.pipeline_mode<synchronous>, transform_indices = @transform_2, window_bounds = array<i64: 1, 64>}, {transform_indices = @transform_3, window_bounds = array<i64: 16, 64>}]} {
    %c0 = arith.constant 0 : index
    %c0_0 = arith.constant 0 : index
    %0 = vector.load %arg1[%c0, %c0_0] : memref<16x64xf32, #tpu.memory_space<vmem>>, vector<16x64xf32>
    %cst = arith.constant dense<0.000000e+00> : vector<16xf32>
    %1 = vector.multi_reduction <add>, %0, %cst [1] : vector<16x64xf32> to vector<16xf32>
    %2 = vector.shape_cast %1 : vector<16xf32> to vector<16x1xf32>
    %cst_1 = arith.constant 6.400000e+01 : f32
    %3 = vector.broadcast %cst_1 : f32 to vector<16x1xf32>
    %4 = arith.divf %2, %3 : vector<16x1xf32>
    %5 = vector.broadcast %4 : vector<16x1xf32> to vector<16x64xf32>
    %6 = arith.subf %0, %5 : vector<16x64xf32>
    %7 = arith.mulf %6, %6 : vector<16x64xf32>
    %cst_2 = arith.constant dense<0.000000e+00> : vector<16xf32>
    %8 = vector.multi_reduction <add>, %7, %cst_2 [1] : vector<16x64xf32> to vector<16xf32>
    %9 = vector.shape_cast %8 : vector<16xf32> to vector<16x1xf32>
    %cst_3 = arith.constant 6.400000e+01 : f32
    %10 = vector.broadcast %cst_3 : f32 to vector<16x1xf32>
    %11 = arith.divf %9, %10 : vector<16x1xf32>
    %cst_4 = arith.constant 9.99999974E-6 : f32
    %12 = vector.broadcast %cst_4 : f32 to vector<16x1xf32>
    %13 = arith.addf %11, %12 : vector<16x1xf32>
    %14 = math.rsqrt %13 : vector<16x1xf32>
    %15 = vector.broadcast %14 : vector<16x1xf32> to vector<16x64xf32>
    %16 = arith.mulf %6, %15 : vector<16x64xf32>
    %c0_5 = arith.constant 0 : index
    %c0_6 = arith.constant 0 : index
    %17 = vector.load %arg2[%c0_5, %c0_6] : memref<1x64xf32, #tpu.memory_space<vmem>>, vector<1x64xf32>
    %18 = vector.broadcast %17 : vector<1x64xf32> to vector<16x64xf32>
    %19 = arith.mulf %16, %18 : vector<16x64xf32>
    %c0_7 = arith.constant 0 : index
    %c0_8 = arith.constant 0 : index
    %20 = vector.load %arg3[%c0_7, %c0_8] : memref<1x64xf32, #tpu.memory_space<vmem>>, vector<1x64xf32>
    %21 = vector.broadcast %20 : vector<1x64xf32> to vector<16x64xf32>
    %22 = arith.addf %19, %21 : vector<16x64xf32>
    %23 = arith.truncf %22 : vector<16x64xf32> to vector<16x64xbf16>
    %c0_9 = arith.constant 0 : index
    %c0_10 = arith.constant 0 : index
    %24 = vector.load %arg4[%c0_9, %c0_10] : memref<16x64xbf16, #tpu.memory_space<vmem>>, vector<16x64xbf16>
    tpu.vector_store %arg4[%c0_9, %c0_10], %23 {strides = array<i32>} : memref<16x64xbf16, #tpu.memory_space<vmem>>, vector<16x64xbf16>,
    return
  }
  func.func @transform_0(%arg0: i32) -> (i32, i32) {
    %c0_i32 = arith.constant 0 : i32
    %c0_i32_0 = arith.constant 0 : i32
    return %arg0, %c0_i32 : i32, i32
  }
  func.func @transform_1(%arg0: i32) -> (i32, i32) {
    %c0_i32 = arith.constant 0 : i32
    %c0_i32_0 = arith.constant 0 : i32
    %c0_i32_1 = arith.constant 0 : i32
    return %c0_i32, %c0_i32_0 : i32, i32
  }
  func.func @transform_2(%arg0: i32) -> (i32, i32) {
    %c0_i32 = arith.constant 0 : i32
    %c0_i32_0 = arith.constant 0 : i32
    %c0_i32_1 = arith.constant 0 : i32
    return %c0_i32, %c0_i32_0 : i32, i32
  }
  func.func @transform_3(%arg0: i32) -> (i32, i32) {
    %c0_i32 = arith.constant 0 : i32
    %c0_i32_0 = arith.constant 0 : i32
    return %arg0, %c0_i32 : i32, i32
  }
}

module attributes {stable_mosaic.version = 11 : i64} {
  func.func @_attn_kernel(%arg0: i32, %arg1: i32, %arg2: i32, %arg3: memref<1x8x128xbf16, #tpu.memory_space<vmem>>, %arg4: memref<1x8x192xbf16, #tpu.memory_space<vmem>>, %arg5: memref<1x8x64xbf16, #tpu.memory_space<vmem>>, %arg6: memref<4x8x1xf32, #tpu.memory_space<vmem>>, %arg7: memref<4x8x1xf32, #tpu.memory_space<vmem>>, %arg8: memref<4x8x16xf32, #tpu.memory_space<vmem>>) attributes {dimension_semantics = [#tpu.dimension_semantics<parallel>, #tpu.dimension_semantics<parallel>, #tpu.dimension_semantics<arbitrary>], iteration_bounds = array<i64: 2, 1, 1>, scalar_prefetch = 0 : i64, scratch_operands = 3 : i64, tpu.core_type = #tpu.core_type<tc>, window_params = [{transform_indices = @transform_0, window_bounds = array<i64: 1, 8, 128>}, {transform_indices = @transform_1, window_bounds = array<i64: 1, 8, 192>}, {transform_indices = @transform_2, window_bounds = array<i64: 1, 8, 64>}]} {
    %c0_i32 = arith.constant 0 : i32
    %0 = arith.cmpi eq, %arg2, %c0_i32 : i32
    %1 = arith.extui %0 : i1 to i32
    %c0_i32_0 = arith.constant 0 : i32
    %2 = arith.cmpi ne, %1, %c0_i32_0 : i32
    scf.if %2 {
      %cst_96 = arith.constant 0xFF800000 : f32
      %166 = vector.broadcast %cst_96 : f32 to vector<4x8x1xf32>
      %c0_97 = arith.constant 0 : index
      %c0_98 = arith.constant 0 : index
      %c0_99 = arith.constant 0 : index
      %167 = vector.load %arg6[%c0_97, %c0_98, %c0_99] : memref<4x8x1xf32, #tpu.memory_space<vmem>>, vector<4x8x1xf32>
      tpu.vector_store %arg6[%c0_97, %c0_98, %c0_99], %166 {strides = array<i32>} : memref<4x8x1xf32, #tpu.memory_space<vmem>>, vector<4x8x1xf32>,
      %cst_100 = arith.constant 0.000000e+00 : f32
      %168 = vector.broadcast %cst_100 : f32 to vector<4x8x1xf32>
      %c0_101 = arith.constant 0 : index
      %c0_102 = arith.constant 0 : index
      %c0_103 = arith.constant 0 : index
      %169 = vector.load %arg7[%c0_101, %c0_102, %c0_103] : memref<4x8x1xf32, #tpu.memory_space<vmem>>, vector<4x8x1xf32>
      tpu.vector_store %arg7[%c0_101, %c0_102, %c0_103], %168 {strides = array<i32>} : memref<4x8x1xf32, #tpu.memory_space<vmem>>, vector<4x8x1xf32>,
      %cst_104 = arith.constant 0.000000e+00 : f32
      %170 = vector.broadcast %cst_104 : f32 to vector<4x8x16xf32>
      %c0_105 = arith.constant 0 : index
      %c0_106 = arith.constant 0 : index
      %c0_107 = arith.constant 0 : index
      %171 = vector.load %arg8[%c0_105, %c0_106, %c0_107] : memref<4x8x16xf32, #tpu.memory_space<vmem>>, vector<4x8x16xf32>
      tpu.vector_store %arg8[%c0_105, %c0_106, %c0_107], %170 {strides = array<i32>} : memref<4x8x16xf32, #tpu.memory_space<vmem>>, vector<4x8x16xf32>,
    } else {
    }
    %c0 = arith.constant 0 : index
    %c0_1 = arith.constant 0 : index
    %c0_2 = arith.constant 0 : index
    %3 = vector.load %arg3[%c0, %c0_1, %c0_2] : memref<1x8x128xbf16, #tpu.memory_space<vmem>>, vector<1x8x128xbf16>
    %4 = vector.shape_cast %3 : vector<1x8x128xbf16> to vector<8x128xbf16>
    %c0_3 = arith.constant 0 : index
    %c0_4 = arith.constant 0 : index
    %c0_5 = arith.constant 0 : index
    %5 = vector.load %arg4[%c0_3, %c0_4, %c0_5] : memref<1x8x192xbf16, #tpu.memory_space<vmem>>, vector<1x8x192xbf16>
    %6 = vector.shape_cast %5 : vector<1x8x192xbf16> to vector<8x192xbf16>
    %7 = vector.extract_strided_slice %4 {offsets = [0, 0], sizes = [8, 32], strides = [1, 1]} : vector<8x128xbf16> to vector<8x32xbf16>
    %8 = vector.extract_strided_slice %6 {offsets = [0, 0], sizes = [8, 32], strides = [1, 1]} : vector<8x192xbf16> to vector<8x32xbf16>
    %9 = vector.extract_strided_slice %6 {offsets = [0, 128], sizes = [8, 16], strides = [1, 1]} : vector<8x192xbf16> to vector<8x16xbf16>
    %10 = tpu.transpose %8, [1, 0] : vector<8x32xbf16> -> vector<32x8xbf16>
    %cst = arith.constant dense<0.000000e+00> : vector<8x8xf32>
    %11 = tpu.matmul %7, %10, %cst {dimension_numbers = #tpu.dot_dimension_numbers<[1], [0], [0], [1], [0, 0, 1, 1], [], []>} : vector<8x32xbf16>, vector<32x8xbf16>, vector<8x8xf32> -> vector<8x8xf32>
    %cst_6 = arith.constant 0.176776692 : f32
    %12 = vector.broadcast %cst_6 : f32 to vector<8x8xf32>
    %13 = arith.mulf %11, %12 : vector<8x8xf32>
    %c0_7 = arith.constant 0 : index
    %c0_8 = arith.constant 0 : index
    %c0_9 = arith.constant 0 : index
    %14 = vector.load %arg6[%c0_7, %c0_8, %c0_9] : memref<4x8x1xf32, #tpu.memory_space<vmem>>, vector<1x8x1xf32>
    %15 = vector.shape_cast %14 : vector<1x8x1xf32> to vector<8x1xf32>
    %cst_10 = arith.constant dense<0xFF800000> : vector<8xf32>
    %16 = vector.multi_reduction <maximumf>, %13, %cst_10 [1] : vector<8x8xf32> to vector<8xf32>
    %17 = vector.shape_cast %16 : vector<8xf32> to vector<8x1xf32>
    %18 = arith.maximumf %15, %17 : vector<8x1xf32>
    %19 = arith.subf %15, %18 : vector<8x1xf32>
    %20 = math.exp %19 : vector<8x1xf32>
    %21 = vector.broadcast %18 : vector<8x1xf32> to vector<8x8xf32>
    %22 = arith.subf %13, %21 : vector<8x8xf32>
    %23 = math.exp %22 : vector<8x8xf32>
    %c0_11 = arith.constant 0 : index
    %c0_12 = arith.constant 0 : index
    %c0_13 = arith.constant 0 : index
    %24 = vector.load %arg7[%c0_11, %c0_12, %c0_13] : memref<4x8x1xf32, #tpu.memory_space<vmem>>, vector<1x8x1xf32>
    %25 = vector.shape_cast %24 : vector<1x8x1xf32> to vector<8x1xf32>
    %26 = arith.mulf %20, %25 : vector<8x1xf32>
    %cst_14 = arith.constant dense<0.000000e+00> : vector<8xf32>
    %27 = vector.multi_reduction <add>, %23, %cst_14 [1] : vector<8x8xf32> to vector<8xf32>
    %28 = vector.shape_cast %27 : vector<8xf32> to vector<8x1xf32>
    %29 = arith.addf %26, %28 : vector<8x1xf32>
    %c0_15 = arith.constant 0 : index
    %c0_16 = arith.constant 0 : index
    %c0_17 = arith.constant 0 : index
    %30 = vector.load %arg7[%c0_15, %c0_16, %c0_17] : memref<4x8x1xf32, #tpu.memory_space<vmem>>, vector<1x8x1xf32>
    %31 = vector.shape_cast %30 : vector<1x8x1xf32> to vector<8x1xf32>
    %32 = vector.shape_cast %29 : vector<8x1xf32> to vector<1x8x1xf32>
    tpu.vector_store %arg7[%c0_15, %c0_16, %c0_17], %32 {strides = array<i32>} : memref<4x8x1xf32, #tpu.memory_space<vmem>>, vector<1x8x1xf32>,
    %c0_18 = arith.constant 0 : index
    %c0_19 = arith.constant 0 : index
    %c0_20 = arith.constant 0 : index
    %33 = vector.load %arg8[%c0_18, %c0_19, %c0_20] : memref<4x8x16xf32, #tpu.memory_space<vmem>>, vector<1x8x16xf32>
    %34 = vector.shape_cast %33 : vector<1x8x16xf32> to vector<8x16xf32>
    %35 = vector.broadcast %20 : vector<8x1xf32> to vector<8x16xf32>
    %36 = arith.mulf %35, %34 : vector<8x16xf32>
    %37 = arith.truncf %23 : vector<8x8xf32> to vector<8x8xbf16>
    %cst_21 = arith.constant dense<0.000000e+00> : vector<8x16xf32>
    %38 = tpu.matmul %37, %9, %cst_21 {dimension_numbers = #tpu.dot_dimension_numbers<[1], [0], [0], [1], [0, 0, 1, 1], [], []>} : vector<8x8xbf16>, vector<8x16xbf16>, vector<8x16xf32> -> vector<8x16xf32>
    %39 = arith.addf %36, %38 : vector<8x16xf32>
    %c0_22 = arith.constant 0 : index
    %c0_23 = arith.constant 0 : index
    %c0_24 = arith.constant 0 : index
    %40 = vector.load %arg8[%c0_22, %c0_23, %c0_24] : memref<4x8x16xf32, #tpu.memory_space<vmem>>, vector<1x8x16xf32>
    %41 = vector.shape_cast %40 : vector<1x8x16xf32> to vector<8x16xf32>
    %42 = vector.shape_cast %39 : vector<8x16xf32> to vector<1x8x16xf32>
    tpu.vector_store %arg8[%c0_22, %c0_23, %c0_24], %42 {strides = array<i32>} : memref<4x8x16xf32, #tpu.memory_space<vmem>>, vector<1x8x16xf32>,
    %c0_25 = arith.constant 0 : index
    %c0_26 = arith.constant 0 : index
    %c0_27 = arith.constant 0 : index
    %43 = vector.load %arg6[%c0_25, %c0_26, %c0_27] : memref<4x8x1xf32, #tpu.memory_space<vmem>>, vector<1x8x1xf32>
    %44 = vector.shape_cast %43 : vector<1x8x1xf32> to vector<8x1xf32>
    %45 = vector.shape_cast %18 : vector<8x1xf32> to vector<1x8x1xf32>
    tpu.vector_store %arg6[%c0_25, %c0_26, %c0_27], %45 {strides = array<i32>} : memref<4x8x1xf32, #tpu.memory_space<vmem>>, vector<1x8x1xf32>,
    %46 = vector.extract_strided_slice %4 {offsets = [0, 32], sizes = [8, 32], strides = [1, 1]} : vector<8x128xbf16> to vector<8x32xbf16>
    %47 = vector.extract_strided_slice %6 {offsets = [0, 32], sizes = [8, 32], strides = [1, 1]} : vector<8x192xbf16> to vector<8x32xbf16>
    %48 = vector.extract_strided_slice %6 {offsets = [0, 144], sizes = [8, 16], strides = [1, 1]} : vector<8x192xbf16> to vector<8x16xbf16>
    %49 = tpu.transpose %47, [1, 0] : vector<8x32xbf16> -> vector<32x8xbf16>
    %cst_28 = arith.constant dense<0.000000e+00> : vector<8x8xf32>
    %50 = tpu.matmul %46, %49, %cst_28 {dimension_numbers = #tpu.dot_dimension_numbers<[1], [0], [0], [1], [0, 0, 1, 1], [], []>} : vector<8x32xbf16>, vector<32x8xbf16>, vector<8x8xf32> -> vector<8x8xf32>
    %cst_29 = arith.constant 0.176776692 : f32
    %51 = vector.broadcast %cst_29 : f32 to vector<8x8xf32>
    %52 = arith.mulf %50, %51 : vector<8x8xf32>
    %c1 = arith.constant 1 : index
    %c0_30 = arith.constant 0 : index
    %c0_31 = arith.constant 0 : index
    %53 = vector.load %arg6[%c1, %c0_30, %c0_31] : memref<4x8x1xf32, #tpu.memory_space<vmem>>, vector<1x8x1xf32>
    %54 = vector.shape_cast %53 : vector<1x8x1xf32> to vector<8x1xf32>
    %cst_32 = arith.constant dense<0xFF800000> : vector<8xf32>
    %55 = vector.multi_reduction <maximumf>, %52, %cst_32 [1] : vector<8x8xf32> to vector<8xf32>
    %56 = vector.shape_cast %55 : vector<8xf32> to vector<8x1xf32>
    %57 = arith.maximumf %54, %56 : vector<8x1xf32>
    %58 = arith.subf %54, %57 : vector<8x1xf32>
    %59 = math.exp %58 : vector<8x1xf32>
    %60 = vector.broadcast %57 : vector<8x1xf32> to vector<8x8xf32>
    %61 = arith.subf %52, %60 : vector<8x8xf32>
    %62 = math.exp %61 : vector<8x8xf32>
    %c1_33 = arith.constant 1 : index
    %c0_34 = arith.constant 0 : index
    %c0_35 = arith.constant 0 : index
    %63 = vector.load %arg7[%c1_33, %c0_34, %c0_35] : memref<4x8x1xf32, #tpu.memory_space<vmem>>, vector<1x8x1xf32>
    %64 = vector.shape_cast %63 : vector<1x8x1xf32> to vector<8x1xf32>
    %65 = arith.mulf %59, %64 : vector<8x1xf32>
    %cst_36 = arith.constant dense<0.000000e+00> : vector<8xf32>
    %66 = vector.multi_reduction <add>, %62, %cst_36 [1] : vector<8x8xf32> to vector<8xf32>
    %67 = vector.shape_cast %66 : vector<8xf32> to vector<8x1xf32>
    %68 = arith.addf %65, %67 : vector<8x1xf32>
    %c1_37 = arith.constant 1 : index
    %c0_38 = arith.constant 0 : index
    %c0_39 = arith.constant 0 : index
    %69 = vector.load %arg7[%c1_37, %c0_38, %c0_39] : memref<4x8x1xf32, #tpu.memory_space<vmem>>, vector<1x8x1xf32>
    %70 = vector.shape_cast %69 : vector<1x8x1xf32> to vector<8x1xf32>
    %71 = vector.shape_cast %68 : vector<8x1xf32> to vector<1x8x1xf32>
    tpu.vector_store %arg7[%c1_37, %c0_38, %c0_39], %71 {strides = array<i32>} : memref<4x8x1xf32, #tpu.memory_space<vmem>>, vector<1x8x1xf32>,
    %c1_40 = arith.constant 1 : index
    %c0_41 = arith.constant 0 : index
    %c0_42 = arith.constant 0 : index
    %72 = vector.load %arg8[%c1_40, %c0_41, %c0_42] : memref<4x8x16xf32, #tpu.memory_space<vmem>>, vector<1x8x16xf32>
    %73 = vector.shape_cast %72 : vector<1x8x16xf32> to vector<8x16xf32>
    %74 = vector.broadcast %59 : vector<8x1xf32> to vector<8x16xf32>
    %75 = arith.mulf %74, %73 : vector<8x16xf32>
    %76 = arith.truncf %62 : vector<8x8xf32> to vector<8x8xbf16>
    %cst_43 = arith.constant dense<0.000000e+00> : vector<8x16xf32>
    %77 = tpu.matmul %76, %48, %cst_43 {dimension_numbers = #tpu.dot_dimension_numbers<[1], [0], [0], [1], [0, 0, 1, 1], [], []>} : vector<8x8xbf16>, vector<8x16xbf16>, vector<8x16xf32> -> vector<8x16xf32>
    %78 = arith.addf %75, %77 : vector<8x16xf32>
    %c1_44 = arith.constant 1 : index
    %c0_45 = arith.constant 0 : index
    %c0_46 = arith.constant 0 : index
    %79 = vector.load %arg8[%c1_44, %c0_45, %c0_46] : memref<4x8x16xf32, #tpu.memory_space<vmem>>, vector<1x8x16xf32>
    %80 = vector.shape_cast %79 : vector<1x8x16xf32> to vector<8x16xf32>
    %81 = vector.shape_cast %78 : vector<8x16xf32> to vector<1x8x16xf32>
    tpu.vector_store %arg8[%c1_44, %c0_45, %c0_46], %81 {strides = array<i32>} : memref<4x8x16xf32, #tpu.memory_space<vmem>>, vector<1x8x16xf32>,
    %c1_47 = arith.constant 1 : index
    %c0_48 = arith.constant 0 : index
    %c0_49 = arith.constant 0 : index
    %82 = vector.load %arg6[%c1_47, %c0_48, %c0_49] : memref<4x8x1xf32, #tpu.memory_space<vmem>>, vector<1x8x1xf32>
    %83 = vector.shape_cast %82 : vector<1x8x1xf32> to vector<8x1xf32>
    %84 = vector.shape_cast %57 : vector<8x1xf32> to vector<1x8x1xf32>
    tpu.vector_store %arg6[%c1_47, %c0_48, %c0_49], %84 {strides = array<i32>} : memref<4x8x1xf32, #tpu.memory_space<vmem>>, vector<1x8x1xf32>,
    %85 = vector.extract_strided_slice %4 {offsets = [0, 64], sizes = [8, 32], strides = [1, 1]} : vector<8x128xbf16> to vector<8x32xbf16>
    %86 = vector.extract_strided_slice %6 {offsets = [0, 64], sizes = [8, 32], strides = [1, 1]} : vector<8x192xbf16> to vector<8x32xbf16>
    %87 = vector.extract_strided_slice %6 {offsets = [0, 160], sizes = [8, 16], strides = [1, 1]} : vector<8x192xbf16> to vector<8x16xbf16>
    %88 = tpu.transpose %86, [1, 0] : vector<8x32xbf16> -> vector<32x8xbf16>
    %cst_50 = arith.constant dense<0.000000e+00> : vector<8x8xf32>
    %89 = tpu.matmul %85, %88, %cst_50 {dimension_numbers = #tpu.dot_dimension_numbers<[1], [0], [0], [1], [0, 0, 1, 1], [], []>} : vector<8x32xbf16>, vector<32x8xbf16>, vector<8x8xf32> -> vector<8x8xf32>
    %cst_51 = arith.constant 0.176776692 : f32
    %90 = vector.broadcast %cst_51 : f32 to vector<8x8xf32>
    %91 = arith.mulf %89, %90 : vector<8x8xf32>
    %c2 = arith.constant 2 : index
    %c0_52 = arith.constant 0 : index
    %c0_53 = arith.constant 0 : index
    %92 = vector.load %arg6[%c2, %c0_52, %c0_53] : memref<4x8x1xf32, #tpu.memory_space<vmem>>, vector<1x8x1xf32>
    %93 = vector.shape_cast %92 : vector<1x8x1xf32> to vector<8x1xf32>
    %cst_54 = arith.constant dense<0xFF800000> : vector<8xf32>
    %94 = vector.multi_reduction <maximumf>, %91, %cst_54 [1] : vector<8x8xf32> to vector<8xf32>
    %95 = vector.shape_cast %94 : vector<8xf32> to vector<8x1xf32>
    %96 = arith.maximumf %93, %95 : vector<8x1xf32>
    %97 = arith.subf %93, %96 : vector<8x1xf32>
    %98 = math.exp %97 : vector<8x1xf32>
    %99 = vector.broadcast %96 : vector<8x1xf32> to vector<8x8xf32>
    %100 = arith.subf %91, %99 : vector<8x8xf32>
    %101 = math.exp %100 : vector<8x8xf32>
    %c2_55 = arith.constant 2 : index
    %c0_56 = arith.constant 0 : index
    %c0_57 = arith.constant 0 : index
    %102 = vector.load %arg7[%c2_55, %c0_56, %c0_57] : memref<4x8x1xf32, #tpu.memory_space<vmem>>, vector<1x8x1xf32>
    %103 = vector.shape_cast %102 : vector<1x8x1xf32> to vector<8x1xf32>
    %104 = arith.mulf %98, %103 : vector<8x1xf32>
    %cst_58 = arith.constant dense<0.000000e+00> : vector<8xf32>
    %105 = vector.multi_reduction <add>, %101, %cst_58 [1] : vector<8x8xf32> to vector<8xf32>
    %106 = vector.shape_cast %105 : vector<8xf32> to vector<8x1xf32>
    %107 = arith.addf %104, %106 : vector<8x1xf32>
    %c2_59 = arith.constant 2 : index
    %c0_60 = arith.constant 0 : index
    %c0_61 = arith.constant 0 : index
    %108 = vector.load %arg7[%c2_59, %c0_60, %c0_61] : memref<4x8x1xf32, #tpu.memory_space<vmem>>, vector<1x8x1xf32>
    %109 = vector.shape_cast %108 : vector<1x8x1xf32> to vector<8x1xf32>
    %110 = vector.shape_cast %107 : vector<8x1xf32> to vector<1x8x1xf32>
    tpu.vector_store %arg7[%c2_59, %c0_60, %c0_61], %110 {strides = array<i32>} : memref<4x8x1xf32, #tpu.memory_space<vmem>>, vector<1x8x1xf32>,
    %c2_62 = arith.constant 2 : index
    %c0_63 = arith.constant 0 : index
    %c0_64 = arith.constant 0 : index
    %111 = vector.load %arg8[%c2_62, %c0_63, %c0_64] : memref<4x8x16xf32, #tpu.memory_space<vmem>>, vector<1x8x16xf32>
    %112 = vector.shape_cast %111 : vector<1x8x16xf32> to vector<8x16xf32>
    %113 = vector.broadcast %98 : vector<8x1xf32> to vector<8x16xf32>
    %114 = arith.mulf %113, %112 : vector<8x16xf32>
    %115 = arith.truncf %101 : vector<8x8xf32> to vector<8x8xbf16>
    %cst_65 = arith.constant dense<0.000000e+00> : vector<8x16xf32>
    %116 = tpu.matmul %115, %87, %cst_65 {dimension_numbers = #tpu.dot_dimension_numbers<[1], [0], [0], [1], [0, 0, 1, 1], [], []>} : vector<8x8xbf16>, vector<8x16xbf16>, vector<8x16xf32> -> vector<8x16xf32>
    %117 = arith.addf %114, %116 : vector<8x16xf32>
    %c2_66 = arith.constant 2 : index
    %c0_67 = arith.constant 0 : index
    %c0_68 = arith.constant 0 : index
    %118 = vector.load %arg8[%c2_66, %c0_67, %c0_68] : memref<4x8x16xf32, #tpu.memory_space<vmem>>, vector<1x8x16xf32>
    %119 = vector.shape_cast %118 : vector<1x8x16xf32> to vector<8x16xf32>
    %120 = vector.shape_cast %117 : vector<8x16xf32> to vector<1x8x16xf32>
    tpu.vector_store %arg8[%c2_66, %c0_67, %c0_68], %120 {strides = array<i32>} : memref<4x8x16xf32, #tpu.memory_space<vmem>>, vector<1x8x16xf32>,
    %c2_69 = arith.constant 2 : index
    %c0_70 = arith.constant 0 : index
    %c0_71 = arith.constant 0 : index
    %121 = vector.load %arg6[%c2_69, %c0_70, %c0_71] : memref<4x8x1xf32, #tpu.memory_space<vmem>>, vector<1x8x1xf32>
    %122 = vector.shape_cast %121 : vector<1x8x1xf32> to vector<8x1xf32>
    %123 = vector.shape_cast %96 : vector<8x1xf32> to vector<1x8x1xf32>
    tpu.vector_store %arg6[%c2_69, %c0_70, %c0_71], %123 {strides = array<i32>} : memref<4x8x1xf32, #tpu.memory_space<vmem>>, vector<1x8x1xf32>,
    %124 = vector.extract_strided_slice %4 {offsets = [0, 96], sizes = [8, 32], strides = [1, 1]} : vector<8x128xbf16> to vector<8x32xbf16>
    %125 = vector.extract_strided_slice %6 {offsets = [0, 96], sizes = [8, 32], strides = [1, 1]} : vector<8x192xbf16> to vector<8x32xbf16>
    %126 = vector.extract_strided_slice %6 {offsets = [0, 176], sizes = [8, 16], strides = [1, 1]} : vector<8x192xbf16> to vector<8x16xbf16>
    %127 = tpu.transpose %125, [1, 0] : vector<8x32xbf16> -> vector<32x8xbf16>
    %cst_72 = arith.constant dense<0.000000e+00> : vector<8x8xf32>
    %128 = tpu.matmul %124, %127, %cst_72 {dimension_numbers = #tpu.dot_dimension_numbers<[1], [0], [0], [1], [0, 0, 1, 1], [], []>} : vector<8x32xbf16>, vector<32x8xbf16>, vector<8x8xf32> -> vector<8x8xf32>
    %cst_73 = arith.constant 0.176776692 : f32
    %129 = vector.broadcast %cst_73 : f32 to vector<8x8xf32>
    %130 = arith.mulf %128, %129 : vector<8x8xf32>
    %c3 = arith.constant 3 : index
    %c0_74 = arith.constant 0 : index
    %c0_75 = arith.constant 0 : index
    %131 = vector.load %arg6[%c3, %c0_74, %c0_75] : memref<4x8x1xf32, #tpu.memory_space<vmem>>, vector<1x8x1xf32>
    %132 = vector.shape_cast %131 : vector<1x8x1xf32> to vector<8x1xf32>
    %cst_76 = arith.constant dense<0xFF800000> : vector<8xf32>
    %133 = vector.multi_reduction <maximumf>, %130, %cst_76 [1] : vector<8x8xf32> to vector<8xf32>
    %134 = vector.shape_cast %133 : vector<8xf32> to vector<8x1xf32>
    %135 = arith.maximumf %132, %134 : vector<8x1xf32>
    %136 = arith.subf %132, %135 : vector<8x1xf32>
    %137 = math.exp %136 : vector<8x1xf32>
    %138 = vector.broadcast %135 : vector<8x1xf32> to vector<8x8xf32>
    %139 = arith.subf %130, %138 : vector<8x8xf32>
    %140 = math.exp %139 : vector<8x8xf32>
    %c3_77 = arith.constant 3 : index
    %c0_78 = arith.constant 0 : index
    %c0_79 = arith.constant 0 : index
    %141 = vector.load %arg7[%c3_77, %c0_78, %c0_79] : memref<4x8x1xf32, #tpu.memory_space<vmem>>, vector<1x8x1xf32>
    %142 = vector.shape_cast %141 : vector<1x8x1xf32> to vector<8x1xf32>
    %143 = arith.mulf %137, %142 : vector<8x1xf32>
    %cst_80 = arith.constant dense<0.000000e+00> : vector<8xf32>
    %144 = vector.multi_reduction <add>, %140, %cst_80 [1] : vector<8x8xf32> to vector<8xf32>
    %145 = vector.shape_cast %144 : vector<8xf32> to vector<8x1xf32>
    %146 = arith.addf %143, %145 : vector<8x1xf32>
    %c3_81 = arith.constant 3 : index
    %c0_82 = arith.constant 0 : index
    %c0_83 = arith.constant 0 : index
    %147 = vector.load %arg7[%c3_81, %c0_82, %c0_83] : memref<4x8x1xf32, #tpu.memory_space<vmem>>, vector<1x8x1xf32>
    %148 = vector.shape_cast %147 : vector<1x8x1xf32> to vector<8x1xf32>
    %149 = vector.shape_cast %146 : vector<8x1xf32> to vector<1x8x1xf32>
    tpu.vector_store %arg7[%c3_81, %c0_82, %c0_83], %149 {strides = array<i32>} : memref<4x8x1xf32, #tpu.memory_space<vmem>>, vector<1x8x1xf32>,
    %c3_84 = arith.constant 3 : index
    %c0_85 = arith.constant 0 : index
    %c0_86 = arith.constant 0 : index
    %150 = vector.load %arg8[%c3_84, %c0_85, %c0_86] : memref<4x8x16xf32, #tpu.memory_space<vmem>>, vector<1x8x16xf32>
    %151 = vector.shape_cast %150 : vector<1x8x16xf32> to vector<8x16xf32>
    %152 = vector.broadcast %137 : vector<8x1xf32> to vector<8x16xf32>
    %153 = arith.mulf %152, %151 : vector<8x16xf32>
    %154 = arith.truncf %140 : vector<8x8xf32> to vector<8x8xbf16>
    %cst_87 = arith.constant dense<0.000000e+00> : vector<8x16xf32>
    %155 = tpu.matmul %154, %126, %cst_87 {dimension_numbers = #tpu.dot_dimension_numbers<[1], [0], [0], [1], [0, 0, 1, 1], [], []>} : vector<8x8xbf16>, vector<8x16xbf16>, vector<8x16xf32> -> vector<8x16xf32>
    %156 = arith.addf %153, %155 : vector<8x16xf32>
    %c3_88 = arith.constant 3 : index
    %c0_89 = arith.constant 0 : index
    %c0_90 = arith.constant 0 : index
    %157 = vector.load %arg8[%c3_88, %c0_89, %c0_90] : memref<4x8x16xf32, #tpu.memory_space<vmem>>, vector<1x8x16xf32>
    %158 = vector.shape_cast %157 : vector<1x8x16xf32> to vector<8x16xf32>
    %159 = vector.shape_cast %156 : vector<8x16xf32> to vector<1x8x16xf32>
    tpu.vector_store %arg8[%c3_88, %c0_89, %c0_90], %159 {strides = array<i32>} : memref<4x8x16xf32, #tpu.memory_space<vmem>>, vector<1x8x16xf32>,
    %c3_91 = arith.constant 3 : index
    %c0_92 = arith.constant 0 : index
    %c0_93 = arith.constant 0 : index
    %160 = vector.load %arg6[%c3_91, %c0_92, %c0_93] : memref<4x8x1xf32, #tpu.memory_space<vmem>>, vector<1x8x1xf32>
    %161 = vector.shape_cast %160 : vector<1x8x1xf32> to vector<8x1xf32>
    %162 = vector.shape_cast %135 : vector<8x1xf32> to vector<1x8x1xf32>
    tpu.vector_store %arg6[%c3_91, %c0_92, %c0_93], %162 {strides = array<i32>} : memref<4x8x1xf32, #tpu.memory_space<vmem>>, vector<1x8x1xf32>,
    %c0_i32_94 = arith.constant 0 : i32
    %163 = arith.cmpi eq, %arg2, %c0_i32_94 : i32
    %164 = arith.extui %163 : i1 to i32
    %c0_i32_95 = arith.constant 0 : i32
    %165 = arith.cmpi ne, %164, %c0_i32_95 : i32
    scf.if %165 {
      %c0_96 = arith.constant 0 : index
      %c0_97 = arith.constant 0 : index
      %c0_98 = arith.constant 0 : index
      %166 = vector.load %arg7[%c0_96, %c0_97, %c0_98] : memref<4x8x1xf32, #tpu.memory_space<vmem>>, vector<1x8x1xf32>
      %167 = vector.shape_cast %166 : vector<1x8x1xf32> to vector<8x1xf32>
      %168 = tpu.reciprocal %167 {approx = true} : vector<8x1xf32> -> vector<8x1xf32>
      %c0_99 = arith.constant 0 : index
      %c0_100 = arith.constant 0 : index
      %c0_101 = arith.constant 0 : index
      %169 = vector.load %arg8[%c0_99, %c0_100, %c0_101] : memref<4x8x16xf32, #tpu.memory_space<vmem>>, vector<1x8x16xf32>
      %170 = vector.shape_cast %169 : vector<1x8x16xf32> to vector<8x16xf32>
      %171 = vector.broadcast %168 : vector<8x1xf32> to vector<8x16xf32>
      %172 = arith.mulf %170, %171 : vector<8x16xf32>
      %c1_102 = arith.constant 1 : index
      %c0_103 = arith.constant 0 : index
      %c0_104 = arith.constant 0 : index
      %173 = vector.load %arg7[%c1_102, %c0_103, %c0_104] : memref<4x8x1xf32, #tpu.memory_space<vmem>>, vector<1x8x1xf32>
      %174 = vector.shape_cast %173 : vector<1x8x1xf32> to vector<8x1xf32>
      %175 = tpu.reciprocal %174 {approx = true} : vector<8x1xf32> -> vector<8x1xf32>
      %c1_105 = arith.constant 1 : index
      %c0_106 = arith.constant 0 : index
      %c0_107 = arith.constant 0 : index
      %176 = vector.load %arg8[%c1_105, %c0_106, %c0_107] : memref<4x8x16xf32, #tpu.memory_space<vmem>>, vector<1x8x16xf32>
      %177 = vector.shape_cast %176 : vector<1x8x16xf32> to vector<8x16xf32>
      %178 = vector.broadcast %175 : vector<8x1xf32> to vector<8x16xf32>
      %179 = arith.mulf %177, %178 : vector<8x16xf32>
      %c2_108 = arith.constant 2 : index
      %c0_109 = arith.constant 0 : index
      %c0_110 = arith.constant 0 : index
      %180 = vector.load %arg7[%c2_108, %c0_109, %c0_110] : memref<4x8x1xf32, #tpu.memory_space<vmem>>, vector<1x8x1xf32>
      %181 = vector.shape_cast %180 : vector<1x8x1xf32> to vector<8x1xf32>
      %182 = tpu.reciprocal %181 {approx = true} : vector<8x1xf32> -> vector<8x1xf32>
      %c2_111 = arith.constant 2 : index
      %c0_112 = arith.constant 0 : index
      %c0_113 = arith.constant 0 : index
      %183 = vector.load %arg8[%c2_111, %c0_112, %c0_113] : memref<4x8x16xf32, #tpu.memory_space<vmem>>, vector<1x8x16xf32>
      %184 = vector.shape_cast %183 : vector<1x8x16xf32> to vector<8x16xf32>
      %185 = vector.broadcast %182 : vector<8x1xf32> to vector<8x16xf32>
      %186 = arith.mulf %184, %185 : vector<8x16xf32>
      %c3_114 = arith.constant 3 : index
      %c0_115 = arith.constant 0 : index
      %c0_116 = arith.constant 0 : index
      %187 = vector.load %arg7[%c3_114, %c0_115, %c0_116] : memref<4x8x1xf32, #tpu.memory_space<vmem>>, vector<1x8x1xf32>
      %188 = vector.shape_cast %187 : vector<1x8x1xf32> to vector<8x1xf32>
      %189 = tpu.reciprocal %188 {approx = true} : vector<8x1xf32> -> vector<8x1xf32>
      %c3_117 = arith.constant 3 : index
      %c0_118 = arith.constant 0 : index
      %c0_119 = arith.constant 0 : index
      %190 = vector.load %arg8[%c3_117, %c0_118, %c0_119] : memref<4x8x16xf32, #tpu.memory_space<vmem>>, vector<1x8x16xf32>
      %191 = vector.shape_cast %190 : vector<1x8x16xf32> to vector<8x16xf32>
      %192 = vector.broadcast %189 : vector<8x1xf32> to vector<8x16xf32>
      %193 = arith.mulf %191, %192 : vector<8x16xf32>
      %194 = tpu.concatenate %172, %179, %186, %193 in 1 : vector<8x16xf32>, vector<8x16xf32>, vector<8x16xf32>, vector<8x16xf32> -> vector<8x64xf32>
      %195 = arith.truncf %194 : vector<8x64xf32> to vector<8x64xbf16>
      %c0_120 = arith.constant 0 : index
      %c0_121 = arith.constant 0 : index
      %c0_122 = arith.constant 0 : index
      %196 = vector.load %arg5[%c0_120, %c0_121, %c0_122] : memref<1x8x64xbf16, #tpu.memory_space<vmem>>, vector<1x8x64xbf16>
      %197 = vector.shape_cast %196 : vector<1x8x64xbf16> to vector<8x64xbf16>
      %198 = vector.shape_cast %195 : vector<8x64xbf16> to vector<1x8x64xbf16>
      tpu.vector_store %arg5[%c0_120, %c0_121, %c0_122], %198 {strides = array<i32>} : memref<1x8x64xbf16, #tpu.memory_space<vmem>>, vector<1x8x64xbf16>,
    } else {
    }
    return
  }
  func.func @transform_0(%arg0: i32, %arg1: i32, %arg2: i32) -> (i32, i32, i32) {
    %c0_i32 = arith.constant 0 : i32
    %c0_i32_0 = arith.constant 0 : i32
    return %arg0, %arg1, %c0_i32 : i32, i32, i32
  }
  func.func @transform_1(%arg0: i32, %arg1: i32, %arg2: i32) -> (i32, i32, i32) {
    %c0_i32 = arith.constant 0 : i32
    %c0_i32_0 = arith.constant 0 : i32
    return %arg0, %arg2, %c0_i32 : i32, i32, i32
  }
  func.func @transform_2(%arg0: i32, %arg1: i32, %arg2: i32) -> (i32, i32, i32) {
    %c0_i32 = arith.constant 0 : i32
    %c0_i32_0 = arith.constant 0 : i32
    return %arg0, %arg1, %c0_i32 : i32, i32, i32
  }
}

module attributes {stable_mosaic.version = 11 : i64} {
  func.func @_moe_kernel(%arg0: i32, %arg1: i32, %arg2: i32, %arg3: memref<16x64xbf16, #tpu.memory_space<vmem>>, %arg4: memref<1x64x256xbf16, #tpu.memory_space<vmem>>, %arg5: memref<1x1x256xf32, #tpu.memory_space<vmem>>, %arg6: memref<1x256x64xbf16, #tpu.memory_space<vmem>>, %arg7: memref<1x1x64xf32, #tpu.memory_space<vmem>>, %arg8: memref<1x16x1xf32, #tpu.memory_space<vmem>>, %arg9: memref<16x64xf32, #tpu.memory_space<vmem>>, %arg10: memref<16x64xf32, #tpu.memory_space<vmem>>, %arg11: memref<16x64xf32, #tpu.memory_space<vmem>>) attributes {dimension_semantics = [#tpu.dimension_semantics<parallel>, #tpu.dimension_semantics<arbitrary>, #tpu.dimension_semantics<arbitrary>], iteration_bounds = array<i64: 1, 5, 1>, scalar_prefetch = 0 : i64, scratch_operands = 1 : i64, tpu.core_type = #tpu.core_type<tc>, window_params = [{transform_indices = @transform_0, window_bounds = array<i64: 16, 64>}, {transform_indices = @transform_1, window_bounds = array<i64: 1, 64, 256>}, {transform_indices = @transform_2, window_bounds = array<i64: 1, 1, 256>}, {transform_indices = @transform_3, window_bounds = array<i64: 1, 256, 64>}, {transform_indices = @transform_4, window_bounds = array<i64: 1, 1, 64>}, {transform_indices = @transform_5, window_bounds = array<i64: 1, 16, 1>}, {transform_indices = @transform_6, window_bounds = array<i64: 16, 64>}, {transform_indices = @transform_7, window_bounds = array<i64: 16, 64>}]} {
    %c0_i32 = arith.constant 0 : i32
    %0 = arith.cmpi eq, %arg1, %c0_i32 : i32
    %c0_i32_0 = arith.constant 0 : i32
    %1 = arith.cmpi eq, %arg2, %c0_i32_0 : i32
    %2 = arith.andi %0, %1 : i1
    %3 = arith.extui %2 : i1 to i32
    %c0_i32_1 = arith.constant 0 : i32
    %4 = arith.cmpi ne, %3, %c0_i32_1 : i32
    scf.if %4 {
      %cst_43 = arith.constant 0.000000e+00 : f32
      %77 = vector.broadcast %cst_43 : f32 to vector<16x64xf32>
      %c0_44 = arith.constant 0 : index
      %c0_45 = arith.constant 0 : index
      %78 = vector.load %arg11[%c0_44, %c0_45] : memref<16x64xf32, #tpu.memory_space<vmem>>, vector<16x64xf32>
      tpu.vector_store %arg11[%c0_44, %c0_45], %77 {strides = array<i32>} : memref<16x64xf32, #tpu.memory_space<vmem>>, vector<16x64xf32>,
    } else {
    }
    %c0 = arith.constant 0 : index
    %c0_2 = arith.constant 0 : index
    %5 = vector.load %arg3[%c0, %c0_2] : memref<16x64xbf16, #tpu.memory_space<vmem>>, vector<16x64xbf16>
    %c0_3 = arith.constant 0 : index
    %c0_4 = arith.constant 0 : index
    %c0_5 = arith.constant 0 : index
    %6 = vector.load %arg4[%c0_3, %c0_4, %c0_5] : memref<1x64x256xbf16, #tpu.memory_space<vmem>>, vector<1x64x256xbf16>
    %7 = vector.shape_cast %6 : vector<1x64x256xbf16> to vector<64x256xbf16>
    %cst = arith.constant dense<0.000000e+00> : vector<16x256xf32>
    %8 = tpu.matmul %5, %7, %cst {dimension_numbers = #tpu.dot_dimension_numbers<[1], [0], [0], [1], [0, 0, 1, 1], [], []>} : vector<16x64xbf16>, vector<64x256xbf16>, vector<16x256xf32> -> vector<16x256xf32>
    %c0_6 = arith.constant 0 : index
    %c0_7 = arith.constant 0 : index
    %c0_8 = arith.constant 0 : index
    %9 = vector.load %arg5[%c0_6, %c0_7, %c0_8] : memref<1x1x256xf32, #tpu.memory_space<vmem>>, vector<1x1x256xf32>
    %10 = vector.shape_cast %9 : vector<1x1x256xf32> to vector<1x256xf32>
    %11 = vector.broadcast %10 : vector<1x256xf32> to vector<16x256xf32>
    %12 = arith.addf %8, %11 : vector<16x256xf32>
    %cst_9 = arith.constant 5.000000e-01 : f32
    %13 = vector.broadcast %cst_9 : f32 to vector<16x256xf32>
    %14 = arith.mulf %13, %12 : vector<16x256xf32>
    %cst_10 = arith.constant 0.707106769 : f32
    %15 = vector.broadcast %cst_10 : f32 to vector<16x256xf32>
    %16 = arith.mulf %12, %15 : vector<16x256xf32>
    %cst_11 = arith.constant 0.000000e+00 : f32
    %17 = vector.broadcast %cst_11 : f32 to vector<16x256xf32>
    %18 = arith.cmpf oge, %16, %17 : vector<16x256xf32>
    %cst_12 = arith.constant 1.000000e+00 : f32
    %cst_13 = arith.constant -1.000000e+00 : f32
    %19 = vector.broadcast %cst_12 : f32 to vector<16x256xf32>
    %20 = vector.broadcast %cst_13 : f32 to vector<16x256xf32>
    %21 = arith.select %18, %19, %20 : vector<16x256xi1>, vector<16x256xf32>
    %22 = math.absf %16 : vector<16x256xf32>
    %cst_14 = arith.constant 0.327591091 : f32
    %23 = vector.broadcast %cst_14 : f32 to vector<16x256xf32>
    %24 = arith.mulf %23, %22 : vector<16x256xf32>
    %cst_15 = arith.constant 1.000000e+00 : f32
    %25 = vector.broadcast %cst_15 : f32 to vector<16x256xf32>
    %26 = arith.addf %25, %24 : vector<16x256xf32>
    %27 = tpu.reciprocal %26 {approx = true} : vector<16x256xf32> -> vector<16x256xf32>
    %cst_16 = arith.constant 1.06140542 : f32
    %28 = vector.broadcast %cst_16 : f32 to vector<16x256xf32>
    %29 = arith.mulf %28, %27 : vector<16x256xf32>
    %cst_17 = arith.constant -1.45315206 : f32
    %30 = vector.broadcast %cst_17 : f32 to vector<16x256xf32>
    %31 = arith.addf %29, %30 : vector<16x256xf32>
    %32 = arith.mulf %31, %27 : vector<16x256xf32>
    %cst_18 = arith.constant 1.42141378 : f32
    %33 = vector.broadcast %cst_18 : f32 to vector<16x256xf32>
    %34 = arith.addf %32, %33 : vector<16x256xf32>
    %35 = arith.mulf %34, %27 : vector<16x256xf32>
    %cst_19 = arith.constant -0.284496725 : f32
    %36 = vector.broadcast %cst_19 : f32 to vector<16x256xf32>
    %37 = arith.addf %35, %36 : vector<16x256xf32>
    %38 = arith.mulf %37, %27 : vector<16x256xf32>
    %cst_20 = arith.constant 0.254829586 : f32
    %39 = vector.broadcast %cst_20 : f32 to vector<16x256xf32>
    %40 = arith.addf %38, %39 : vector<16x256xf32>
    %41 = arith.mulf %40, %27 : vector<16x256xf32>
    %cst_21 = arith.constant 0.000000e+00 : f32
    %42 = vector.broadcast %cst_21 : f32 to vector<16x256xf32>
    %43 = arith.subf %42, %22 : vector<16x256xf32>
    %44 = arith.mulf %43, %22 : vector<16x256xf32>
    %45 = math.exp %44 : vector<16x256xf32>
    %46 = arith.mulf %41, %45 : vector<16x256xf32>
    %cst_22 = arith.constant 1.000000e+00 : f32
    %47 = vector.broadcast %cst_22 : f32 to vector<16x256xf32>
    %48 = arith.subf %47, %46 : vector<16x256xf32>
    %49 = arith.mulf %21, %48 : vector<16x256xf32>
    %cst_23 = arith.constant 1.000000e+00 : f32
    %50 = vector.broadcast %cst_23 : f32 to vector<16x256xf32>
    %51 = arith.addf %50, %49 : vector<16x256xf32>
    %52 = arith.mulf %14, %51 : vector<16x256xf32>
    %53 = arith.truncf %52 : vector<16x256xf32> to vector<16x256xbf16>
    %c0_24 = arith.constant 0 : index
    %c0_25 = arith.constant 0 : index
    %c0_26 = arith.constant 0 : index
    %54 = vector.load %arg6[%c0_24, %c0_25, %c0_26] : memref<1x256x64xbf16, #tpu.memory_space<vmem>>, vector<1x256x64xbf16>
    %55 = vector.shape_cast %54 : vector<1x256x64xbf16> to vector<256x64xbf16>
    %cst_27 = arith.constant dense<0.000000e+00> : vector<16x64xf32>
    %56 = tpu.matmul %53, %55, %cst_27 {dimension_numbers = #tpu.dot_dimension_numbers<[1], [0], [0], [1], [0, 0, 1, 1], [], []>} : vector<16x256xbf16>, vector<256x64xbf16>, vector<16x64xf32> -> vector<16x64xf32>
    %c0_i32_28 = arith.constant 0 : i32
    %57 = arith.cmpi eq, %arg2, %c0_i32_28 : i32
    %cst_29 = arith.constant 1.000000e+00 : f32
    %cst_30 = arith.constant 0.000000e+00 : f32
    %58 = arith.select %57, %cst_29, %cst_30 : f32
    %c0_31 = arith.constant 0 : index
    %c0_32 = arith.constant 0 : index
    %c0_33 = arith.constant 0 : index
    %59 = vector.load %arg7[%c0_31, %c0_32, %c0_33] : memref<1x1x64xf32, #tpu.memory_space<vmem>>, vector<1x1x64xf32>
    %60 = vector.shape_cast %59 : vector<1x1x64xf32> to vector<1x64xf32>
    %61 = vector.broadcast %58 : f32 to vector<1x64xf32>
    %62 = arith.mulf %61, %60 : vector<1x64xf32>
    %63 = vector.broadcast %62 : vector<1x64xf32> to vector<16x64xf32>
    %64 = arith.addf %56, %63 : vector<16x64xf32>
    %c0_34 = arith.constant 0 : index
    %c0_35 = arith.constant 0 : index
    %65 = vector.load %arg11[%c0_34, %c0_35] : memref<16x64xf32, #tpu.memory_space<vmem>>, vector<16x64xf32>
    %c0_36 = arith.constant 0 : index
    %c0_37 = arith.constant 0 : index
    %c0_38 = arith.constant 0 : index
    %66 = vector.load %arg8[%c0_36, %c0_37, %c0_38] : memref<1x16x1xf32, #tpu.memory_space<vmem>>, vector<1x16x1xf32>
    %67 = vector.shape_cast %66 : vector<1x16x1xf32> to vector<16x1xf32>
    %68 = vector.broadcast %67 : vector<16x1xf32> to vector<16x64xf32>
    %69 = arith.mulf %64, %68 : vector<16x64xf32>
    %70 = arith.addf %65, %69 : vector<16x64xf32>
    %c0_39 = arith.constant 0 : index
    %c0_40 = arith.constant 0 : index
    %71 = vector.load %arg11[%c0_39, %c0_40] : memref<16x64xf32, #tpu.memory_space<vmem>>, vector<16x64xf32>
    tpu.vector_store %arg11[%c0_39, %c0_40], %70 {strides = array<i32>} : memref<16x64xf32, #tpu.memory_space<vmem>>, vector<16x64xf32>,
    %c4_i32 = arith.constant 4 : i32
    %72 = arith.cmpi eq, %arg1, %c4_i32 : i32
    %c0_i32_41 = arith.constant 0 : i32
    %73 = arith.cmpi eq, %arg2, %c0_i32_41 : i32
    %74 = arith.andi %72, %73 : i1
    %75 = arith.extui %74 : i1 to i32
    %c0_i32_42 = arith.constant 0 : i32
    %76 = arith.cmpi ne, %75, %c0_i32_42 : i32
    scf.if %76 {
      %c0_43 = arith.constant 0 : index
      %c0_44 = arith.constant 0 : index
      %77 = vector.load %arg11[%c0_43, %c0_44] : memref<16x64xf32, #tpu.memory_space<vmem>>, vector<16x64xf32>
      %78 = math.absf %77 : vector<16x64xf32>
      %cst_45 = arith.constant dense<0xFF800000> : vector<16xf32>
      %79 = vector.multi_reduction <maximumf>, %78, %cst_45 [1] : vector<16x64xf32> to vector<16xf32>
      %80 = vector.shape_cast %79 : vector<16xf32> to vector<16x1xf32>
      %cst_46 = arith.constant 9.99999997E-7 : f32
      %81 = vector.broadcast %cst_46 : f32 to vector<16x1xf32>
      %82 = arith.addf %80, %81 : vector<16x1xf32>
      %c0_47 = arith.constant 0 : index
      %c0_48 = arith.constant 0 : index
      %83 = vector.load %arg9[%c0_47, %c0_48] : memref<16x64xf32, #tpu.memory_space<vmem>>, vector<16x64xf32>
      %84 = vector.broadcast %82 : vector<16x1xf32> to vector<16x64xf32>
      %85 = arith.divf %77, %84 : vector<16x64xf32>
      %86 = arith.addf %83, %85 : vector<16x64xf32>
      %c0_49 = arith.constant 0 : index
      %c0_50 = arith.constant 0 : index
      %87 = vector.load %arg10[%c0_49, %c0_50] : memref<16x64xf32, #tpu.memory_space<vmem>>, vector<16x64xf32>
      tpu.vector_store %arg10[%c0_49, %c0_50], %86 {strides = array<i32>} : memref<16x64xf32, #tpu.memory_space<vmem>>, vector<16x64xf32>,
    } else {
    }
    return
  }
  func.func @transform_0(%arg0: i32, %arg1: i32, %arg2: i32) -> (i32, i32) {
    %c0_i32 = arith.constant 0 : i32
    %c0_i32_0 = arith.constant 0 : i32
    return %arg0, %c0_i32 : i32, i32
  }
  func.func @transform_1(%arg0: i32, %arg1: i32, %arg2: i32) -> (i32, i32, i32) {
    %c0_i32 = arith.constant 0 : i32
    %c0_i32_0 = arith.constant 0 : i32
    return %arg1, %c0_i32, %arg2 : i32, i32, i32
  }
  func.func @transform_2(%arg0: i32, %arg1: i32, %arg2: i32) -> (i32, i32, i32) {
    %c0_i32 = arith.constant 0 : i32
    %c0_i32_0 = arith.constant 0 : i32
    return %arg1, %c0_i32, %arg2 : i32, i32, i32
  }
  func.func @transform_3(%arg0: i32, %arg1: i32, %arg2: i32) -> (i32, i32, i32) {
    %c0_i32 = arith.constant 0 : i32
    %c0_i32_0 = arith.constant 0 : i32
    return %arg1, %arg2, %c0_i32 : i32, i32, i32
  }
  func.func @transform_4(%arg0: i32, %arg1: i32, %arg2: i32) -> (i32, i32, i32) {
    %c0_i32 = arith.constant 0 : i32
    %c0_i32_0 = arith.constant 0 : i32
    %c0_i32_1 = arith.constant 0 : i32
    return %arg1, %c0_i32, %c0_i32_0 : i32, i32, i32
  }
  func.func @transform_5(%arg0: i32, %arg1: i32, %arg2: i32) -> (i32, i32, i32) {
    %c0_i32 = arith.constant 0 : i32
    %c0_i32_0 = arith.constant 0 : i32
    return %arg1, %arg0, %c0_i32 : i32, i32, i32
  }
  func.func @transform_6(%arg0: i32, %arg1: i32, %arg2: i32) -> (i32, i32) {
    %c0_i32 = arith.constant 0 : i32
    %c0_i32_0 = arith.constant 0 : i32
    return %arg0, %c0_i32 : i32, i32
  }
  func.func @transform_7(%arg0: i32, %arg1: i32, %arg2: i32) -> (i32, i32) {
    %c0_i32 = arith.constant 0 : i32
    %c0_i32_0 = arith.constant 0 : i32
    return %arg0, %c0_i32 : i32, i32
  }
}

module attributes {stable_mosaic.version = 11 : i64} {
  func.func @_mm_kernel(%arg0: i32, %arg1: i32, %arg2: i32, %arg3: memref<16x64xbf16, #tpu.memory_space<vmem>>, %arg4: memref<64x128xbf16, #tpu.memory_space<vmem>>, %arg5: memref<1x128xf32, #tpu.memory_space<vmem>>, %arg6: memref<16x1xf32, #tpu.memory_space<vmem>>, %arg7: memref<1x128xf32, #tpu.memory_space<vmem>>, %arg8: memref<16x128xbf16, #tpu.memory_space<vmem>>, %arg9: memref<16x128xf32, #tpu.memory_space<vmem>>) attributes {dimension_semantics = [#tpu.dimension_semantics<parallel>, #tpu.dimension_semantics<parallel>, #tpu.dimension_semantics<arbitrary>], iteration_bounds = array<i64: 1, 1, 1>, scalar_prefetch = 0 : i64, scratch_operands = 1 : i64, tpu.core_type = #tpu.core_type<tc>, window_params = [{transform_indices = @transform_0, window_bounds = array<i64: 16, 64>}, {transform_indices = @transform_1, window_bounds = array<i64: 64, 128>}, {transform_indices = @transform_2, window_bounds = array<i64: 1, 128>}, {transform_indices = @transform_3, window_bounds = array<i64: 16, 1>}, {transform_indices = @transform_4, window_bounds = array<i64: 1, 128>}, {transform_indices = @transform_5, window_bounds = array<i64: 16, 128>}]} {
    %c0_i32 = arith.constant 0 : i32
    %0 = arith.cmpi eq, %arg2, %c0_i32 : i32
    %1 = arith.extui %0 : i1 to i32
    %c0_i32_0 = arith.constant 0 : i32
    %2 = arith.cmpi ne, %1, %c0_i32_0 : i32
    scf.if %2 {
      %cst_10 = arith.constant 0.000000e+00 : f32
      %12 = vector.broadcast %cst_10 : f32 to vector<16x128xf32>
      %c0_11 = arith.constant 0 : index
      %c0_12 = arith.constant 0 : index
      %13 = vector.load %arg9[%c0_11, %c0_12] : memref<16x128xf32, #tpu.memory_space<vmem>>, vector<16x128xf32>
      tpu.vector_store %arg9[%c0_11, %c0_12], %12 {strides = array<i32>} : memref<16x128xf32, #tpu.memory_space<vmem>>, vector<16x128xf32>,
    } else {
    }
    %c0 = arith.constant 0 : index
    %c0_1 = arith.constant 0 : index
    %3 = vector.load %arg9[%c0, %c0_1] : memref<16x128xf32, #tpu.memory_space<vmem>>, vector<16x128xf32>
    %c0_2 = arith.constant 0 : index
    %c0_3 = arith.constant 0 : index
    %4 = vector.load %arg3[%c0_2, %c0_3] : memref<16x64xbf16, #tpu.memory_space<vmem>>, vector<16x64xbf16>
    %c0_4 = arith.constant 0 : index
    %c0_5 = arith.constant 0 : index
    %5 = vector.load %arg4[%c0_4, %c0_5] : memref<64x128xbf16, #tpu.memory_space<vmem>>, vector<64x128xbf16>
    %cst = arith.constant dense<0.000000e+00> : vector<16x128xf32>
    %6 = tpu.matmul %4, %5, %cst {dimension_numbers = #tpu.dot_dimension_numbers<[1], [0], [0], [1], [0, 0, 1, 1], [], []>} : vector<16x64xbf16>, vector<64x128xbf16>, vector<16x128xf32> -> vector<16x128xf32>
    %7 = arith.addf %3, %6 : vector<16x128xf32>
    %c0_6 = arith.constant 0 : index
    %c0_7 = arith.constant 0 : index
    %8 = vector.load %arg9[%c0_6, %c0_7] : memref<16x128xf32, #tpu.memory_space<vmem>>, vector<16x128xf32>
    tpu.vector_store %arg9[%c0_6, %c0_7], %7 {strides = array<i32>} : memref<16x128xf32, #tpu.memory_space<vmem>>, vector<16x128xf32>,
    %c0_i32_8 = arith.constant 0 : i32
    %9 = arith.cmpi eq, %arg2, %c0_i32_8 : i32
    %10 = arith.extui %9 : i1 to i32
    %c0_i32_9 = arith.constant 0 : i32
    %11 = arith.cmpi ne, %10, %c0_i32_9 : i32
    scf.if %11 {
      %c0_10 = arith.constant 0 : index
      %c0_11 = arith.constant 0 : index
      %12 = vector.load %arg9[%c0_10, %c0_11] : memref<16x128xf32, #tpu.memory_space<vmem>>, vector<16x128xf32>
      %c0_12 = arith.constant 0 : index
      %c0_13 = arith.constant 0 : index
      %13 = vector.load %arg5[%c0_12, %c0_13] : memref<1x128xf32, #tpu.memory_space<vmem>>, vector<1x128xf32>
      %14 = vector.broadcast %13 : vector<1x128xf32> to vector<16x128xf32>
      %15 = arith.addf %12, %14 : vector<16x128xf32>
      %c0_14 = arith.constant 0 : index
      %c0_15 = arith.constant 0 : index
      %16 = vector.load %arg6[%c0_14, %c0_15] : memref<16x1xf32, #tpu.memory_space<vmem>>, vector<16x1xf32>
      %c0_16 = arith.constant 0 : index
      %c0_17 = arith.constant 0 : index
      %17 = vector.load %arg7[%c0_16, %c0_17] : memref<1x128xf32, #tpu.memory_space<vmem>>, vector<1x128xf32>
      %18 = vector.broadcast %16 : vector<16x1xf32> to vector<16x128xf32>
      %19 = vector.broadcast %17 : vector<1x128xf32> to vector<16x128xf32>
      %20 = arith.mulf %18, %19 : vector<16x128xf32>
      %21 = arith.addf %15, %20 : vector<16x128xf32>
      %cst_18 = arith.constant 5.000000e-01 : f32
      %22 = vector.broadcast %cst_18 : f32 to vector<16x128xf32>
      %23 = arith.mulf %22, %21 : vector<16x128xf32>
      %cst_19 = arith.constant 0.707106769 : f32
      %24 = vector.broadcast %cst_19 : f32 to vector<16x128xf32>
      %25 = arith.mulf %21, %24 : vector<16x128xf32>
      %cst_20 = arith.constant 0.000000e+00 : f32
      %26 = vector.broadcast %cst_20 : f32 to vector<16x128xf32>
      %27 = arith.cmpf oge, %25, %26 : vector<16x128xf32>
      %cst_21 = arith.constant 1.000000e+00 : f32
      %cst_22 = arith.constant -1.000000e+00 : f32
      %28 = vector.broadcast %cst_21 : f32 to vector<16x128xf32>
      %29 = vector.broadcast %cst_22 : f32 to vector<16x128xf32>
      %30 = arith.select %27, %28, %29 : vector<16x128xi1>, vector<16x128xf32>
      %31 = math.absf %25 : vector<16x128xf32>
      %cst_23 = arith.constant 0.327591091 : f32
      %32 = vector.broadcast %cst_23 : f32 to vector<16x128xf32>
      %33 = arith.mulf %32, %31 : vector<16x128xf32>
      %cst_24 = arith.constant 1.000000e+00 : f32
      %34 = vector.broadcast %cst_24 : f32 to vector<16x128xf32>
      %35 = arith.addf %34, %33 : vector<16x128xf32>
      %36 = tpu.reciprocal %35 {approx = true} : vector<16x128xf32> -> vector<16x128xf32>
      %cst_25 = arith.constant 1.06140542 : f32
      %37 = vector.broadcast %cst_25 : f32 to vector<16x128xf32>
      %38 = arith.mulf %37, %36 : vector<16x128xf32>
      %cst_26 = arith.constant -1.45315206 : f32
      %39 = vector.broadcast %cst_26 : f32 to vector<16x128xf32>
      %40 = arith.addf %38, %39 : vector<16x128xf32>
      %41 = arith.mulf %40, %36 : vector<16x128xf32>
      %cst_27 = arith.constant 1.42141378 : f32
      %42 = vector.broadcast %cst_27 : f32 to vector<16x128xf32>
      %43 = arith.addf %41, %42 : vector<16x128xf32>
      %44 = arith.mulf %43, %36 : vector<16x128xf32>
      %cst_28 = arith.constant -0.284496725 : f32
      %45 = vector.broadcast %cst_28 : f32 to vector<16x128xf32>
      %46 = arith.addf %44, %45 : vector<16x128xf32>
      %47 = arith.mulf %46, %36 : vector<16x128xf32>
      %cst_29 = arith.constant 0.254829586 : f32
      %48 = vector.broadcast %cst_29 : f32 to vector<16x128xf32>
      %49 = arith.addf %47, %48 : vector<16x128xf32>
      %50 = arith.mulf %49, %36 : vector<16x128xf32>
      %cst_30 = arith.constant 0.000000e+00 : f32
      %51 = vector.broadcast %cst_30 : f32 to vector<16x128xf32>
      %52 = arith.subf %51, %31 : vector<16x128xf32>
      %53 = arith.mulf %52, %31 : vector<16x128xf32>
      %54 = math.exp %53 : vector<16x128xf32>
      %55 = arith.mulf %50, %54 : vector<16x128xf32>
      %cst_31 = arith.constant 1.000000e+00 : f32
      %56 = vector.broadcast %cst_31 : f32 to vector<16x128xf32>
      %57 = arith.subf %56, %55 : vector<16x128xf32>
      %58 = arith.mulf %30, %57 : vector<16x128xf32>
      %cst_32 = arith.constant 1.000000e+00 : f32
      %59 = vector.broadcast %cst_32 : f32 to vector<16x128xf32>
      %60 = arith.addf %59, %58 : vector<16x128xf32>
      %61 = arith.mulf %23, %60 : vector<16x128xf32>
      %62 = arith.truncf %61 : vector<16x128xf32> to vector<16x128xbf16>
      %c0_33 = arith.constant 0 : index
      %c0_34 = arith.constant 0 : index
      %63 = vector.load %arg8[%c0_33, %c0_34] : memref<16x128xbf16, #tpu.memory_space<vmem>>, vector<16x128xbf16>
      tpu.vector_store %arg8[%c0_33, %c0_34], %62 {strides = array<i32>} : memref<16x128xbf16, #tpu.memory_space<vmem>>, vector<16x128xbf16>,
    } else {
    }
    return
  }
  func.func @transform_0(%arg0: i32, %arg1: i32, %arg2: i32) -> (i32, i32) {
    %c0_i32 = arith.constant 0 : i32
    %0 = arith.addi %arg2, %c0_i32 : i32
    %c0_i32_0 = arith.constant 0 : i32
    return %arg0, %0 : i32, i32
  }
  func.func @transform_1(%arg0: i32, %arg1: i32, %arg2: i32) -> (i32, i32) {
    %c0_i32 = arith.constant 0 : i32
    return %arg2, %arg1 : i32, i32
  }
  func.func @transform_2(%arg0: i32, %arg1: i32, %arg2: i32) -> (i32, i32) {
    %c0_i32 = arith.constant 0 : i32
    %c0_i32_0 = arith.constant 0 : i32
    return %c0_i32, %arg1 : i32, i32
  }
  func.func @transform_3(%arg0: i32, %arg1: i32, %arg2: i32) -> (i32, i32) {
    %c0_i32 = arith.constant 0 : i32
    %c0_i32_0 = arith.constant 0 : i32
    return %arg0, %c0_i32 : i32, i32
  }
  func.func @transform_4(%arg0: i32, %arg1: i32, %arg2: i32) -> (i32, i32) {
    %c0_i32 = arith.constant 0 : i32
    %c0_i32_0 = arith.constant 0 : i32
    return %c0_i32, %arg1 : i32, i32
  }
  func.func @transform_5(%arg0: i32, %arg1: i32, %arg2: i32) -> (i32, i32) {
    %c0_i32 = arith.constant 0 : i32
    return %arg0, %arg1 : i32, i32
  }
}

module attributes {stable_mosaic.version = 11 : i64} {
  func.func @_mm_kernel(%arg0: i32, %arg1: i32, %arg2: i32, %arg3: memref<16x128xbf16, #tpu.memory_space<vmem>>, %arg4: memref<128x64xbf16, #tpu.memory_space<vmem>>, %arg5: memref<1x64xf32, #tpu.memory_space<vmem>>, %arg6: memref<16x64xbf16, #tpu.memory_space<vmem>>, %arg7: memref<16x64xf32, #tpu.memory_space<vmem>>) attributes {dimension_semantics = [#tpu.dimension_semantics<parallel>, #tpu.dimension_semantics<parallel>, #tpu.dimension_semantics<arbitrary>], iteration_bounds = array<i64: 1, 1, 1>, scalar_prefetch = 0 : i64, scratch_operands = 1 : i64, tpu.core_type = #tpu.core_type<tc>, window_params = [{transform_indices = @transform_0, window_bounds = array<i64: 16, 128>}, {transform_indices = @transform_1, window_bounds = array<i64: 128, 64>}, {transform_indices = @transform_2, window_bounds = array<i64: 1, 64>}, {transform_indices = @transform_3, window_bounds = array<i64: 16, 64>}]} {
    %c0_i32 = arith.constant 0 : i32
    %0 = arith.cmpi eq, %arg2, %c0_i32 : i32
    %1 = arith.extui %0 : i1 to i32
    %c0_i32_0 = arith.constant 0 : i32
    %2 = arith.cmpi ne, %1, %c0_i32_0 : i32
    scf.if %2 {
      %cst_10 = arith.constant 0.000000e+00 : f32
      %12 = vector.broadcast %cst_10 : f32 to vector<16x64xf32>
      %c0_11 = arith.constant 0 : index
      %c0_12 = arith.constant 0 : index
      %13 = vector.load %arg7[%c0_11, %c0_12] : memref<16x64xf32, #tpu.memory_space<vmem>>, vector<16x64xf32>
      tpu.vector_store %arg7[%c0_11, %c0_12], %12 {strides = array<i32>} : memref<16x64xf32, #tpu.memory_space<vmem>>, vector<16x64xf32>,
    } else {
    }
    %c0 = arith.constant 0 : index
    %c0_1 = arith.constant 0 : index
    %3 = vector.load %arg7[%c0, %c0_1] : memref<16x64xf32, #tpu.memory_space<vmem>>, vector<16x64xf32>
    %c0_2 = arith.constant 0 : index
    %c0_3 = arith.constant 0 : index
    %4 = vector.load %arg3[%c0_2, %c0_3] : memref<16x128xbf16, #tpu.memory_space<vmem>>, vector<16x128xbf16>
    %c0_4 = arith.constant 0 : index
    %c0_5 = arith.constant 0 : index
    %5 = vector.load %arg4[%c0_4, %c0_5] : memref<128x64xbf16, #tpu.memory_space<vmem>>, vector<128x64xbf16>
    %cst = arith.constant dense<0.000000e+00> : vector<16x64xf32>
    %6 = tpu.matmul %4, %5, %cst {dimension_numbers = #tpu.dot_dimension_numbers<[1], [0], [0], [1], [0, 0, 1, 1], [], []>} : vector<16x128xbf16>, vector<128x64xbf16>, vector<16x64xf32> -> vector<16x64xf32>
    %7 = arith.addf %3, %6 : vector<16x64xf32>
    %c0_6 = arith.constant 0 : index
    %c0_7 = arith.constant 0 : index
    %8 = vector.load %arg7[%c0_6, %c0_7] : memref<16x64xf32, #tpu.memory_space<vmem>>, vector<16x64xf32>
    tpu.vector_store %arg7[%c0_6, %c0_7], %7 {strides = array<i32>} : memref<16x64xf32, #tpu.memory_space<vmem>>, vector<16x64xf32>,
    %c0_i32_8 = arith.constant 0 : i32
    %9 = arith.cmpi eq, %arg2, %c0_i32_8 : i32
    %10 = arith.extui %9 : i1 to i32
    %c0_i32_9 = arith.constant 0 : i32
    %11 = arith.cmpi ne, %10, %c0_i32_9 : i32
    scf.if %11 {
      %c0_10 = arith.constant 0 : index
      %c0_11 = arith.constant 0 : index
      %12 = vector.load %arg7[%c0_10, %c0_11] : memref<16x64xf32, #tpu.memory_space<vmem>>, vector<16x64xf32>
      %c0_12 = arith.constant 0 : index
      %c0_13 = arith.constant 0 : index
      %13 = vector.load %arg5[%c0_12, %c0_13] : memref<1x64xf32, #tpu.memory_space<vmem>>, vector<1x64xf32>
      %14 = vector.broadcast %13 : vector<1x64xf32> to vector<16x64xf32>
      %15 = arith.addf %12, %14 : vector<16x64xf32>
      %16 = arith.truncf %15 : vector<16x64xf32> to vector<16x64xbf16>
      %c0_14 = arith.constant 0 : index
      %c0_15 = arith.constant 0 : index
      %17 = vector.load %arg6[%c0_14, %c0_15] : memref<16x64xbf16, #tpu.memory_space<vmem>>, vector<16x64xbf16>
      tpu.vector_store %arg6[%c0_14, %c0_15], %16 {strides = array<i32>} : memref<16x64xbf16, #tpu.memory_space<vmem>>, vector<16x64xbf16>,
    } else {
    }
    return
  }
  func.func @transform_0(%arg0: i32, %arg1: i32, %arg2: i32) -> (i32, i32) {
    %c0_i32 = arith.constant 0 : i32
    %0 = arith.addi %arg2, %c0_i32 : i32
    %c0_i32_0 = arith.constant 0 : i32
    return %arg0, %0 : i32, i32
  }
  func.func @transform_1(%arg0: i32, %arg1: i32, %arg2: i32) -> (i32, i32) {
    %c0_i32 = arith.constant 0 : i32
    return %arg2, %arg1 : i32, i32
  }
  func.func @transform_2(%arg0: i32, %arg1: i32, %arg2: i32) -> (i32, i32) {
    %c0_i32 = arith.constant 0 : i32
    %c0_i32_0 = arith.constant 0 : i32
    return %c0_i32, %arg1 : i32, i32
  }
  func.func @transform_3(%arg0: i32, %arg1: i32, %arg2: i32) -> (i32, i32) {
    %c0_i32 = arith.constant 0 : i32
    return %arg0, %arg1 : i32, i32
  }
}

module attributes {stable_mosaic.version = 11 : i64} {
  func.func @_ln_kernel(%arg0: i32, %arg1: memref<16x64xbf16, #tpu.memory_space<vmem>>, %arg2: memref<1x64xf32, #tpu.memory_space<vmem>>, %arg3: memref<1x64xf32, #tpu.memory_space<vmem>>, %arg4: memref<16x64xf32, #tpu.memory_space<vmem>>) attributes {dimension_semantics = [#tpu.dimension_semantics<parallel>], iteration_bounds = array<i64: 1>, scalar_prefetch = 0 : i64, scratch_operands = 0 : i64, tpu.core_type = #tpu.core_type<tc>, window_params = [{transform_indices = @transform_0, window_bounds = array<i64: 16, 64>}, {pipeline_mode = #tpu.pipeline_mode<synchronous>, transform_indices = @transform_1, window_bounds = array<i64: 1, 64>}, {pipeline_mode = #tpu.pipeline_mode<synchronous>, transform_indices = @transform_2, window_bounds = array<i64: 1, 64>}, {transform_indices = @transform_3, window_bounds = array<i64: 16, 64>}]} {
    %c0 = arith.constant 0 : index
    %c0_0 = arith.constant 0 : index
    %0 = vector.load %arg1[%c0, %c0_0] : memref<16x64xbf16, #tpu.memory_space<vmem>>, vector<16x64xbf16>
    %1 = arith.extf %0 : vector<16x64xbf16> to vector<16x64xf32>
    %cst = arith.constant dense<0.000000e+00> : vector<16xf32>
    %2 = vector.multi_reduction <add>, %1, %cst [1] : vector<16x64xf32> to vector<16xf32>
    %3 = vector.shape_cast %2 : vector<16xf32> to vector<16x1xf32>
    %cst_1 = arith.constant 6.400000e+01 : f32
    %4 = vector.broadcast %cst_1 : f32 to vector<16x1xf32>
    %5 = arith.divf %3, %4 : vector<16x1xf32>
    %6 = vector.broadcast %5 : vector<16x1xf32> to vector<16x64xf32>
    %7 = arith.subf %1, %6 : vector<16x64xf32>
    %8 = arith.mulf %7, %7 : vector<16x64xf32>
    %cst_2 = arith.constant dense<0.000000e+00> : vector<16xf32>
    %9 = vector.multi_reduction <add>, %8, %cst_2 [1] : vector<16x64xf32> to vector<16xf32>
    %10 = vector.shape_cast %9 : vector<16xf32> to vector<16x1xf32>
    %cst_3 = arith.constant 6.400000e+01 : f32
    %11 = vector.broadcast %cst_3 : f32 to vector<16x1xf32>
    %12 = arith.divf %10, %11 : vector<16x1xf32>
    %cst_4 = arith.constant 9.99999974E-6 : f32
    %13 = vector.broadcast %cst_4 : f32 to vector<16x1xf32>
    %14 = arith.addf %12, %13 : vector<16x1xf32>
    %15 = math.rsqrt %14 : vector<16x1xf32>
    %16 = vector.broadcast %15 : vector<16x1xf32> to vector<16x64xf32>
    %17 = arith.mulf %7, %16 : vector<16x64xf32>
    %c0_5 = arith.constant 0 : index
    %c0_6 = arith.constant 0 : index
    %18 = vector.load %arg2[%c0_5, %c0_6] : memref<1x64xf32, #tpu.memory_space<vmem>>, vector<1x64xf32>
    %19 = vector.broadcast %18 : vector<1x64xf32> to vector<16x64xf32>
    %20 = arith.mulf %17, %19 : vector<16x64xf32>
    %c0_7 = arith.constant 0 : index
    %c0_8 = arith.constant 0 : index
    %21 = vector.load %arg3[%c0_7, %c0_8] : memref<1x64xf32, #tpu.memory_space<vmem>>, vector<1x64xf32>
    %22 = vector.broadcast %21 : vector<1x64xf32> to vector<16x64xf32>
    %23 = arith.addf %20, %22 : vector<16x64xf32>
    %c0_9 = arith.constant 0 : index
    %c0_10 = arith.constant 0 : index
    %24 = vector.load %arg4[%c0_9, %c0_10] : memref<16x64xf32, #tpu.memory_space<vmem>>, vector<16x64xf32>
    tpu.vector_store %arg4[%c0_9, %c0_10], %23 {strides = array<i32>} : memref<16x64xf32, #tpu.memory_space<vmem>>, vector<16x64xf32>,
    return
  }
  func.func @transform_0(%arg0: i32) -> (i32, i32) {
    %c0_i32 = arith.constant 0 : i32
    %c0_i32_0 = arith.constant 0 : i32
    return %arg0, %c0_i32 : i32, i32
  }
  func.func @transform_1(%arg0: i32) -> (i32, i32) {
    %c0_i32 = arith.constant 0 : i32
    %c0_i32_0 = arith.constant 0 : i32
    %c0_i32_1 = arith.constant 0 : i32
    return %c0_i32, %c0_i32_0 : i32, i32
  }
  func.func @transform_2(%arg0: i32) -> (i32, i32) {
    %c0_i32 = arith.constant 0 : i32
    %c0_i32_0 = arith.constant 0 : i32
    %c0_i32_1 = arith.constant 0 : i32
    return %c0_i32, %c0_i32_0 : i32, i32
  }
  func.func @transform_3(%arg0: i32) -> (i32, i32) {
    %c0_i32 = arith.constant 0 : i32
    %c0_i32_0 = arith.constant 0 : i32
    return %arg0, %c0_i32 : i32, i32
  }
}

module attributes {stable_mosaic.version = 11 : i64} {
  func.func @_mm_kernel(%arg0: i32, %arg1: i32, %arg2: i32, %arg3: memref<16x64xbf16, #tpu.memory_space<vmem>>, %arg4: memref<64x128xbf16, #tpu.memory_space<vmem>>, %arg5: memref<1x128xf32, #tpu.memory_space<vmem>>, %arg6: memref<16x128xf32, #tpu.memory_space<vmem>>, %arg7: memref<16x128xf32, #tpu.memory_space<vmem>>) attributes {dimension_semantics = [#tpu.dimension_semantics<parallel>, #tpu.dimension_semantics<parallel>, #tpu.dimension_semantics<arbitrary>], iteration_bounds = array<i64: 1, 1, 1>, scalar_prefetch = 0 : i64, scratch_operands = 1 : i64, tpu.core_type = #tpu.core_type<tc>, window_params = [{transform_indices = @transform_0, window_bounds = array<i64: 16, 64>}, {transform_indices = @transform_1, window_bounds = array<i64: 64, 128>}, {transform_indices = @transform_2, window_bounds = array<i64: 1, 128>}, {transform_indices = @transform_3, window_bounds = array<i64: 16, 128>}]} {
    %c0_i32 = arith.constant 0 : i32
    %0 = arith.cmpi eq, %arg2, %c0_i32 : i32
    %1 = arith.extui %0 : i1 to i32
    %c0_i32_0 = arith.constant 0 : i32
    %2 = arith.cmpi ne, %1, %c0_i32_0 : i32
    scf.if %2 {
      %cst_10 = arith.constant 0.000000e+00 : f32
      %12 = vector.broadcast %cst_10 : f32 to vector<16x128xf32>
      %c0_11 = arith.constant 0 : index
      %c0_12 = arith.constant 0 : index
      %13 = vector.load %arg7[%c0_11, %c0_12] : memref<16x128xf32, #tpu.memory_space<vmem>>, vector<16x128xf32>
      tpu.vector_store %arg7[%c0_11, %c0_12], %12 {strides = array<i32>} : memref<16x128xf32, #tpu.memory_space<vmem>>, vector<16x128xf32>,
    } else {
    }
    %c0 = arith.constant 0 : index
    %c0_1 = arith.constant 0 : index
    %3 = vector.load %arg7[%c0, %c0_1] : memref<16x128xf32, #tpu.memory_space<vmem>>, vector<16x128xf32>
    %c0_2 = arith.constant 0 : index
    %c0_3 = arith.constant 0 : index
    %4 = vector.load %arg3[%c0_2, %c0_3] : memref<16x64xbf16, #tpu.memory_space<vmem>>, vector<16x64xbf16>
    %c0_4 = arith.constant 0 : index
    %c0_5 = arith.constant 0 : index
    %5 = vector.load %arg4[%c0_4, %c0_5] : memref<64x128xbf16, #tpu.memory_space<vmem>>, vector<64x128xbf16>
    %cst = arith.constant dense<0.000000e+00> : vector<16x128xf32>
    %6 = tpu.matmul %4, %5, %cst {dimension_numbers = #tpu.dot_dimension_numbers<[1], [0], [0], [1], [0, 0, 1, 1], [], []>} : vector<16x64xbf16>, vector<64x128xbf16>, vector<16x128xf32> -> vector<16x128xf32>
    %7 = arith.addf %3, %6 : vector<16x128xf32>
    %c0_6 = arith.constant 0 : index
    %c0_7 = arith.constant 0 : index
    %8 = vector.load %arg7[%c0_6, %c0_7] : memref<16x128xf32, #tpu.memory_space<vmem>>, vector<16x128xf32>
    tpu.vector_store %arg7[%c0_6, %c0_7], %7 {strides = array<i32>} : memref<16x128xf32, #tpu.memory_space<vmem>>, vector<16x128xf32>,
    %c0_i32_8 = arith.constant 0 : i32
    %9 = arith.cmpi eq, %arg2, %c0_i32_8 : i32
    %10 = arith.extui %9 : i1 to i32
    %c0_i32_9 = arith.constant 0 : i32
    %11 = arith.cmpi ne, %10, %c0_i32_9 : i32
    scf.if %11 {
      %c0_10 = arith.constant 0 : index
      %c0_11 = arith.constant 0 : index
      %12 = vector.load %arg7[%c0_10, %c0_11] : memref<16x128xf32, #tpu.memory_space<vmem>>, vector<16x128xf32>
      %c0_12 = arith.constant 0 : index
      %c0_13 = arith.constant 0 : index
      %13 = vector.load %arg5[%c0_12, %c0_13] : memref<1x128xf32, #tpu.memory_space<vmem>>, vector<1x128xf32>
      %14 = vector.broadcast %13 : vector<1x128xf32> to vector<16x128xf32>
      %15 = arith.addf %12, %14 : vector<16x128xf32>
      %cst_14 = arith.constant dense<0.000000e+00> : vector<16xf32>
      %16 = vector.multi_reduction <add>, %15, %cst_14 [1] : vector<16x128xf32> to vector<16xf32>
      %17 = vector.shape_cast %16 : vector<16xf32> to vector<16x1xf32>
      %cst_15 = arith.constant 1.280000e+02 : f32
      %18 = vector.broadcast %cst_15 : f32 to vector<16x1xf32>
      %19 = arith.divf %17, %18 : vector<16x1xf32>
      %20 = vector.broadcast %19 : vector<16x1xf32> to vector<16x128xf32>
      %21 = arith.subf %15, %20 : vector<16x128xf32>
      %c0_16 = arith.constant 0 : index
      %c0_17 = arith.constant 0 : index
      %22 = vector.load %arg6[%c0_16, %c0_17] : memref<16x128xf32, #tpu.memory_space<vmem>>, vector<16x128xf32>
      tpu.vector_store %arg6[%c0_16, %c0_17], %21 {strides = array<i32>} : memref<16x128xf32, #tpu.memory_space<vmem>>, vector<16x128xf32>,
    } else {
    }
    return
  }
  func.func @transform_0(%arg0: i32, %arg1: i32, %arg2: i32) -> (i32, i32) {
    %c0_i32 = arith.constant 0 : i32
    %0 = arith.addi %arg2, %c0_i32 : i32
    %c0_i32_0 = arith.constant 0 : i32
    return %arg0, %0 : i32, i32
  }
  func.func @transform_1(%arg0: i32, %arg1: i32, %arg2: i32) -> (i32, i32) {
    %c0_i32 = arith.constant 0 : i32
    return %arg2, %arg1 : i32, i32
  }
  func.func @transform_2(%arg0: i32, %arg1: i32, %arg2: i32) -> (i32, i32) {
    %c0_i32 = arith.constant 0 : i32
    %c0_i32_0 = arith.constant 0 : i32
    return %c0_i32, %arg1 : i32, i32
  }
  func.func @transform_3(%arg0: i32, %arg1: i32, %arg2: i32) -> (i32, i32) {
    %c0_i32 = arith.constant 0 : i32
    return %arg0, %arg1 : i32, i32
  }
}

</mosaic_0001>

<llo_original>
// kernel: _lambda_.23
$region0: #{_lambda_.23}
  #allocation0 [shape = 'u32[]', space=smem, size = 0x4, offset = 0x4, fixed_abs, tag = 'smem constant byte address 0x4 - core index']
  #allocation1 [shape = 'u32[144,128]{1,0:T(1,128)}', space=vmem, size = 0x12000, scoped, tag = 'internal scratch']
  #allocation2 [shape = 'f32[16,192]{1,0:T(8,128)}', space=vmem, size = 0x4000, scoped, tag = 'scratch operand']
  %s0 = inlined_call_operand.vmem [shape: bf16[16,32], index: 0, kind: input, shape index: {}]
  %s1 = inlined_call_operand.vmem [shape: bf16[32,192], index: 1, kind: input, shape index: {}]
  %s2 = inlined_call_operand.vmem [shape: f32[1,192], index: 2, kind: input, shape index: {}]
  %s3 = inlined_call_operand.vmem [shape: bf16[16,192], index: 3, kind: output, shape index: {}]
  %s4 = sld [smem:[#allocation0]]
  $region30: #{_lambda_.23} parent=0
    _
  %s6 = ssub.s32 1, %s4
  %s7 = scalar_select 0, %s6, %s4
  // Predicated region
  $region2: #{_lambda_.23} parent=0 // pred_check
    _
  $region3: #{_lambda_.23} parent=0 // pred_check_branch
    %9 = sbr.rel (0) target = $region5
  $region4: #{_lambda_.23} parent=0 // pred_region
    _
  $region5: #{_lambda_.23} parent=0 // pred_fallthru
    _
  // Predicated region
  $region6: #{_lambda_.23} parent=0 // pred_check
    _
  $region7: #{_lambda_.23} parent=0 // pred_check_branch
    %11 = sbr.rel (0) target = $region9
  $region8: #{_lambda_.23} parent=0 // pred_region
    _
  $region9: #{_lambda_.23} parent=0 // pred_fallthru
    _
  // Predicated region
  $region10: #{_lambda_.23} parent=0 // pred_check
    _
  $region11: #{_lambda_.23} parent=0 // pred_check_branch
    %13 = sbr.rel (0) target = $region13
  $region12: #{_lambda_.23} parent=0 // pred_region
    _
  $region13: #{_lambda_.23} parent=0 // pred_fallthru
    _
  %p15 = scmp.eq.s32.totalorder 0, 0
  // Predicated region
  $region14: #{_lambda_.23} parent=0 // pred_check
    %p16 = pneg %p15
  $region15: #{_lambda_.23} parent=0 // pred_check_branch
    %18 = sbr.rel (%p16) target = $region17
  $region16: #{_lambda_.23} parent=0 // pred_region
    %19 = vst [vmem:[#allocation2] sm:$0xff] 0.0
    %vm20 = vcmask 523264
    %21 = vst.msk [vmem:[#allocation2 + $0x8] sm:$0xff] %vm20, 0.0
    %22 = vst [vmem:[#allocation2 + $0x10] sm:$0xff] 0.0
    %23 = vst.msk [vmem:[#allocation2 + $0x18] sm:$0xff] %vm20, 0.0
  $region17: #{_lambda_.23} parent=0 // pred_fallthru
    _
  %v24 = vld [vmem:[#allocation2] sm:$0xff]
  %v25 = vld [vmem:[#allocation2 + $0x8] sm:$0xff]
  %v26 = vld [vmem:[#allocation2 + $0x10] sm:$0xff]
  %v27 = vld [vmem:[#allocation2 + $0x18] sm:$0xff]
  %v28 = vld [vmem:[%s0] sm:$0xf]
  %v29 = vld [vmem:[%s0 + $0x4] sm:$0xf]
  %v30 = vld [vmem:[%s1] sm:$0xff]
  %v31 = vld [vmem:[%s1 + $0x8] sm:$0xff]
  %v32 = vld [vmem:[%s1 + $0x10] sm:$0xff]
  %v33 = vld [vmem:[%s1 + $0x18] sm:$0xff]
  %v36 = vunpack.c.l.b16 %v28
  %v37 = vunpack.c.l.b16 %v29
  %v38 = vpack.c.b16 %v37, %v36
  %v43 = vunpack.c.l.b16 %v30
  %v44 = vunpack.c.h.b16 %v30
  %v45 = vunpack.c.l.b16 %v31
  %v46 = vunpack.c.h.b16 %v31
  %v47 = vunpack.c.l.b16 %v32
  %v48 = vunpack.c.h.b16 %v32
  %v49 = vunpack.c.l.b16 %v33
  %v50 = vunpack.c.h.b16 %v33
  %v51 = vpack.c.b16 %v45, %v43
  %v52 = vpack.c.b16 %v46, %v44
  %v53 = vpack.c.b16 %v49, %v47
  %v54 = vpack.c.b16 %v50, %v48
  %vm59 = vcmask 261120
  %v61 = vsel %vm59, %v38, 0
  %63 = vmatprep.subr.bf16.mxu0 %v52
  %64 = vmatpush1.bf16.msra.mxu0 %v51
  %65 = vmatprep.subr.bf16.mxu0 %v54
  %66 = vmatpush1.bf16.msra.mxu0 %v53
  %67 = vmatprep.subr.bf16.mxu0 0
  %68 = vmatpush1.bf16.msra.mxu0 0
  %69 = vmatprep.subr.bf16.mxu0 0
  %70 = vmatpush1.bf16.msra.mxu0 0
  %71 = vmatprep.subr.bf16.mxu0 0
  %72 = vmatpush1.bf16.msra.mxu0 0
  %73 = vmatprep.subr.bf16.mxu0 0
  %74 = vmatpush1.bf16.msra.mxu0 0
  %75 = vmatprep.subr.bf16.mxu0 0
  %76 = vmatpush1.bf16.msra.mxu0 0
  %77 = vmatprep.subr.bf16.mxu0 0
  %78 = vmatpush1.bf16.msra.mxu0 0
  %79 = vmatprep.subr.bf16.mxu0 0
  %80 = vmatpush1.bf16.msra.mxu0 0
  %81 = vmatprep.subr.bf16.mxu0 0
  %82 = vmatpush1.bf16.msra.mxu0 0
  %83 = vmatprep.subr.bf16.mxu0 0
  %84 = vmatpush1.bf16.msra.mxu0 0
  %85 = vmatprep.subr.bf16.mxu0 0
  %86 = vmatpush1.bf16.msra.mxu0 0
  %87 = vmatprep.subr.bf16.mxu0 0
  %88 = vmatpush1.bf16.msra.mxu0 0
  %89 = vmatprep.subr.bf16.mxu0 0
  %90 = vmatpush1.bf16.msra.mxu0 0
  %91 = vmatprep.subr.bf16.mxu0 0
  %92 = vmatpush1.bf16.msra.mxu0 0
  %93 = vmatprep.subr.bf16.mxu0 0
  %94 = vmatpush1.bf16.msra.mxu0 0
  %95 = vmatprep.mubr.bf16.mxu0 0
  %96 = vmatmul.mubr.bf16.gmra.mrb[0].mxu0 %v61
  %v97 = vpop.f32.mrb[0].mxu0
  %v98 = vadd.f32 0.0, %v97
  %v99 = vpop.f32.mrb[0].mxu0
  %v100 = vadd.f32 0.0, %v99
  %v101 = vpop.f32.mrb[0].mxu0
  %v102 = vadd.f32 0.0, %v101
  %v103 = vpop.f32.mrb[0].mxu0
  %v104 = vadd.f32 0.0, %v103
  %105 = vdwg.mxu0
  %v106 = vadd.f32 %v24, %v98
  %v107 = vadd.f32 %v25, %v100
  %v108 = vadd.f32 %v26, %v102
  %v109 = vadd.f32 %v27, %v104
  %110 = vst [vmem:[#allocation2] sm:$0xff] %v106
  %vm111 = vcmask 523264
  %112 = vst.msk [vmem:[#allocation2 + $0x8] sm:$0xff] %vm111, %v107
  %113 = vst [vmem:[#allocation2 + $0x10] sm:$0xff] %v108
  %114 = vst.msk [vmem:[#allocation2 + $0x18] sm:$0xff] %vm111, %v109
  // Predicated region
  $region18: #{_lambda_.23} parent=0 // pred_check
    %p115 = pneg %p15
  $region19: #{_lambda_.23} parent=0 // pred_check_branch
    %117 = sbr.rel (%p115) target = $region21
  $region20: #{_lambda_.23} parent=0 // pred_region
    %v118 = vld [vmem:[#allocation2] sm:$0xff]
    %v119 = vld [vmem:[#allocation2 + $0x8] sm:$0xff]
    %v120 = vld [vmem:[#allocation2 + $0x10] sm:$0xff]
    %v121 = vld [vmem:[#allocation2 + $0x18] sm:$0xff]
    %v122 = vld [vmem:[%s2] sm:$0x3]
    %v124 = vlaneseq
    %v125 = vshrl.u32 %v124, 7
    %v126 = vsub.s32 0, %v125
    %v127 = vrot.slane %v122, %v126
    %v128 = vlaneseq
    %v129 = vshrl.u32 %v128, 7
    %v130 = vsub.s32 1, %v129
    %v131 = vrot.slane %v122, %v130
    %v134 = vadd.f32 %v118, %v127
    %v135 = vadd.f32 %v119, %v131
    %v136 = vadd.f32 %v120, %v127
    %v137 = vadd.f32 %v121, %v131
    %v138 = vpack.c.bf16 %v136, %v134
    %v139 = vpack.c.bf16 %v137, %v135
    %v142 = vunpack.c.l.b16 %v138
    %v143 = vunpack.c.l.b16 %v139
    %v144 = vunpack.c.h.b16 %v138
    %v145 = vunpack.c.h.b16 %v139
    %v146 = vpack.c.b16 %v143, %v142
    %v147 = vpack.c.b16 %v145, %v144
    %vm150 = vcmask 1043456
    %vm151 = vcmask 523268
    %vm152 = vmor %vm151, %vm150
    %153 = vst.msk [vmem:[%s3] sm:$0xff] %vm152, %v146
    %154 = vst.msk [vmem:[%s3 + $0x8] sm:$0xff] %vm152, %v147
  $region21: #{_lambda_.23} parent=0 // pred_fallthru
    _
  // Predicated region
  $region22: #{_lambda_.23} parent=0 // pred_check
    _
  $region23: #{_lambda_.23} parent=0 // pred_check_branch
    %156 = sbr.rel (0) target = $region25
  $region24: #{_lambda_.23} parent=0 // pred_region
    _
  $region25: #{_lambda_.23} parent=0 // pred_fallthru
    _
  // Predicated region
  $region26: #{_lambda_.23} parent=0 // pred_check
    _
  $region27: #{_lambda_.23} parent=0 // pred_check_branch
    %158 = sbr.rel (0) target = $region29
  $region28: #{_lambda_.23} parent=0 // pred_region
    _
  $region29: #{_lambda_.23} parent=0 // pred_fallthru
    _

// kernel: _lambda_.22
$region0: #{_lambda_.22}
  #allocation0 [shape = 'u32[]', space=smem, size = 0x4, offset = 0x4, fixed_abs, tag = 'smem constant byte address 0x4 - core index']
  #allocation1 [shape = 'u32[144,128]{1,0:T(1,128)}', space=vmem, size = 0x12000, scoped, tag = 'internal scratch']
  #allocation2 [shape = 'f32[16,64]{1,0:T(8,128)}', space=vmem, size = 0x2000, scoped, tag = 'scratch operand']
  %s0 = inlined_call_operand.vmem [shape: bf16[16,64], index: 0, kind: input, shape index: {}]
  %s1 = inlined_call_operand.vmem [shape: bf16[64,64], index: 1, kind: input, shape index: {}]
  %s2 = inlined_call_operand.vmem [shape: f32[1,64], index: 2, kind: input, shape index: {}]
  %s3 = inlined_call_operand.vmem [shape: bf16[16,64], index: 3, kind: output, shape index: {}]
  %s4 = sld [smem:[#allocation0]]
  $region30: #{_lambda_.22} parent=0
    _
  %s6 = ssub.s32 1, %s4
  %s7 = scalar_select 0, %s6, %s4
  // Predicated region
  $region2: #{_lambda_.22} parent=0 // pred_check
    _
  $region3: #{_lambda_.22} parent=0 // pred_check_branch
    %9 = sbr.rel (0) target = $region5
  $region4: #{_lambda_.22} parent=0 // pred_region
    _
  $region5: #{_lambda_.22} parent=0 // pred_fallthru
    _
  // Predicated region
  $region6: #{_lambda_.22} parent=0 // pred_check
    _
  $region7: #{_lambda_.22} parent=0 // pred_check_branch
    %11 = sbr.rel (0) target = $region9
  $region8: #{_lambda_.22} parent=0 // pred_region
    _
  $region9: #{_lambda_.22} parent=0 // pred_fallthru
    _
  // Predicated region
  $region10: #{_lambda_.22} parent=0 // pred_check
    _
  $region11: #{_lambda_.22} parent=0 // pred_check_branch
    %13 = sbr.rel (0) target = $region13
  $region12: #{_lambda_.22} parent=0 // pred_region
    _
  $region13: #{_lambda_.22} parent=0 // pred_fallthru
    _
  %p15 = scmp.eq.s32.totalorder 0, 0
  // Predicated region
  $region14: #{_lambda_.22} parent=0 // pred_check
    %p16 = pneg %p15
  $region15: #{_lambda_.22} parent=0 // pred_check_branch
    %18 = sbr.rel (%p16) target = $region17
  $region16: #{_lambda_.22} parent=0 // pred_region
    %vm19 = vcmask 523264
    %20 = vst.msk [vmem:[#allocation2] sm:$0xff] %vm19, 0.0
    %21 = vst.msk [vmem:[#allocation2 + $0x8] sm:$0xff] %vm19, 0.0
  $region17: #{_lambda_.22} parent=0 // pred_fallthru
    _
  %v22 = vld [vmem:[#allocation2] sm:$0xff]
  %v23 = vld [vmem:[#allocation2 + $0x8] sm:$0xff]
  %v24 = vld [vmem:[%s0] sm:$0xf]
  %v25 = vld [vmem:[%s0 + $0x4] sm:$0xf]
  %v26 = vld [vmem:[%s1] sm:$0xf]
  %v27 = vld [vmem:[%s1 + $0x4] sm:$0xf]
  %v28 = vld [vmem:[%s1 + $0x8] sm:$0xf]
  %v29 = vld [vmem:[%s1 + $0xc] sm:$0xf]
  %v30 = vld [vmem:[%s1 + $0x10] sm:$0xf]
  %v31 = vld [vmem:[%s1 + $0x14] sm:$0xf]
  %v32 = vld [vmem:[%s1 + $0x18] sm:$0xf]
  %v33 = vld [vmem:[%s1 + $0x1c] sm:$0xf]
  %v36 = vunpack.c.l.b16 %v24
  %v37 = vunpack.c.l.b16 %v25
  %v38 = vpack.c.b16 %v37, %v36
  %v47 = vunpack.c.l.b16 %v26
  %v48 = vunpack.c.l.b16 %v27
  %v49 = vunpack.c.l.b16 %v28
  %v50 = vunpack.c.l.b16 %v29
  %v51 = vunpack.c.l.b16 %v30
  %v52 = vunpack.c.l.b16 %v31
  %v53 = vunpack.c.l.b16 %v32
  %v54 = vunpack.c.l.b16 %v33
  %v55 = vpack.c.b16 %v48, %v47
  %v56 = vpack.c.b16 %v50, %v49
  %v57 = vpack.c.b16 %v52, %v51
  %v58 = vpack.c.b16 %v54, %v53
  %vm63 = vcmask 523264
  %v65 = vsel %vm63, %v38, 0
  %67 = vmatprep.subr.bf16.mxu0 0
  %68 = vmatpush1.bf16.msra.mxu0 %v55
  %69 = vmatprep.subr.bf16.mxu0 0
  %70 = vmatpush1.bf16.msra.mxu0 %v56
  %71 = vmatprep.subr.bf16.mxu0 0
  %72 = vmatpush1.bf16.msra.mxu0 %v57
  %73 = vmatprep.subr.bf16.mxu0 0
  %74 = vmatpush1.bf16.msra.mxu0 %v58
  %75 = vmatprep.subr.bf16.mxu0 0
  %76 = vmatpush1.bf16.msra.mxu0 0
  %77 = vmatprep.subr.bf16.mxu0 0
  %78 = vmatpush1.bf16.msra.mxu0 0
  %79 = vmatprep.subr.bf16.mxu0 0
  %80 = vmatpush1.bf16.msra.mxu0 0
  %81 = vmatprep.subr.bf16.mxu0 0
  %82 = vmatpush1.bf16.msra.mxu0 0
  %83 = vmatprep.subr.bf16.mxu0 0
  %84 = vmatpush1.bf16.msra.mxu0 0
  %85 = vmatprep.subr.bf16.mxu0 0
  %86 = vmatpush1.bf16.msra.mxu0 0
  %87 = vmatprep.subr.bf16.mxu0 0
  %88 = vmatpush1.bf16.msra.mxu0 0
  %89 = vmatprep.subr.bf16.mxu0 0
  %90 = vmatpush1.bf16.msra.mxu0 0
  %91 = vmatprep.subr.bf16.mxu0 0
  %92 = vmatpush1.bf16.msra.mxu0 0
  %93 = vmatprep.subr.bf16.mxu0 0
  %94 = vmatpush1.bf16.msra.mxu0 0
  %95 = vmatprep.subr.bf16.mxu0 0
  %96 = vmatpush1.bf16.msra.mxu0 0
  %97 = vmatprep.subr.bf16.mxu0 0
  %98 = vmatpush1.bf16.msra.mxu0 0
  %99 = vmatprep.mubr.bf16.mxu0 0
  %100 = vmatmul.mubr.bf16.gmra.mrb[0].mxu0 %v65
  %v101 = vpop.f32.mrb[0].mxu0
  %v102 = vadd.f32 0.0, %v101
  %v103 = vpop.f32.mrb[0].mxu0
  %v104 = vpop.f32.mrb[0].mxu0
  %v105 = vadd.f32 0.0, %v104
  %v106 = vpop.f32.mrb[0].mxu0
  %107 = vdwg.mxu0
  %v108 = vadd.f32 %v22, %v102
  %v109 = vadd.f32 %v23, %v105
  %110 = vst.msk [vmem:[#allocation2] sm:$0xff] %vm63, %v108
  %111 = vst.msk [vmem:[#allocation2 + $0x8] sm:$0xff] %vm63, %v109
  // Predicated region
  $region18: #{_lambda_.22} parent=0 // pred_check
    %p112 = pneg %p15
  $region19: #{_lambda_.22} parent=0 // pred_check_branch
    %114 = sbr.rel (%p112) target = $region21
  $region20: #{_lambda_.22} parent=0 // pred_region
    %v115 = vld [vmem:[#allocation2] sm:$0xff]
    %v116 = vld [vmem:[#allocation2 + $0x8] sm:$0xff]
    %v117 = vld [vmem:[%s2] sm:$0x1]
    %v119 = vlaneseq
    %v120 = vshrl.u32 %v119, 7
    %v121 = vsub.s32 0, %v120
    %v122 = vrot.slane %v117, %v121
    %v124 = vadd.f32 %v115, %v122
    %v125 = vadd.f32 %v116, %v122
    %v126 = vpack.c.bf16 %v125, %v124
    %v128 = vunpack.c.l.b16 %v126
    %v129 = vunpack.c.h.b16 %v126
    %v130 = vpack.c.b16 %v128, %v128
    %v131 = vpack.c.b16 %v129, %v129
    %vm134 = vcmask 519168
    %135 = vst.msk [vmem:[%s3] sm:$0xf] %vm134, %v130
    %136 = vst.msk [vmem:[%s3 + $0x4] sm:$0xf] %vm134, %v131
  $region21: #{_lambda_.22} parent=0 // pred_fallthru
    _
  // Predicated region
  $region22: #{_lambda_.22} parent=0 // pred_check
    _
  $region23: #{_lambda_.22} parent=0 // pred_check_branch
    %138 = sbr.rel (0) target = $region25
  $region24: #{_lambda_.22} parent=0 // pred_region
    _
  $region25: #{_lambda_.22} parent=0 // pred_fallthru
    _
  // Predicated region
  $region26: #{_lambda_.22} parent=0 // pred_check
    _
  $region27: #{_lambda_.22} parent=0 // pred_check_branch
    %140 = sbr.rel (0) target = $region29
  $region28: #{_lambda_.22} parent=0 // pred_region
    _
  $region29: #{_lambda_.22} parent=0 // pred_fallthru
    _

// kernel: _lambda_.21
$region0: #{_lambda_.21}
  #allocation0 [shape = 'u32[]', space=smem, size = 0x4, offset = 0x4, fixed_abs, tag = 'smem constant byte address 0x4 - core index']
  #allocation1 [shape = 'u32[144,128]{1,0:T(1,128)}', space=vmem, size = 0x12000, scoped, tag = 'internal scratch']
  %s0 = inlined_call_operand.vmem [shape: f32[16,64], index: 0, kind: input, shape index: {}]
  %s1 = inlined_call_operand.vmem [shape: f32[1,64], index: 1, kind: input, shape index: {}]
  %s2 = inlined_call_operand.vmem [shape: f32[1,64], index: 2, kind: input, shape index: {}]
  %s3 = inlined_call_operand.vmem [shape: bf16[16,64], index: 3, kind: output, shape index: {}]
  %s4 = sld [smem:[#allocation0]]
  $region22: #{_lambda_.21} parent=0
    _
  %s6 = ssub.s32 1, %s4
  %s7 = scalar_select 0, %s6, %s4
  // Predicated region
  $region2: #{_lambda_.21} parent=0 // pred_check
    _
  $region3: #{_lambda_.21} parent=0 // pred_check_branch
    %9 = sbr.rel (0) target = $region5
  $region4: #{_lambda_.21} parent=0 // pred_region
    _
  $region5: #{_lambda_.21} parent=0 // pred_fallthru
    _
  // Predicated region
  $region6: #{_lambda_.21} parent=0 // pred_check
    _
  $region7: #{_lambda_.21} parent=0 // pred_check_branch
    %11 = sbr.rel (0) target = $region9
  $region8: #{_lambda_.21} parent=0 // pred_region
    _
  $region9: #{_lambda_.21} parent=0 // pred_fallthru
    _
  // Predicated region
  $region10: #{_lambda_.21} parent=0 // pred_check
    _
  $region11: #{_lambda_.21} parent=0 // pred_check_branch
    %13 = sbr.rel (0) target = $region13
  $region12: #{_lambda_.21} parent=0 // pred_region
    _
  $region13: #{_lambda_.21} parent=0 // pred_fallthru
    _
  %v14 = vld [vmem:[%s0] sm:$0xff]
  %v15 = vld [vmem:[%s0 + $0x8] sm:$0xff]
  %vm16 = vcmask 523264
  %v17 = vsel %vm16, %v14, 0.0
  %18 = vadd.xlane.f32.xlu0 %v17
  %v19 = vpop.xlane.xlu0 %18
  %v20 = vsel %vm16, %v15, 0.0
  %21 = vadd.xlane.f32.xlu0 %v20
  %v22 = vpop.xlane.xlu0 %21
  %v23 = vrcp.pop 64.0
  %v24 = vmul.f32 %v19, %v23
  %v25 = vmul.f32 %v22, %v23
  %v26 = vsub.f32 %v14, %v24
  %v27 = vsub.f32 %v15, %v25
  %v28 = vmul.f32 %v26, %v26
  %v29 = vmul.f32 %v27, %v27
  %v30 = vsel %vm16, %v28, 0.0
  %31 = vadd.xlane.f32.xlu0 %v30
  %v32 = vpop.xlane.xlu0 %31
  %v33 = vsel %vm16, %v29, 0.0
  %34 = vadd.xlane.f32.xlu0 %v33
  %v35 = vpop.xlane.xlu0 %34
  %v36 = vmul.f32 %v32, %v23
  %v37 = vmul.f32 %v35, %v23
  %v38 = vadd.f32 %v36, 1e-05
  %v39 = vadd.f32 %v37, 1e-05
  %v40 = vrsqrt.pop %v38
  %v41 = vrsqrt.pop %v39
  %v42 = vmul.f32 %v26, %v40
  %v43 = vmul.f32 %v27, %v41
  %v44 = vld [vmem:[%s1] sm:$0x1]
  %v46 = vlaneseq
  %v47 = vshrl.u32 %v46, 7
  %v48 = vsub.s32 0, %v47
  %v49 = vrot.slane %v44, %v48
  %v51 = vmul.f32 %v42, %v49
  %v52 = vmul.f32 %v43, %v49
  %v53 = vld [vmem:[%s2] sm:$0x1]
  %v55 = vlaneseq
  %v56 = vshrl.u32 %v55, 7
  %v57 = vsub.s32 0, %v56
  %v58 = vrot.slane %v53, %v57
  %v60 = vadd.f32 %v51, %v58
  %v61 = vadd.f32 %v52, %v58
  %v62 = vsel %vm16, %v60, 0.0
  %63 = vadd.xlane.f32.xlu0 %v62
  %v64 = vpop.xlane.xlu0 %63
  %v65 = vsel %vm16, %v61, 0.0
  %66 = vadd.xlane.f32.xlu0 %v65
  %v67 = vpop.xlane.xlu0 %66
  %v68 = vmul.f32 %v64, %v23
  %v69 = vmul.f32 %v67, %v23
  %v70 = vsub.f32 %v60, %v68
  %v71 = vsub.f32 %v61, %v69
  %v72 = vadd.f32 %v70, 1.0
  %v73 = vadd.f32 %v71, 1.0
  %v74 = vpack.c.bf16 %v73, %v72
  %v76 = vunpack.c.l.b16 %v74
  %v77 = vunpack.c.h.b16 %v74
  %v78 = vpack.c.b16 %v76, %v76
  %v79 = vpack.c.b16 %v77, %v77
  %vm82 = vcmask 519168
  %83 = vst.msk [vmem:[%s3] sm:$0xf] %vm82, %v78
  %84 = vst.msk [vmem:[%s3 + $0x4] sm:$0xf] %vm82, %v79
  // Predicated region
  $region14: #{_lambda_.21} parent=0 // pred_check
    _
  $region15: #{_lambda_.21} parent=0 // pred_check_branch
    %86 = sbr.rel (0) target = $region17
  $region16: #{_lambda_.21} parent=0 // pred_region
    _
  $region17: #{_lambda_.21} parent=0 // pred_fallthru
    _
  // Predicated region
  $region18: #{_lambda_.21} parent=0 // pred_check
    _
  $region19: #{_lambda_.21} parent=0 // pred_check_branch
    %88 = sbr.rel (0) target = $region21
  $region20: #{_lambda_.21} parent=0 // pred_region
    _
  $region21: #{_lambda_.21} parent=0 // pred_fallthru
    _

// kernel: _lambda_.24
$region0: #{_lambda_.24}
  #allocation0 [shape = 'u32[]', space=smem, size = 0x4, offset = 0x4, fixed_abs, tag = 'smem constant byte address 0x4 - core index']
  #allocation1 [shape = 'u32[144,128]{1,0:T(1,128)}', space=vmem, size = 0x12000, scoped, tag = 'internal scratch']
  #allocation2 [shape = 'f32[16,128]{1,0:T(8,128)}', space=vmem, size = 0x2000, scoped, tag = 'scratch operand']
  %s0 = inlined_call_operand.vmem [shape: bf16[16,32], index: 0, kind: input, shape index: {}]
  %s1 = inlined_call_operand.vmem [shape: bf16[32,128], index: 1, kind: input, shape index: {}]
  %s2 = inlined_call_operand.vmem [shape: f32[1,128], index: 2, kind: input, shape index: {}]
  %s3 = inlined_call_operand.vmem [shape: bf16[16,128], index: 3, kind: output, shape index: {}]
  %s4 = sld [smem:[#allocation0]]
  $region30: #{_lambda_.24} parent=0
    _
  %s6 = ssub.s32 1, %s4
  %s7 = scalar_select 0, %s6, %s4
  // Predicated region
  $region2: #{_lambda_.24} parent=0 // pred_check
    _
  $region3: #{_lambda_.24} parent=0 // pred_check_branch
    %9 = sbr.rel (0) target = $region5
  $region4: #{_lambda_.24} parent=0 // pred_region
    _
  $region5: #{_lambda_.24} parent=0 // pred_fallthru
    _
  // Predicated region
  $region6: #{_lambda_.24} parent=0 // pred_check
    _
  $region7: #{_lambda_.24} parent=0 // pred_check_branch
    %11 = sbr.rel (0) target = $region9
  $region8: #{_lambda_.24} parent=0 // pred_region
    _
  $region9: #{_lambda_.24} parent=0 // pred_fallthru
    _
  // Predicated region
  $region10: #{_lambda_.24} parent=0 // pred_check
    _
  $region11: #{_lambda_.24} parent=0 // pred_check_branch
    %13 = sbr.rel (0) target = $region13
  $region12: #{_lambda_.24} parent=0 // pred_region
    _
  $region13: #{_lambda_.24} parent=0 // pred_fallthru
    _
  %p15 = scmp.eq.s32.totalorder 0, 0
  // Predicated region
  $region14: #{_lambda_.24} parent=0 // pred_check
    %p16 = pneg %p15
  $region15: #{_lambda_.24} parent=0 // pred_check_branch
    %18 = sbr.rel (%p16) target = $region17
  $region16: #{_lambda_.24} parent=0 // pred_region
    %19 = vst [vmem:[#allocation2] sm:$0xff] 0.0
    %20 = vst [vmem:[#allocation2 + $0x8] sm:$0xff] 0.0
  $region17: #{_lambda_.24} parent=0 // pred_fallthru
    _
  %v21 = vld [vmem:[#allocation2] sm:$0xff]
  %v22 = vld [vmem:[#allocation2 + $0x8] sm:$0xff]
  %v23 = vld [vmem:[%s0] sm:$0xf]
  %v24 = vld [vmem:[%s0 + $0x4] sm:$0xf]
  %v25 = vld [vmem:[%s1] sm:$0xf]
  %v26 = vld [vmem:[%s1 + $0x4] sm:$0xf]
  %v27 = vld [vmem:[%s1 + $0x8] sm:$0xf]
  %v28 = vld [vmem:[%s1 + $0xc] sm:$0xf]
  %v31 = vunpack.c.l.b16 %v23
  %v32 = vunpack.c.l.b16 %v24
  %v33 = vpack.c.b16 %v32, %v31
  %v38 = vunpack.c.l.b16 %v25
  %v39 = vunpack.c.l.b16 %v26
  %v40 = vunpack.c.l.b16 %v27
  %v41 = vunpack.c.l.b16 %v28
  %v42 = vpack.c.b16 %v39, %v38
  %v43 = vpack.c.b16 %v41, %v40
  %vm46 = vcmask 261120
  %v48 = vsel %vm46, %v33, 0
  %50 = vmatprep.subr.bf16.mxu0 0
  %51 = vmatpush1.bf16.msra.mxu0 %v42
  %52 = vmatprep.subr.bf16.mxu0 0
  %53 = vmatpush1.bf16.msra.mxu0 %v43
  %54 = vmatprep.subr.bf16.mxu0 0
  %55 = vmatpush1.bf16.msra.mxu0 0
  %56 = vmatprep.subr.bf16.mxu0 0
  %57 = vmatpush1.bf16.msra.mxu0 0
  %58 = vmatprep.subr.bf16.mxu0 0
  %59 = vmatpush1.bf16.msra.mxu0 0
  %60 = vmatprep.subr.bf16.mxu0 0
  %61 = vmatpush1.bf16.msra.mxu0 0
  %62 = vmatprep.subr.bf16.mxu0 0
  %63 = vmatpush1.bf16.msra.mxu0 0
  %64 = vmatprep.subr.bf16.mxu0 0
  %65 = vmatpush1.bf16.msra.mxu0 0
  %66 = vmatprep.subr.bf16.mxu0 0
  %67 = vmatpush1.bf16.msra.mxu0 0
  %68 = vmatprep.subr.bf16.mxu0 0
  %69 = vmatpush1.bf16.msra.mxu0 0
  %70 = vmatprep.subr.bf16.mxu0 0
  %71 = vmatpush1.bf16.msra.mxu0 0
  %72 = vmatprep.subr.bf16.mxu0 0
  %73 = vmatpush1.bf16.msra.mxu0 0
  %74 = vmatprep.subr.bf16.mxu0 0
  %75 = vmatpush1.bf16.msra.mxu0 0
  %76 = vmatprep.subr.bf16.mxu0 0
  %77 = vmatpush1.bf16.msra.mxu0 0
  %78 = vmatprep.subr.bf16.mxu0 0
  %79 = vmatpush1.bf16.msra.mxu0 0
  %80 = vmatprep.subr.bf16.mxu0 0
  %81 = vmatpush1.bf16.msra.mxu0 0
  %82 = vmatprep.mubr.bf16.mxu0 0
  %83 = vmatmul.mubr.bf16.gmra.mrb[0].mxu0 %v48
  %v84 = vpop.f32.mrb[0].mxu0
  %v85 = vadd.f32 0.0, %v84
  %v86 = vpop.f32.mrb[0].mxu0
  %v87 = vpop.f32.mrb[0].mxu0
  %v88 = vadd.f32 0.0, %v87
  %v89 = vpop.f32.mrb[0].mxu0
  %90 = vdwg.mxu0
  %v91 = vadd.f32 %v21, %v85
  %v92 = vadd.f32 %v22, %v88
  %93 = vst [vmem:[#allocation2] sm:$0xff] %v91
  %94 = vst [vmem:[#allocation2 + $0x8] sm:$0xff] %v92
  // Predicated region
  $region18: #{_lambda_.24} parent=0 // pred_check
    %p95 = pneg %p15
  $region19: #{_lambda_.24} parent=0 // pred_check_branch
    %97 = sbr.rel (%p95) target = $region21
  $region20: #{_lambda_.24} parent=0 // pred_region
    %v98 = vld [vmem:[#allocation2] sm:$0xff]
    %v99 = vld [vmem:[#allocation2 + $0x8] sm:$0xff]
    %v100 = vld [vmem:[%s2] sm:$0x1]
    %v102 = vlaneseq
    %v103 = vshrl.u32 %v102, 7
    %v104 = vsub.s32 0, %v103
    %v105 = vrot.slane %v100, %v104
    %v107 = vadd.f32 %v98, %v105
    %v108 = vadd.f32 %v99, %v105
    %v109 = vpack.c.bf16 %v108, %v107
    %v111 = vunpack.c.l.b16 %v109
    %v112 = vunpack.c.h.b16 %v109
    %v113 = vpack.c.b16 %v111, %v111
    %v114 = vpack.c.b16 %v112, %v112
    %117 = vst [vmem:[%s3] sm:$0xf] %v113
    %118 = vst [vmem:[%s3 + $0x4] sm:$0xf] %v114
  $region21: #{_lambda_.24} parent=0 // pred_fallthru
    _
  // Predicated region
  $region22: #{_lambda_.24} parent=0 // pred_check
    _
  $region23: #{_lambda_.24} parent=0 // pred_check_branch
    %120 = sbr.rel (0) target = $region25
  $region24: #{_lambda_.24} parent=0 // pred_region
    _
  $region25: #{_lambda_.24} parent=0 // pred_fallthru
    _
  // Predicated region
  $region26: #{_lambda_.24} parent=0 // pred_check
    _
  $region27: #{_lambda_.24} parent=0 // pred_check_branch
    %122 = sbr.rel (0) target = $region29
  $region28: #{_lambda_.24} parent=0 // pred_region
    _
  $region29: #{_lambda_.24} parent=0 // pred_fallthru
    _

// kernel: _lambda_.27
$region0: #{_lambda_.27}
  #allocation0 [shape = 'u32[]', space=smem, size = 0x4, offset = 0x4, fixed_abs, tag = 'smem constant byte address 0x4 - core index']
  #allocation1 [shape = 'u32[144,128]{1,0:T(1,128)}', space=vmem, size = 0x12000, scoped, tag = 'internal scratch']
  %s0 = inlined_call_operand.vmem [shape: f32[16,64], index: 0, kind: input, shape index: {}]
  %s1 = inlined_call_operand.vmem [shape: f32[1,64], index: 1, kind: input, shape index: {}]
  %s2 = inlined_call_operand.vmem [shape: f32[1,64], index: 2, kind: input, shape index: {}]
  %s3 = inlined_call_operand.vmem [shape: bf16[16,64], index: 3, kind: output, shape index: {}]
  %s4 = sld [smem:[#allocation0]]
  $region22: #{_lambda_.27} parent=0
    _
  %s6 = ssub.s32 1, %s4
  %s7 = scalar_select 0, %s6, %s4
  // Predicated region
  $region2: #{_lambda_.27} parent=0 // pred_check
    _
  $region3: #{_lambda_.27} parent=0 // pred_check_branch
    %9 = sbr.rel (0) target = $region5
  $region4: #{_lambda_.27} parent=0 // pred_region
    _
  $region5: #{_lambda_.27} parent=0 // pred_fallthru
    _
  // Predicated region
  $region6: #{_lambda_.27} parent=0 // pred_check
    _
  $region7: #{_lambda_.27} parent=0 // pred_check_branch
    %11 = sbr.rel (0) target = $region9
  $region8: #{_lambda_.27} parent=0 // pred_region
    _
  $region9: #{_lambda_.27} parent=0 // pred_fallthru
    _
  // Predicated region
  $region10: #{_lambda_.27} parent=0 // pred_check
    _
  $region11: #{_lambda_.27} parent=0 // pred_check_branch
    %13 = sbr.rel (0) target = $region13
  $region12: #{_lambda_.27} parent=0 // pred_region
    _
  $region13: #{_lambda_.27} parent=0 // pred_fallthru
    _
  %v14 = vld [vmem:[%s0] sm:$0xff]
  %v15 = vld [vmem:[%s0 + $0x8] sm:$0xff]
  %vm16 = vcmask 523264
  %v17 = vsel %vm16, %v14, 0.0
  %18 = vadd.xlane.f32.xlu0 %v17
  %v19 = vpop.xlane.xlu0 %18
  %v20 = vsel %vm16, %v15, 0.0
  %21 = vadd.xlane.f32.xlu0 %v20
  %v22 = vpop.xlane.xlu0 %21
  %v23 = vrcp.pop 64.0
  %v24 = vmul.f32 %v19, %v23
  %v25 = vmul.f32 %v22, %v23
  %v26 = vsub.f32 %v14, %v24
  %v27 = vsub.f32 %v15, %v25
  %v28 = vmul.f32 %v26, %v26
  %v29 = vmul.f32 %v27, %v27
  %v30 = vsel %vm16, %v28, 0.0
  %31 = vadd.xlane.f32.xlu0 %v30
  %v32 = vpop.xlane.xlu0 %31
  %v33 = vsel %vm16, %v29, 0.0
  %34 = vadd.xlane.f32.xlu0 %v33
  %v35 = vpop.xlane.xlu0 %34
  %v36 = vmul.f32 %v32, %v23
  %v37 = vmul.f32 %v35, %v23
  %v38 = vadd.f32 %v36, 1e-05
  %v39 = vadd.f32 %v37, 1e-05
  %v40 = vrsqrt.pop %v38
  %v41 = vrsqrt.pop %v39
  %v42 = vmul.f32 %v26, %v40
  %v43 = vmul.f32 %v27, %v41
  %v44 = vld [vmem:[%s1] sm:$0x1]
  %v46 = vlaneseq
  %v47 = vshrl.u32 %v46, 7
  %v48 = vsub.s32 0, %v47
  %v49 = vrot.slane %v44, %v48
  %v51 = vmul.f32 %v42, %v49
  %v52 = vmul.f32 %v43, %v49
  %v53 = vld [vmem:[%s2] sm:$0x1]
  %v55 = vlaneseq
  %v56 = vshrl.u32 %v55, 7
  %v57 = vsub.s32 0, %v56
  %v58 = vrot.slane %v53, %v57
  %v60 = vadd.f32 %v51, %v58
  %v61 = vadd.f32 %v52, %v58
  %v62 = vpack.c.bf16 %v61, %v60
  %v64 = vunpack.c.l.b16 %v62
  %v65 = vunpack.c.h.b16 %v62
  %v66 = vpack.c.b16 %v64, %v64
  %v67 = vpack.c.b16 %v65, %v65
  %vm70 = vcmask 519168
  %71 = vst.msk [vmem:[%s3] sm:$0xf] %vm70, %v66
  %72 = vst.msk [vmem:[%s3 + $0x4] sm:$0xf] %vm70, %v67
  // Predicated region
  $region14: #{_lambda_.27} parent=0 // pred_check
    _
  $region15: #{_lambda_.27} parent=0 // pred_check_branch
    %74 = sbr.rel (0) target = $region17
  $region16: #{_lambda_.27} parent=0 // pred_region
    _
  $region17: #{_lambda_.27} parent=0 // pred_fallthru
    _
  // Predicated region
  $region18: #{_lambda_.27} parent=0 // pred_check
    _
  $region19: #{_lambda_.27} parent=0 // pred_check_branch
    %76 = sbr.rel (0) target = $region21
  $region20: #{_lambda_.27} parent=0 // pred_region
    _
  $region21: #{_lambda_.27} parent=0 // pred_fallthru
    _

// kernel: _lambda_.26
$region0: #{_lambda_.26}
  #allocation0 [shape = 'u32[]', space=smem, size = 0x4, offset = 0x4, fixed_abs, tag = 'smem constant byte address 0x4 - core index']
  #allocation1 [shape = 'u32[144,128]{1,0:T(1,128)}', space=vmem, size = 0x12000, scoped, tag = 'internal scratch']
  #allocation2 [shape = 'f32[16,64]{1,0:T(8,128)}', space=vmem, size = 0x2000, scoped, tag = 'scratch operand']
  %s0 = inlined_call_operand.vmem [shape: bf16[16,64], index: 0, kind: input, shape index: {}]
  %s1 = inlined_call_operand.vmem [shape: bf16[64,64], index: 1, kind: input, shape index: {}]
  %s2 = inlined_call_operand.vmem [shape: f32[1,64], index: 2, kind: input, shape index: {}]
  %s3 = inlined_call_operand.vmem [shape: f32[16,64], index: 3, kind: input, shape index: {}]
  %s4 = inlined_call_operand.vmem [shape: f32[16,64], index: 4, kind: output, shape index: {}]
  %s5 = sld [smem:[#allocation0]]
  $region34: #{_lambda_.26} parent=0
    _
  %s7 = ssub.s32 1, %s5
  %s8 = scalar_select 0, %s7, %s5
  // Predicated region
  $region2: #{_lambda_.26} parent=0 // pred_check
    _
  $region3: #{_lambda_.26} parent=0 // pred_check_branch
    %10 = sbr.rel (0) target = $region5
  $region4: #{_lambda_.26} parent=0 // pred_region
    _
  $region5: #{_lambda_.26} parent=0 // pred_fallthru
    _
  // Predicated region
  $region6: #{_lambda_.26} parent=0 // pred_check
    _
  $region7: #{_lambda_.26} parent=0 // pred_check_branch
    %12 = sbr.rel (0) target = $region9
  $region8: #{_lambda_.26} parent=0 // pred_region
    _
  $region9: #{_lambda_.26} parent=0 // pred_fallthru
    _
  // Predicated region
  $region10: #{_lambda_.26} parent=0 // pred_check
    _
  $region11: #{_lambda_.26} parent=0 // pred_check_branch
    %14 = sbr.rel (0) target = $region13
  $region12: #{_lambda_.26} parent=0 // pred_region
    _
  $region13: #{_lambda_.26} parent=0 // pred_fallthru
    _
  // Predicated region
  $region14: #{_lambda_.26} parent=0 // pred_check
    _
  $region15: #{_lambda_.26} parent=0 // pred_check_branch
    %16 = sbr.rel (0) target = $region17
  $region16: #{_lambda_.26} parent=0 // pred_region
    _
  $region17: #{_lambda_.26} parent=0 // pred_fallthru
    _
  %p18 = scmp.eq.s32.totalorder 0, 0
  // Predicated region
  $region18: #{_lambda_.26} parent=0 // pred_check
    %p19 = pneg %p18
  $region19: #{_lambda_.26} parent=0 // pred_check_branch
    %21 = sbr.rel (%p19) target = $region21
  $region20: #{_lambda_.26} parent=0 // pred_region
    %vm22 = vcmask 523264
    %23 = vst.msk [vmem:[#allocation2] sm:$0xff] %vm22, 0.0
    %24 = vst.msk [vmem:[#allocation2 + $0x8] sm:$0xff] %vm22, 0.0
  $region21: #{_lambda_.26} parent=0 // pred_fallthru
    _
  %v25 = vld [vmem:[#allocation2] sm:$0xff]
  %v26 = vld [vmem:[#allocation2 + $0x8] sm:$0xff]
  %v27 = vld [vmem:[%s0] sm:$0xf]
  %v28 = vld [vmem:[%s0 + $0x4] sm:$0xf]
  %v29 = vld [vmem:[%s1] sm:$0xf]
  %v30 = vld [vmem:[%s1 + $0x4] sm:$0xf]
  %v31 = vld [vmem:[%s1 + $0x8] sm:$0xf]
  %v32 = vld [vmem:[%s1 + $0xc] sm:$0xf]
  %v33 = vld [vmem:[%s1 + $0x10] sm:$0xf]
  %v34 = vld [vmem:[%s1 + $0x14] sm:$0xf]
  %v35 = vld [vmem:[%s1 + $0x18] sm:$0xf]
  %v36 = vld [vmem:[%s1 + $0x1c] sm:$0xf]
  %v39 = vunpack.c.l.b16 %v27
  %v40 = vunpack.c.l.b16 %v28
  %v41 = vpack.c.b16 %v40, %v39
  %v50 = vunpack.c.l.b16 %v29
  %v51 = vunpack.c.l.b16 %v30
  %v52 = vunpack.c.l.b16 %v31
  %v53 = vunpack.c.l.b16 %v32
  %v54 = vunpack.c.l.b16 %v33
  %v55 = vunpack.c.l.b16 %v34
  %v56 = vunpack.c.l.b16 %v35
  %v57 = vunpack.c.l.b16 %v36
  %v58 = vpack.c.b16 %v51, %v50
  %v59 = vpack.c.b16 %v53, %v52
  %v60 = vpack.c.b16 %v55, %v54
  %v61 = vpack.c.b16 %v57, %v56
  %vm66 = vcmask 523264
  %v68 = vsel %vm66, %v41, 0
  %70 = vmatprep.subr.bf16.mxu0 0
  %71 = vmatpush1.bf16.msra.mxu0 %v58
  %72 = vmatprep.subr.bf16.mxu0 0
  %73 = vmatpush1.bf16.msra.mxu0 %v59
  %74 = vmatprep.subr.bf16.mxu0 0
  %75 = vmatpush1.bf16.msra.mxu0 %v60
  %76 = vmatprep.subr.bf16.mxu0 0
  %77 = vmatpush1.bf16.msra.mxu0 %v61
  %78 = vmatprep.subr.bf16.mxu0 0
  %79 = vmatpush1.bf16.msra.mxu0 0
  %80 = vmatprep.subr.bf16.mxu0 0
  %81 = vmatpush1.bf16.msra.mxu0 0
  %82 = vmatprep.subr.bf16.mxu0 0
  %83 = vmatpush1.bf16.msra.mxu0 0
  %84 = vmatprep.subr.bf16.mxu0 0
  %85 = vmatpush1.bf16.msra.mxu0 0
  %86 = vmatprep.subr.bf16.mxu0 0
  %87 = vmatpush1.bf16.msra.mxu0 0
  %88 = vmatprep.subr.bf16.mxu0 0
  %89 = vmatpush1.bf16.msra.mxu0 0
  %90 = vmatprep.subr.bf16.mxu0 0
  %91 = vmatpush1.bf16.msra.mxu0 0
  %92 = vmatprep.subr.bf16.mxu0 0
  %93 = vmatpush1.bf16.msra.mxu0 0
  %94 = vmatprep.subr.bf16.mxu0 0
  %95 = vmatpush1.bf16.msra.mxu0 0
  %96 = vmatprep.subr.bf16.mxu0 0
  %97 = vmatpush1.bf16.msra.mxu0 0
  %98 = vmatprep.subr.bf16.mxu0 0
  %99 = vmatpush1.bf16.msra.mxu0 0
  %100 = vmatprep.subr.bf16.mxu0 0
  %101 = vmatpush1.bf16.msra.mxu0 0
  %102 = vmatprep.mubr.bf16.mxu0 0
  %103 = vmatmul.mubr.bf16.gmra.mrb[0].mxu0 %v68
  %v104 = vpop.f32.mrb[0].mxu0
  %v105 = vadd.f32 0.0, %v104
  %v106 = vpop.f32.mrb[0].mxu0
  %v107 = vpop.f32.mrb[0].mxu0
  %v108 = vadd.f32 0.0, %v107
  %v109 = vpop.f32.mrb[0].mxu0
  %110 = vdwg.mxu0
  %v111 = vadd.f32 %v25, %v105
  %v112 = vadd.f32 %v26, %v108
  %113 = vst.msk [vmem:[#allocation2] sm:$0xff] %vm66, %v111
  %114 = vst.msk [vmem:[#allocation2 + $0x8] sm:$0xff] %vm66, %v112
  // Predicated region
  $region22: #{_lambda_.26} parent=0 // pred_check
    %p115 = pneg %p18
  $region23: #{_lambda_.26} parent=0 // pred_check_branch
    %117 = sbr.rel (%p115) target = $region25
  $region24: #{_lambda_.26} parent=0 // pred_region
    %v118 = vld [vmem:[#allocation2] sm:$0xff]
    %v119 = vld [vmem:[#allocation2 + $0x8] sm:$0xff]
    %v120 = vld [vmem:[%s2] sm:$0x1]
    %v122 = vlaneseq
    %v123 = vshrl.u32 %v122, 7
    %v124 = vsub.s32 0, %v123
    %v125 = vrot.slane %v120, %v124
    %v127 = vadd.f32 %v118, %v125
    %v128 = vadd.f32 %v119, %v125
    %v129 = vld [vmem:[%s3] sm:$0xff]
    %v130 = vld [vmem:[%s3 + $0x8] sm:$0xff]
    %v131 = vadd.f32 %v127, %v129
    %v132 = vadd.f32 %v128, %v130
    %133 = vst.msk [vmem:[%s4] sm:$0xff] %vm66, %v131
    %134 = vst.msk [vmem:[%s4 + $0x8] sm:$0xff] %vm66, %v132
  $region25: #{_lambda_.26} parent=0 // pred_fallthru
    _
  // Predicated region
  $region26: #{_lambda_.26} parent=0 // pred_check
    _
  $region27: #{_lambda_.26} parent=0 // pred_check_branch
    %136 = sbr.rel (0) target = $region29
  $region28: #{_lambda_.26} parent=0 // pred_region
    _
  $region29: #{_lambda_.26} parent=0 // pred_fallthru
    _
  // Predicated region
  $region30: #{_lambda_.26} parent=0 // pred_check
    _
  $region31: #{_lambda_.26} parent=0 // pred_check_branch
    %138 = sbr.rel (0) target = $region33
  $region32: #{_lambda_.26} parent=0 // pred_region
    _
  $region33: #{_lambda_.26} parent=0 // pred_fallthru
    _

// kernel: _lambda_.25
$region0: #{_lambda_.25}
  #allocation0 [shape = 'u32[]', space=smem, size = 0x4, offset = 0x4, fixed_abs, tag = 'smem constant byte address 0x4 - core index']
  #allocation1 [shape = 'u32[144,128]{1,0:T(1,128)}', space=vmem, size = 0x12000, scoped, tag = 'internal scratch']
  #allocation2 [shape = 'f32[4,8,1]{2,1,0:T(8,128)}', space=vmem, size = 0x4000, scoped, tag = 'scratch operand']
  #allocation3 [shape = 'f32[4,8,1]{2,1,0:T(8,128)}', space=vmem, size = 0x4000, scoped, tag = 'scratch operand']
  #allocation4 [shape = 'f32[4,8,16]{2,1,0:T(8,128)}', space=vmem, size = 0x4000, scoped, tag = 'scratch operand']
  %s0 = inlined_call_operand.vmem [shape: bf16[2,8,128], index: 0, kind: input, shape index: {}]
  %s1 = inlined_call_operand.vmem [shape: bf16[2,8,192], index: 1, kind: input, shape index: {}]
  %s2 = inlined_call_operand.vmem [shape: bf16[2,8,64], index: 2, kind: output, shape index: {}]
  %s3 = sld [smem:[#allocation0]]
  $region49: #{_lambda_.25} parent=0
    _
  %s5 = ssub.s32 1, %s3
  %s6 = scalar_select 0, %s5, %s3
  loop: start=0, step=1, limit=4
  $region2: #{_lambda_.25} parent=0 // loop_pre_header
    _
  $region3: #{_lambda_.25} parent=0 // loop_header
    %s8 = sphi 0, %s12
    %p9 = scmp.ge.s32.totalorder %s8, 4
    %s15 = sphi 0, %s34
    %s16 = sphi 0, %s30
    %s17 = sphi 0, %s26
    %s18 = sphi 0, %s15
    %s19 = sphi 0, %s16
    %s20 = sphi 0, %s17
    %s21 = sphi 0, %s18
    %s22 = sphi 0, %s19
    %s23 = sphi 0, %s20
    %s39 = sphi 0, %s41
    %s42 = sphi 0, %s39
    %s43 = sphi 0, %s42
    %s59 = sphi 0, %s43
    %s67 = sphi 0, %s69
    %s70 = sphi 0, %s67
    %s71 = sphi 0, %s70
    %s87 = sphi 0, %s71
    %s95 = sphi 0, %s97
    %s98 = sphi 0, %s95
    %s99 = sphi 0, %s98
    %s115 = sphi 0, %s99
  $region4: #{_lambda_.25} parent=0 // loop_header_branch
    %11 = sbr.rel (%p9) target = $region8
  $region5: #{_lambda_.25} parent=0 // loop_body
    %s13 = ssub.s32 %s8, 1
    %s14 = ssub.s32 %s8, 2
    %s24 = sadd.s32 1, %s17
    %p25 = scmp.ge.s32.totalorder %s24, 1
    %s26 = scalar_select %p25, 0, %s24
    %s27 = sadd.s32 1, %s16
    %s28 = scalar_select %p25, %s27, %s16
    %p29 = scmp.ge.s32.totalorder %s28, 1
    %s30 = scalar_select %p29, 0, %s28
    %s31 = sadd.s32 1, %s15
    %s32 = scalar_select %p29, %s31, %s15
    %p33 = scmp.ge.s32.totalorder %s32, 2
    %s34 = scalar_select %p33, 0, %s32
    %s35 = ssub.s32 %s15, %s34
    %s36 = ssub.s32 %s16, %s30
    %s37 = sor.u32 %s35, %s36
    %p38 = scmp.eq.s32.totalorder %s37, 0
    %s40 = sadd.s32 %s39, 1
    %s41 = scalar_select %p38, %s39, %s40
    %p44 = pneg %p38
    %p45 = scmp.eq.s32.totalorder %s8, 1
    %p46 = por %p44, %p45
    %p47 = scmp.ne.s32.totalorder %s39, %s42
    %p48 = scmp.eq.s32.totalorder %s8, 0
    %p49 = por %p47, %p48
    %p50 = scmp.ne.s32.totalorder %s39, %s42
    %p51 = scmp.eq.s32.totalorder %s13, 1
    %p52 = por %p50, %p51
    %p53 = scmp.ne.s32.totalorder %s42, %s43
    %p54 = scmp.eq.s32.totalorder %s13, 0
    %p55 = por %p53, %p54
    %p56 = scmp.ne.s32.totalorder %s42, %s43
    %p57 = scmp.eq.s32.totalorder %s14, 1
    %p58 = por %p56, %p57
    %p60 = scmp.ne.s32.totalorder %s43, %s59
    %p61 = scmp.eq.s32.totalorder %s14, 0
    %p62 = por %p60, %p61
    %s63 = ssub.s32 %s15, %s34
    %s64 = ssub.s32 %s17, %s26
    %s65 = sor.u32 %s63, %s64
    %p66 = scmp.eq.s32.totalorder %s65, 0
    %s68 = sadd.s32 %s67, 1
    %s69 = scalar_select %p66, %s67, %s68
    %p72 = pneg %p66
    %p73 = scmp.eq.s32.totalorder %s8, 1
    %p74 = por %p72, %p73
    %p75 = scmp.ne.s32.totalorder %s67, %s70
    %p76 = scmp.eq.s32.totalorder %s8, 0
    %p77 = por %p75, %p76
    %p78 = scmp.ne.s32.totalorder %s67, %s70
    %p79 = scmp.eq.s32.totalorder %s13, 1
    %p80 = por %p78, %p79
    %p81 = scmp.ne.s32.totalorder %s70, %s71
    %p82 = scmp.eq.s32.totalorder %s13, 0
    %p83 = por %p81, %p82
    %p84 = scmp.ne.s32.totalorder %s70, %s71
    %p85 = scmp.eq.s32.totalorder %s14, 1
    %p86 = por %p84, %p85
    %p88 = scmp.ne.s32.totalorder %s71, %s87
    %p89 = scmp.eq.s32.totalorder %s14, 0
    %p90 = por %p88, %p89
    %s91 = ssub.s32 %s15, %s34
    %s92 = ssub.s32 %s16, %s30
    %s93 = sor.u32 %s91, %s92
    %p94 = scmp.eq.s32.totalorder %s93, 0
    %s96 = sadd.s32 %s95, 1
    %s97 = scalar_select %p94, %s95, %s96
    %p100 = pneg %p94
    %p101 = scmp.eq.s32.totalorder %s8, 1
    %p102 = por %p100, %p101
    %p103 = scmp.ne.s32.totalorder %s95, %s98
    %p104 = scmp.eq.s32.totalorder %s8, 0
    %p105 = por %p103, %p104
    %p106 = scmp.ne.s32.totalorder %s95, %s98
    %p107 = scmp.eq.s32.totalorder %s13, 1
    %p108 = por %p106, %p107
    %p109 = scmp.ne.s32.totalorder %s98, %s99
    %p110 = scmp.eq.s32.totalorder %s13, 0
    %p111 = por %p109, %p110
    %p112 = scmp.ne.s32.totalorder %s98, %s99
    %p113 = scmp.eq.s32.totalorder %s14, 1
    %p114 = por %p112, %p113
    %p116 = scmp.ne.s32.totalorder %s99, %s115
    %p117 = scmp.eq.s32.totalorder %s14, 0
    %p118 = por %p116, %p117
    %p119 = scmp.le.s32.totalorder 1, %s8
    %p120 = scmp.lt.s32.totalorder %s8, 3
    %p121 = pnand %p119, %p120
    %p122 = pneg %p121
    // Predicated region
    $region9: #{_lambda_.25} parent=5 // pred_check
      _
    $region10: #{_lambda_.25} parent=5 // pred_check_branch
      %124 = sbr.rel (%p121) target = $region12
    $region11: #{_lambda_.25} parent=5 // pred_region
      %s125 = ssub.s32 %s8, 1
    $region12: #{_lambda_.25} parent=5 // pred_fallthru
      _
    %p126 = scmp.lt.s32.totalorder %s8, 2
    // Predicated region
    $region13: #{_lambda_.25} parent=5 // pred_check
      %p127 = pneg %p126
    $region14: #{_lambda_.25} parent=5 // pred_check_branch
      %129 = sbr.rel (%p127) target = $region16
    $region15: #{_lambda_.25} parent=5 // pred_region
      // Predicated region
      $region17: #{_lambda_.25} parent=15 // pred_check
        %p130 = pneg %p49
      $region18: #{_lambda_.25} parent=15 // pred_check_branch
        %132 = sbr.rel (%p130) target = $region20
      $region19: #{_lambda_.25} parent=15 // pred_region
        %p133 = scmp.lt.s32.totalorder %s15, 1
        %s134 = scalar_select %p133, %s15, 1
        %p135 = scmp.lt.s32.totalorder %s16, 0
        %s136 = scalar_select %p135, %s16, 0
        %s137 = sadd.s32 %s136, %s134
        %s138 = smul.addr %s137, 4
        %s139 = scalar_lea.vmem %s0, %s138
      $region20: #{_lambda_.25} parent=15 // pred_fallthru
        _
      // Predicated region
      $region21: #{_lambda_.25} parent=15 // pred_check
        %p140 = pneg %p77
      $region22: #{_lambda_.25} parent=15 // pred_check_branch
        %142 = sbr.rel (%p140) target = $region24
      $region23: #{_lambda_.25} parent=15 // pred_region
        %p143 = scmp.lt.s32.totalorder %s15, 1
        %s144 = scalar_select %p143, %s15, 1
        %p145 = scmp.lt.s32.totalorder %s17, 0
        %s146 = scalar_select %p145, %s17, 0
        %s147 = smul.addr %s146, 2
        %s148 = smul.addr %s144, 2
        %s149 = sadd.s32 %s147, %s148
        %s150 = smul.addr %s149, 4
        %s151 = scalar_lea.vmem %s1, %s150
      $region24: #{_lambda_.25} parent=15 // pred_fallthru
        _
    $region16: #{_lambda_.25} parent=5 // pred_fallthru
      _
    %p152 = scmp.le.s32.totalorder 1, %s8
    %p153 = scmp.lt.s32.totalorder %s8, 3
    %p154 = pnand %p152, %p153
    %p155 = pneg %p154
    // Predicated region
    $region25: #{_lambda_.25} parent=5 // pred_check
      _
    $region26: #{_lambda_.25} parent=5 // pred_check_branch
      %157 = sbr.rel (%p154) target = $region28
    $region27: #{_lambda_.25} parent=5 // pred_region
      %s158 = ssub.s32 %s8, 1
      %p159 = scmp.lt.s32.totalorder %s18, 1
      %s160 = scalar_select %p159, %s18, 1
      %p161 = scmp.lt.s32.totalorder %s19, 0
      %s162 = scalar_select %p161, %s19, 0
      %s163 = sadd.s32 %s162, %s160
      %s164 = smul.addr %s163, 4
      %s165 = scalar_lea.vmem %s0, %s164
      %p166 = pneg %p55
      %p167 = pneg %p52
      %p168 = scmp.lt.s32.totalorder %s18, 1
      %s169 = scalar_select %p168, %s18, 1
      %p170 = scmp.lt.s32.totalorder %s20, 0
      %s171 = scalar_select %p170, %s20, 0
      %s172 = smul.addr %s171, 2
      %s173 = smul.addr %s169, 2
      %s174 = sadd.s32 %s172, %s173
      %s175 = smul.addr %s174, 4
      %s176 = scalar_lea.vmem %s1, %s175
      %p177 = pneg %p83
      %p178 = pneg %p80
      %p179 = pneg %p111
      %p180 = pneg %p108
      %p181 = scmp.lt.s32.totalorder %s18, 1
      %s182 = scalar_select %p181, %s18, 1
      %p183 = scmp.lt.s32.totalorder %s19, 0
      %s184 = scalar_select %p183, %s19, 0
      %s185 = sadd.s32 %s184, %s182
      %s186 = smul.addr %s185, 4
      %s187 = scalar_lea.vmem %s2, %s186
      %p188 = scmp.lt.s32.totalorder %s18, 1
      %s189 = scalar_select %p188, %s18, 1
      %p190 = scmp.lt.s32.totalorder %s19, 0
      %s191 = scalar_select %p190, %s19, 0
      %s192 = sadd.s32 %s191, %s189
      %s193 = smul.addr %s192, 4
      %s194 = scalar_lea.vmem %s0, %s193
      %p195 = scmp.lt.s32.totalorder %s18, 1
      %s196 = scalar_select %p195, %s18, 1
      %p197 = scmp.lt.s32.totalorder %s20, 0
      %s198 = scalar_select %p197, %s20, 0
      %s199 = smul.addr %s198, 2
      %s200 = smul.addr %s196, 2
      %s201 = sadd.s32 %s199, %s200
      %s202 = smul.addr %s201, 4
      %s203 = scalar_lea.vmem %s1, %s202
      %p204 = scmp.lt.s32.totalorder %s18, 1
      %s205 = scalar_select %p204, %s18, 1
      %p206 = scmp.lt.s32.totalorder %s19, 0
      %s207 = scalar_select %p206, %s19, 0
      %s208 = sadd.s32 %s207, %s205
      %s209 = smul.addr %s208, 4
      %s210 = scalar_lea.vmem %s2, %s209
      %p212 = scmp.eq.s32.totalorder %s20, 0
      // Predicated region
      $region29: #{_lambda_.25} parent=27 // pred_check
        %p213 = pneg %p212
      $region30: #{_lambda_.25} parent=27 // pred_check_branch
        %215 = sbr.rel (%p213) target = $region32
      $region31: #{_lambda_.25} parent=27 // pred_region
        %vm216 = vcmask 7168
        %217 = vst.msk [vmem:[#allocation2] sm:$0xff] %vm216, -inf
        %218 = vst.msk [vmem:[#allocation2 + $0x8] sm:$0xff] %vm216, -inf
        %219 = vst.msk [vmem:[#allocation2 + $0x10] sm:$0xff] %vm216, -inf
        %220 = vst.msk [vmem:[#allocation2 + $0x18] sm:$0xff] %vm216, -inf
        %221 = vst.msk [vmem:[#allocation3] sm:$0xff] %vm216, 0.0
        %222 = vst.msk [vmem:[#allocation3 + $0x8] sm:$0xff] %vm216, 0.0
        %223 = vst.msk [vmem:[#allocation3 + $0x10] sm:$0xff] %vm216, 0.0
        %224 = vst.msk [vmem:[#allocation3 + $0x18] sm:$0xff] %vm216, 0.0
        %vm225 = vcmask 130048
        %226 = vst.msk [vmem:[#allocation4] sm:$0xff] %vm225, 0.0
        %227 = vst.msk [vmem:[#allocation4 + $0x8] sm:$0xff] %vm225, 0.0
        %228 = vst.msk [vmem:[#allocation4 + $0x10] sm:$0xff] %vm225, 0.0
        %229 = vst.msk [vmem:[#allocation4 + $0x18] sm:$0xff] %vm225, 0.0
      $region32: #{_lambda_.25} parent=27 // pred_fallthru
        _
      %v230 = vld [vmem:[%s194] sm:$0xf]
      %v231 = vld [vmem:[%s203] sm:$0xff]
      %vm232 = vcmask 261120
      %v234 = vsel %vm232, %v230, 0
      %v237 = vsel %vm232, %v231, 0
      %239 = vmatprep.subr.bf16.mxu0 0
      %240 = vmatpush1.bf16.xpose.msra.mxu0 %v237
      %241 = vmatprep.subr.bf16.mxu0 0
      %242 = vmatpush1.bf16.xpose.msra.mxu0 0
      %243 = vmatprep.subr.bf16.mxu0 0
      %244 = vmatpush1.bf16.xpose.msra.mxu0 0
      %245 = vmatprep.subr.bf16.mxu0 0
      %246 = vmatpush1.bf16.xpose.msra.mxu0 0
      %247 = vmatprep.subr.bf16.mxu0 0
      %248 = vmatpush1.bf16.xpose.msra.mxu0 0
      %249 = vmatprep.subr.bf16.mxu0 0
      %250 = vmatpush1.bf16.xpose.msra.mxu0 0
      %251 = vmatprep.subr.bf16.mxu0 0
      %252 = vmatpush1.bf16.xpose.msra.mxu0 0
      %253 = vmatprep.subr.bf16.mxu0 0
      %254 = vmatpush1.bf16.xpose.msra.mxu0 0
      %255 = vmatprep.subr.bf16.mxu0 0
      %256 = vmatpush1.bf16.xpose.msra.mxu0 0
      %257 = vmatprep.subr.bf16.mxu0 0
      %258 = vmatpush1.bf16.xpose.msra.mxu0 0
      %259 = vmatprep.subr.bf16.mxu0 0
      %260 = vmatpush1.bf16.xpose.msra.mxu0 0
      %261 = vmatprep.subr.bf16.mxu0 0
      %262 = vmatpush1.bf16.xpose.msra.mxu0 0
      %263 = vmatprep.subr.bf16.mxu0 0
      %264 = vmatpush1.bf16.xpose.msra.mxu0 0
      %265 = vmatprep.subr.bf16.mxu0 0
      %266 = vmatpush1.bf16.xpose.msra.mxu0 0
      %267 = vmatprep.subr.bf16.mxu0 0
      %268 = vmatpush1.bf16.xpose.msra.mxu0 0
      %269 = vmatprep.subr.bf16.mxu0 0
      %270 = vmatpush1.bf16.xpose.msra.mxu0 0
      %271 = vmatprep.mubr.bf16.mxu0 0
      %272 = vmatmul.mubr.bf16.gmra.mrb[0].mxu0 %v234
      %v273 = vpop.f32.mrb[0].mxu0
      %v274 = vadd.f32 0.0, %v273
      %v275 = vpop.f32.mrb[0].mxu0
      %v276 = vpop.f32.mrb[0].mxu0
      %v277 = vpop.f32.mrb[0].mxu0
      %278 = vdwg.mxu0
      %v279 = vmul.f32 %v274, 0.17677669
      %v280 = vld [vmem:[#allocation2] sm:$0xff]
      %vm281 = vcmask 64512
      %v282 = vsel %vm281, %v279, -inf
      %283 = vmax.xlane.f32.xlu0 %v282
      %v284 = vpop.xlane.xlu0 %283
      %v285 = vmax.f32 %v280, %v284
      %v286 = vsub.f32 %v280, %v285
      %v287 = vmul.f32 %v286, 1.442695
      %v288 = vpow.pop %v287
      %290 = vset.pattern.permute.xlu0 0
      %291 = vperm.xlu0 %290, %v285
      %v292 = vpop.permute.xlu0 %291
      %v294 = vsub.f32 %v279, %v292
      %v295 = vmul.f32 %v294, 1.442695
      %v296 = vpow.pop %v295
      %v297 = vld [vmem:[#allocation3] sm:$0xff]
      %v298 = vmul.f32 %v288, %v297
      %v299 = vsel %vm281, %v296, 0.0
      %300 = vadd.xlane.f32.xlu0 %v299
      %v301 = vpop.xlane.xlu0 %300
      %v302 = vadd.f32 %v298, %v301
      %vm303 = vcmask 7168
      %304 = vst.msk [vmem:[#allocation3] sm:$0xff] %vm303, %v302
      %v305 = vld [vmem:[#allocation4] sm:$0xff]
      %307 = vset.pattern.permute.xlu0 0
      %308 = vperm.xlu0 %307, %v288
      %v309 = vpop.permute.xlu0 %308
      %v311 = vmul.f32 %v309, %v305
      %v312 = vpack.c.bf16 %v296, %v296
      %v314 = vunpack.c.h.b16 %v231
      %v315 = vpack.c.b16 %v314, %v314
      %v317 = vsel %vm281, %v312, 0
      %vm319 = vcmask 1043456
      %v321 = vsel %vm319, %v315, 0
      %323 = vmatprep.subr.bf16.mxu0 0
      %324 = vmatpush1.bf16.msra.mxu0 %v321
      %325 = vmatprep.subr.bf16.mxu0 0
      %326 = vmatpush1.bf16.msra.mxu0 0
      %327 = vmatprep.subr.bf16.mxu0 0
      %328 = vmatpush1.bf16.msra.mxu0 0
      %329 = vmatprep.subr.bf16.mxu0 0
      %330 = vmatpush1.bf16.msra.mxu0 0
      %331 = vmatprep.subr.bf16.mxu0 0
      %332 = vmatpush1.bf16.msra.mxu0 0
      %333 = vmatprep.subr.bf16.mxu0 0
      %334 = vmatpush1.bf16.msra.mxu0 0
      %335 = vmatprep.subr.bf16.mxu0 0
      %336 = vmatpush1.bf16.msra.mxu0 0
      %337 = vmatprep.subr.bf16.mxu0 0
      %338 = vmatpush1.bf16.msra.mxu0 0
      %339 = vmatprep.subr.bf16.mxu0 0
      %340 = vmatpush1.bf16.msra.mxu0 0
      %341 = vmatprep.subr.bf16.mxu0 0
      %342 = vmatpush1.bf16.msra.mxu0 0
      %343 = vmatprep.subr.bf16.mxu0 0
      %344 = vmatpush1.bf16.msra.mxu0 0
      %345 = vmatprep.subr.bf16.mxu0 0
      %346 = vmatpush1.bf16.msra.mxu0 0
      %347 = vmatprep.subr.bf16.mxu0 0
      %348 = vmatpush1.bf16.msra.mxu0 0
      %349 = vmatprep.subr.bf16.mxu0 0
      %350 = vmatpush1.bf16.msra.mxu0 0
      %351 = vmatprep.subr.bf16.mxu0 0
      %352 = vmatpush1.bf16.msra.mxu0 0
      %353 = vmatprep.subr.bf16.mxu0 0
      %354 = vmatpush1.bf16.msra.mxu0 0
      %355 = vmatprep.mubr.bf16.mxu0 0
      %356 = vmatmul.mubr.bf16.gmra.mrb[0].mxu0 %v317
      %v357 = vpop.f32.mrb[0].mxu0
      %v358 = vadd.f32 0.0, %v357
      %v359 = vpop.f32.mrb[0].mxu0
      %v360 = vpop.f32.mrb[0].mxu0
      %v361 = vpop.f32.mrb[0].mxu0
      %362 = vdwg.mxu0
      %v363 = vadd.f32 %v311, %v358
      %vm364 = vcmask 130048
      %365 = vst.msk [vmem:[#allocation4] sm:$0xff] %vm364, %v363
      %366 = vst.msk [vmem:[#allocation2] sm:$0xff] %vm303, %v285
      %v368 = vunpack.c.l.b16 %v230
      %v369 = vpack.c.b16 %v368, %v368
      %370 = vrot.lane.b32.xlu0 %v369, 96
      %v371 = vpop.permute.xlu0 %370
      %v372 = vunpack.c.l.b16 %v231
      %v373 = vpack.c.b16 %v372, %v372
      %374 = vrot.lane.b32.xlu0 %v373, 96
      %v375 = vpop.permute.xlu0 %374
      %v377 = vsel %vm232, %v371, 0
      %v380 = vsel %vm232, %v375, 0
      %382 = vmatprep.subr.bf16.mxu0 0
      %383 = vmatpush1.bf16.xpose.msra.mxu0 %v380
      %384 = vmatprep.subr.bf16.mxu0 0
      %385 = vmatpush1.bf16.xpose.msra.mxu0 0
      %386 = vmatprep.subr.bf16.mxu0 0
      %387 = vmatpush1.bf16.xpose.msra.mxu0 0
      %388 = vmatprep.subr.bf16.mxu0 0
      %389 = vmatpush1.bf16.xpose.msra.mxu0 0
      %390 = vmatprep.subr.bf16.mxu0 0
      %391 = vmatpush1.bf16.xpose.msra.mxu0 0
      %392 = vmatprep.subr.bf16.mxu0 0
      %393 = vmatpush1.bf16.xpose.msra.mxu0 0
      %394 = vmatprep.subr.bf16.mxu0 0
      %395 = vmatpush1.bf16.xpose.msra.mxu0 0
      %396 = vmatprep.subr.bf16.mxu0 0
      %397 = vmatpush1.bf16.xpose.msra.mxu0 0
      %398 = vmatprep.subr.bf16.mxu0 0
      %399 = vmatpush1.bf16.xpose.msra.mxu0 0
      %400 = vmatprep.subr.bf16.mxu0 0
      %401 = vmatpush1.bf16.xpose.msra.mxu0 0
      %402 = vmatprep.subr.bf16.mxu0 0
      %403 = vmatpush1.bf16.xpose.msra.mxu0 0
      %404 = vmatprep.subr.bf16.mxu0 0
      %405 = vmatpush1.bf16.xpose.msra.mxu0 0
      %406 = vmatprep.subr.bf16.mxu0 0
      %407 = vmatpush1.bf16.xpose.msra.mxu0 0
      %408 = vmatprep.subr.bf16.mxu0 0
      %409 = vmatpush1.bf16.xpose.msra.mxu0 0
      %410 = vmatprep.subr.bf16.mxu0 0
      %411 = vmatpush1.bf16.xpose.msra.mxu0 0
      %412 = vmatprep.subr.bf16.mxu0 0
      %413 = vmatpush1.bf16.xpose.msra.mxu0 0
      %414 = vmatprep.mubr.bf16.mxu0 0
      %415 = vmatmul.mubr.bf16.gmra.mrb[0].mxu0 %v377
      %v416 = vpop.f32.mrb[0].mxu0
      %v417 = vadd.f32 0.0, %v416
      %v418 = vpop.f32.mrb[0].mxu0
      %v419 = vpop.f32.mrb[0].mxu0
      %v420 = vpop.f32.mrb[0].mxu0
      %421 = vdwg.mxu0
      %v422 = vmul.f32 %v417, 0.17677669
      %s423 = scalar_lea.vmem [#allocation2], 8
      %v424 = vld [vmem:[%s423] sm:$0xff]
      %v425 = vsel %vm281, %v422, -inf
      %426 = vmax.xlane.f32.xlu0 %v425
      %v427 = vpop.xlane.xlu0 %426
      %v428 = vmax.f32 %v424, %v427
      %v429 = vsub.f32 %v424, %v428
      %v430 = vmul.f32 %v429, 1.442695
      %v431 = vpow.pop %v430
      %433 = vset.pattern.permute.xlu0 0
      %434 = vperm.xlu0 %433, %v428
      %v435 = vpop.permute.xlu0 %434
      %v437 = vsub.f32 %v422, %v435
      %v438 = vmul.f32 %v437, 1.442695
      %v439 = vpow.pop %v438
      %s440 = scalar_lea.vmem [#allocation3], 8
      %v441 = vld [vmem:[%s440] sm:$0xff]
      %v442 = vmul.f32 %v431, %v441
      %v443 = vsel %vm281, %v439, 0.0
      %444 = vadd.xlane.f32.xlu0 %v443
      %v445 = vpop.xlane.xlu0 %444
      %v446 = vadd.f32 %v442, %v445
      %447 = vst.msk [vmem:[%s440] sm:$0xff] %vm303, %v446
      %s448 = scalar_lea.vmem [#allocation4], 8
      %v449 = vld [vmem:[%s448] sm:$0xff]
      %451 = vset.pattern.permute.xlu0 0
      %452 = vperm.xlu0 %451, %v431
      %v453 = vpop.permute.xlu0 %452
      %v455 = vmul.f32 %v453, %v449
      %v456 = vpack.c.bf16 %v439, %v439
      %457 = vrot.lane.b32.xlu0 %v315, 112
      %v458 = vpop.permute.xlu0 %457
      %v460 = vsel %vm281, %v456, 0
      %v463 = vsel %vm319, %v458, 0
      %465 = vmatprep.subr.bf16.mxu0 0
      %466 = vmatpush1.bf16.msra.mxu0 %v463
      %467 = vmatprep.subr.bf16.mxu0 0
      %468 = vmatpush1.bf16.msra.mxu0 0
      %469 = vmatprep.subr.bf16.mxu0 0
      %470 = vmatpush1.bf16.msra.mxu0 0
      %471 = vmatprep.subr.bf16.mxu0 0
      %472 = vmatpush1.bf16.msra.mxu0 0
      %473 = vmatprep.subr.bf16.mxu0 0
      %474 = vmatpush1.bf16.msra.mxu0 0
      %475 = vmatprep.subr.bf16.mxu0 0
      %476 = vmatpush1.bf16.msra.mxu0 0
      %477 = vmatprep.subr.bf16.mxu0 0
      %478 = vmatpush1.bf16.msra.mxu0 0
      %479 = vmatprep.subr.bf16.mxu0 0
      %480 = vmatpush1.bf16.msra.mxu0 0
      %481 = vmatprep.subr.bf16.mxu0 0
      %482 = vmatpush1.bf16.msra.mxu0 0
      %483 = vmatprep.subr.bf16.mxu0 0
      %484 = vmatpush1.bf16.msra.mxu0 0
      %485 = vmatprep.subr.bf16.mxu0 0
      %486 = vmatpush1.bf16.msra.mxu0 0
      %487 = vmatprep.subr.bf16.mxu0 0
      %488 = vmatpush1.bf16.msra.mxu0 0
      %489 = vmatprep.subr.bf16.mxu0 0
      %490 = vmatpush1.bf16.msra.mxu0 0
      %491 = vmatprep.subr.bf16.mxu0 0
      %492 = vmatpush1.bf16.msra.mxu0 0
      %493 = vmatprep.subr.bf16.mxu0 0
      %494 = vmatpush1.bf16.msra.mxu0 0
      %495 = vmatprep.subr.bf16.mxu0 0
      %496 = vmatpush1.bf16.msra.mxu0 0
      %497 = vmatprep.mubr.bf16.mxu0 0
      %498 = vmatmul.mubr.bf16.gmra.mrb[0].mxu0 %v460
      %v499 = vpop.f32.mrb[0].mxu0
      %v500 = vadd.f32 0.0, %v499
      %v501 = vpop.f32.mrb[0].mxu0
      %v502 = vpop.f32.mrb[0].mxu0
      %v503 = vpop.f32.mrb[0].mxu0
      %504 = vdwg.mxu0
      %v505 = vadd.f32 %v455, %v500
      %506 = vst.msk [vmem:[%s448] sm:$0xff] %vm364, %v505
      %507 = vst.msk [vmem:[%s423] sm:$0xff] %vm303, %v428
      %508 = vrot.lane.b32.xlu0 %v369, 64
      %v509 = vpop.permute.xlu0 %508
      %510 = vrot.lane.b32.xlu0 %v373, 64
      %v511 = vpop.permute.xlu0 %510
      %v513 = vsel %vm232, %v509, 0
      %v516 = vsel %vm232, %v511, 0
      %518 = vmatprep.subr.bf16.mxu0 0
      %519 = vmatpush1.bf16.xpose.msra.mxu0 %v516
      %520 = vmatprep.subr.bf16.mxu0 0
      %521 = vmatpush1.bf16.xpose.msra.mxu0 0
      %522 = vmatprep.subr.bf16.mxu0 0
      %523 = vmatpush1.bf16.xpose.msra.mxu0 0
      %524 = vmatprep.subr.bf16.mxu0 0
      %525 = vmatpush1.bf16.xpose.msra.mxu0 0
      %526 = vmatprep.subr.bf16.mxu0 0
      %527 = vmatpush1.bf16.xpose.msra.mxu0 0
      %528 = vmatprep.subr.bf16.mxu0 0
      %529 = vmatpush1.bf16.xpose.msra.mxu0 0
      %530 = vmatprep.subr.bf16.mxu0 0
      %531 = vmatpush1.bf16.xpose.msra.mxu0 0
      %532 = vmatprep.subr.bf16.mxu0 0
      %533 = vmatpush1.bf16.xpose.msra.mxu0 0
      %534 = vmatprep.subr.bf16.mxu0 0
      %535 = vmatpush1.bf16.xpose.msra.mxu0 0
      %536 = vmatprep.subr.bf16.mxu0 0
      %537 = vmatpush1.bf16.xpose.msra.mxu0 0
      %538 = vmatprep.subr.bf16.mxu0 0
      %539 = vmatpush1.bf16.xpose.msra.mxu0 0
      %540 = vmatprep.subr.bf16.mxu0 0
      %541 = vmatpush1.bf16.xpose.msra.mxu0 0
      %542 = vmatprep.subr.bf16.mxu0 0
      %543 = vmatpush1.bf16.xpose.msra.mxu0 0
      %544 = vmatprep.subr.bf16.mxu0 0
      %545 = vmatpush1.bf16.xpose.msra.mxu0 0
      %546 = vmatprep.subr.bf16.mxu0 0
      %547 = vmatpush1.bf16.xpose.msra.mxu0 0
      %548 = vmatprep.subr.bf16.mxu0 0
      %549 = vmatpush1.bf16.xpose.msra.mxu0 0
      %550 = vmatprep.mubr.bf16.mxu0 0
      %551 = vmatmul.mubr.bf16.gmra.mrb[0].mxu0 %v513
      %v552 = vpop.f32.mrb[0].mxu0
      %v553 = vadd.f32 0.0, %v552
      %v554 = vpop.f32.mrb[0].mxu0
      %v555 = vpop.f32.mrb[0].mxu0
      %v556 = vpop.f32.mrb[0].mxu0
      %557 = vdwg.mxu0
      %v558 = vmul.f32 %v553, 0.17677669
      %s559 = scalar_lea.vmem [#allocation2], 16
      %v560 = vld [vmem:[%s559] sm:$0xff]
      %v561 = vsel %vm281, %v558, -inf
      %562 = vmax.xlane.f32.xlu0 %v561
      %v563 = vpop.xlane.xlu0 %562
      %v564 = vmax.f32 %v560, %v563
      %v565 = vsub.f32 %v560, %v564
      %v566 = vmul.f32 %v565, 1.442695
      %v567 = vpow.pop %v566
      %569 = vset.pattern.permute.xlu0 0
      %570 = vperm.xlu0 %569, %v564
      %v571 = vpop.permute.xlu0 %570
      %v573 = vsub.f32 %v558, %v571
      %v574 = vmul.f32 %v573, 1.442695
      %v575 = vpow.pop %v574
      %s576 = scalar_lea.vmem [#allocation3], 16
      %v577 = vld [vmem:[%s576] sm:$0xff]
      %v578 = vmul.f32 %v567, %v577
      %v579 = vsel %vm281, %v575, 0.0
      %580 = vadd.xlane.f32.xlu0 %v579
      %v581 = vpop.xlane.xlu0 %580
      %v582 = vadd.f32 %v578, %v581
      %583 = vst.msk [vmem:[%s576] sm:$0xff] %vm303, %v582
      %s584 = scalar_lea.vmem [#allocation4], 16
      %v585 = vld [vmem:[%s584] sm:$0xff]
      %587 = vset.pattern.permute.xlu0 0
      %588 = vperm.xlu0 %587, %v567
      %v589 = vpop.permute.xlu0 %588
      %v591 = vmul.f32 %v589, %v585
      %v592 = vpack.c.bf16 %v575, %v575
      %593 = vrot.lane.b32.xlu0 %v315, 96
      %v594 = vpop.permute.xlu0 %593
      %v596 = vsel %vm281, %v592, 0
      %v599 = vsel %vm319, %v594, 0
      %601 = vmatprep.subr.bf16.mxu0 0
      %602 = vmatpush1.bf16.msra.mxu0 %v599
      %603 = vmatprep.subr.bf16.mxu0 0
      %604 = vmatpush1.bf16.msra.mxu0 0
      %605 = vmatprep.subr.bf16.mxu0 0
      %606 = vmatpush1.bf16.msra.mxu0 0
      %607 = vmatprep.subr.bf16.mxu0 0
      %608 = vmatpush1.bf16.msra.mxu0 0
      %609 = vmatprep.subr.bf16.mxu0 0
      %610 = vmatpush1.bf16.msra.mxu0 0
      %611 = vmatprep.subr.bf16.mxu0 0
      %612 = vmatpush1.bf16.msra.mxu0 0
      %613 = vmatprep.subr.bf16.mxu0 0
      %614 = vmatpush1.bf16.msra.mxu0 0
      %615 = vmatprep.subr.bf16.mxu0 0
      %616 = vmatpush1.bf16.msra.mxu0 0
      %617 = vmatprep.subr.bf16.mxu0 0
      %618 = vmatpush1.bf16.msra.mxu0 0
      %619 = vmatprep.subr.bf16.mxu0 0
      %620 = vmatpush1.bf16.msra.mxu0 0
      %621 = vmatprep.subr.bf16.mxu0 0
      %622 = vmatpush1.bf16.msra.mxu0 0
      %623 = vmatprep.subr.bf16.mxu0 0
      %624 = vmatpush1.bf16.msra.mxu0 0
      %625 = vmatprep.subr.bf16.mxu0 0
      %626 = vmatpush1.bf16.msra.mxu0 0
      %627 = vmatprep.subr.bf16.mxu0 0
      %628 = vmatpush1.bf16.msra.mxu0 0
      %629 = vmatprep.subr.bf16.mxu0 0
      %630 = vmatpush1.bf16.msra.mxu0 0
      %631 = vmatprep.subr.bf16.mxu0 0
      %632 = vmatpush1.bf16.msra.mxu0 0
      %633 = vmatprep.mubr.bf16.mxu0 0
      %634 = vmatmul.mubr.bf16.gmra.mrb[0].mxu0 %v596
      %v635 = vpop.f32.mrb[0].mxu0
      %v636 = vadd.f32 0.0, %v635
      %v637 = vpop.f32.mrb[0].mxu0
      %v638 = vpop.f32.mrb[0].mxu0
      %v639 = vpop.f32.mrb[0].mxu0
      %640 = vdwg.mxu0
      %v641 = vadd.f32 %v591, %v636
      %642 = vst.msk [vmem:[%s584] sm:$0xff] %vm364, %v641
      %643 = vst.msk [vmem:[%s559] sm:$0xff] %vm303, %v564
      %644 = vrot.lane.b32.xlu0 %v369, 32
      %v645 = vpop.permute.xlu0 %644
      %646 = vrot.lane.b32.xlu0 %v373, 32
      %v647 = vpop.permute.xlu0 %646
      %v649 = vsel %vm232, %v645, 0
      %v652 = vsel %vm232, %v647, 0
      %654 = vmatprep.subr.bf16.mxu0 0
      %655 = vmatpush1.bf16.xpose.msra.mxu0 %v652
      %656 = vmatprep.subr.bf16.mxu0 0
      %657 = vmatpush1.bf16.xpose.msra.mxu0 0
      %658 = vmatprep.subr.bf16.mxu0 0
      %659 = vmatpush1.bf16.xpose.msra.mxu0 0
      %660 = vmatprep.subr.bf16.mxu0 0
      %661 = vmatpush1.bf16.xpose.msra.mxu0 0
      %662 = vmatprep.subr.bf16.mxu0 0
      %663 = vmatpush1.bf16.xpose.msra.mxu0 0
      %664 = vmatprep.subr.bf16.mxu0 0
      %665 = vmatpush1.bf16.xpose.msra.mxu0 0
      %666 = vmatprep.subr.bf16.mxu0 0
      %667 = vmatpush1.bf16.xpose.msra.mxu0 0
      %668 = vmatprep.subr.bf16.mxu0 0
      %669 = vmatpush1.bf16.xpose.msra.mxu0 0
      %670 = vmatprep.subr.bf16.mxu0 0
      %671 = vmatpush1.bf16.xpose.msra.mxu0 0
      %672 = vmatprep.subr.bf16.mxu0 0
      %673 = vmatpush1.bf16.xpose.msra.mxu0 0
      %674 = vmatprep.subr.bf16.mxu0 0
      %675 = vmatpush1.bf16.xpose.msra.mxu0 0
      %676 = vmatprep.subr.bf16.mxu0 0
      %677 = vmatpush1.bf16.xpose.msra.mxu0 0
      %678 = vmatprep.subr.bf16.mxu0 0
      %679 = vmatpush1.bf16.xpose.msra.mxu0 0
      %680 = vmatprep.subr.bf16.mxu0 0
      %681 = vmatpush1.bf16.xpose.msra.mxu0 0
      %682 = vmatprep.subr.bf16.mxu0 0
      %683 = vmatpush1.bf16.xpose.msra.mxu0 0
      %684 = vmatprep.subr.bf16.mxu0 0
      %685 = vmatpush1.bf16.xpose.msra.mxu0 0
      %686 = vmatprep.mubr.bf16.mxu0 0
      %687 = vmatmul.mubr.bf16.gmra.mrb[0].mxu0 %v649
      %v688 = vpop.f32.mrb[0].mxu0
      %v689 = vadd.f32 0.0, %v688
      %v690 = vpop.f32.mrb[0].mxu0
      %v691 = vpop.f32.mrb[0].mxu0
      %v692 = vpop.f32.mrb[0].mxu0
      %693 = vdwg.mxu0
      %v694 = vmul.f32 %v689, 0.17677669
      %s695 = scalar_lea.vmem [#allocation2], 24
      %v696 = vld [vmem:[%s695] sm:$0xff]
      %v697 = vsel %vm281, %v694, -inf
      %698 = vmax.xlane.f32.xlu0 %v697
      %v699 = vpop.xlane.xlu0 %698
      %v700 = vmax.f32 %v696, %v699
      %v701 = vsub.f32 %v696, %v700
      %v702 = vmul.f32 %v701, 1.442695
      %v703 = vpow.pop %v702
      %705 = vset.pattern.permute.xlu0 0
      %706 = vperm.xlu0 %705, %v700
      %v707 = vpop.permute.xlu0 %706
      %v709 = vsub.f32 %v694, %v707
      %v710 = vmul.f32 %v709, 1.442695
      %v711 = vpow.pop %v710
      %s712 = scalar_lea.vmem [#allocation3], 24
      %v713 = vld [vmem:[%s712] sm:$0xff]
      %v714 = vmul.f32 %v703, %v713
      %v715 = vsel %vm281, %v711, 0.0
      %716 = vadd.xlane.f32.xlu0 %v715
      %v717 = vpop.xlane.xlu0 %716
      %v718 = vadd.f32 %v714, %v717
      %719 = vst.msk [vmem:[%s712] sm:$0xff] %vm303, %v718
      %s720 = scalar_lea.vmem [#allocation4], 24
      %v721 = vld [vmem:[%s720] sm:$0xff]
      %723 = vset.pattern.permute.xlu0 0
      %724 = vperm.xlu0 %723, %v703
      %v725 = vpop.permute.xlu0 %724
      %v727 = vmul.f32 %v725, %v721
      %v728 = vpack.c.bf16 %v711, %v711
      %729 = vrot.lane.b32.xlu0 %v315, 80
      %v730 = vpop.permute.xlu0 %729
      %v732 = vsel %vm281, %v728, 0
      %v735 = vsel %vm319, %v730, 0
      %737 = vmatprep.subr.bf16.mxu0 0
      %738 = vmatpush1.bf16.msra.mxu0 %v735
      %739 = vmatprep.subr.bf16.mxu0 0
      %740 = vmatpush1.bf16.msra.mxu0 0
      %741 = vmatprep.subr.bf16.mxu0 0
      %742 = vmatpush1.bf16.msra.mxu0 0
      %743 = vmatprep.subr.bf16.mxu0 0
      %744 = vmatpush1.bf16.msra.mxu0 0
      %745 = vmatprep.subr.bf16.mxu0 0
      %746 = vmatpush1.bf16.msra.mxu0 0
      %747 = vmatprep.subr.bf16.mxu0 0
      %748 = vmatpush1.bf16.msra.mxu0 0
      %749 = vmatprep.subr.bf16.mxu0 0
      %750 = vmatpush1.bf16.msra.mxu0 0
      %751 = vmatprep.subr.bf16.mxu0 0
      %752 = vmatpush1.bf16.msra.mxu0 0
      %753 = vmatprep.subr.bf16.mxu0 0
      %754 = vmatpush1.bf16.msra.mxu0 0
      %755 = vmatprep.subr.bf16.mxu0 0
      %756 = vmatpush1.bf16.msra.mxu0 0
      %757 = vmatprep.subr.bf16.mxu0 0
      %758 = vmatpush1.bf16.msra.mxu0 0
      %759 = vmatprep.subr.bf16.mxu0 0
      %760 = vmatpush1.bf16.msra.mxu0 0
      %761 = vmatprep.subr.bf16.mxu0 0
      %762 = vmatpush1.bf16.msra.mxu0 0
      %763 = vmatprep.subr.bf16.mxu0 0
      %764 = vmatpush1.bf16.msra.mxu0 0
      %765 = vmatprep.subr.bf16.mxu0 0
      %766 = vmatpush1.bf16.msra.mxu0 0
      %767 = vmatprep.subr.bf16.mxu0 0
      %768 = vmatpush1.bf16.msra.mxu0 0
      %769 = vmatprep.mubr.bf16.mxu0 0
      %770 = vmatmul.mubr.bf16.gmra.mrb[0].mxu0 %v732
      %v771 = vpop.f32.mrb[0].mxu0
      %v772 = vadd.f32 0.0, %v771
      %v773 = vpop.f32.mrb[0].mxu0
      %v774 = vpop.f32.mrb[0].mxu0
      %v775 = vpop.f32.mrb[0].mxu0
      %776 = vdwg.mxu0
      %v777 = vadd.f32 %v727, %v772
      %778 = vst.msk [vmem:[%s720] sm:$0xff] %vm364, %v777
      %779 = vst.msk [vmem:[%s695] sm:$0xff] %vm303, %v700
      // Predicated region
      $region33: #{_lambda_.25} parent=27 // pred_check
        %p780 = pneg %p212
      $region34: #{_lambda_.25} parent=27 // pred_check_branch
        %782 = sbr.rel (%p780) target = $region36
      $region35: #{_lambda_.25} parent=27 // pred_region
        %v783 = vld [vmem:[#allocation3] sm:$0xff]
        %v784 = vrcp.pop %v783
        %v785 = vld [vmem:[#allocation4] sm:$0xff]
        %787 = vset.pattern.permute.xlu0 0
        %788 = vperm.xlu0 %787, %v784
        %v789 = vpop.permute.xlu0 %788
        %v791 = vmul.f32 %v785, %v789
        %v792 = vld [vmem:[%s440] sm:$0xff]
        %v793 = vrcp.pop %v792
        %v794 = vld [vmem:[%s448] sm:$0xff]
        %796 = vset.pattern.permute.xlu0 0
        %797 = vperm.xlu0 %796, %v793
        %v798 = vpop.permute.xlu0 %797
        %v800 = vmul.f32 %v794, %v798
        %v801 = vld [vmem:[%s576] sm:$0xff]
        %v802 = vrcp.pop %v801
        %v803 = vld [vmem:[%s584] sm:$0xff]
        %805 = vset.pattern.permute.xlu0 0
        %806 = vperm.xlu0 %805, %v802
        %v807 = vpop.permute.xlu0 %806
        %v809 = vmul.f32 %v803, %v807
        %v810 = vld [vmem:[%s712] sm:$0xff]
        %v811 = vrcp.pop %v810
        %v812 = vld [vmem:[%s720] sm:$0xff]
        %814 = vset.pattern.permute.xlu0 0
        %815 = vperm.xlu0 %814, %v811
        %v816 = vpop.permute.xlu0 %815
        %v818 = vmul.f32 %v812, %v816
        %820 = vrot.lane.b32.xlu0 %v800, 16
        %v821 = vpop.permute.xlu0 %820
        %824 = vrot.lane.b32.xlu0 %v809, 32
        %v825 = vpop.permute.xlu0 %824
        %828 = vrot.lane.b32.xlu0 %v818, 48
        %v829 = vpop.permute.xlu0 %828
        %v831 = vsel %vm364, %v791, %v821
        %v832 = vsel %vm232, %v831, %v825
        %vm833 = vcmask 392192
        %v834 = vsel %vm833, %v832, %v829
        %v835 = vpack.c.bf16 %v834, %v834
        %vm836 = vcmask 519168
        %837 = vst.msk [vmem:[%s210] sm:$0xf] %vm836, %v835
      $region36: #{_lambda_.25} parent=27 // pred_fallthru
        _
      %p838 = scmp.lt.s32.totalorder %s18, 1
      %s839 = scalar_select %p838, %s18, 1
      %p840 = scmp.lt.s32.totalorder %s19, 0
      %s841 = scalar_select %p840, %s19, 0
      %s842 = sadd.s32 %s841, %s839
      %s843 = smul.addr %s842, 4
      %s844 = scalar_lea.vmem %s2, %s843
      // Predicated region
      $region37: #{_lambda_.25} parent=27 // pred_check
        %p845 = pneg %p108
      $region38: #{_lambda_.25} parent=27 // pred_check_branch
        %847 = sbr.rel (%p845) target = $region40
      $region39: #{_lambda_.25} parent=27 // pred_region
        _
      $region40: #{_lambda_.25} parent=27 // pred_fallthru
        _
    $region28: #{_lambda_.25} parent=5 // pred_fallthru
      _
    %p848 = scmp.le.s32.totalorder 2, %s8
    // Predicated region
    $region41: #{_lambda_.25} parent=5 // pred_check
      %p849 = pneg %p848
    $region42: #{_lambda_.25} parent=5 // pred_check_branch
      %851 = sbr.rel (%p849) target = $region44
    $region43: #{_lambda_.25} parent=5 // pred_region
      %s852 = ssub.s32 %s8, 2
      // Predicated region
      $region45: #{_lambda_.25} parent=43 // pred_check
        %p853 = pneg %p114
      $region46: #{_lambda_.25} parent=43 // pred_check_branch
        %855 = sbr.rel (%p853) target = $region48
      $region47: #{_lambda_.25} parent=43 // pred_region
        %p856 = scmp.lt.s32.totalorder %s21, 1
        %s857 = scalar_select %p856, %s21, 1
        %p858 = scmp.lt.s32.totalorder %s22, 0
        %s859 = scalar_select %p858, %s22, 0
        %s860 = sadd.s32 %s859, %s857
        %s861 = smul.addr %s860, 4
        %s862 = scalar_lea.vmem %s2, %s861
      $region48: #{_lambda_.25} parent=43 // pred_fallthru
        _
    $region44: #{_lambda_.25} parent=5 // pred_fallthru
      _
  $region6: #{_lambda_.25} parent=0 // loop_footer
    %s12 = sadd.s32 1, %s8
  $region7: #{_lambda_.25} parent=0 // loop_footer_branch
    %7 = sbr.rel target = $region3
  $region8: #{_lambda_.25} parent=0 // loop_exit
    _

// kernel: _lambda_.28
$region0: #{_lambda_.28}
  #allocation0 [shape = 'u32[]', space=smem, size = 0x4, offset = 0x4, fixed_abs, tag = 'smem constant byte address 0x4 - core index']
  #allocation1 [shape = 'u32[144,128]{1,0:T(1,128)}', space=vmem, size = 0x12000, scoped, tag = 'internal scratch']
  #allocation2 [shape = 'f32[16,64]{1,0:T(8,128)}', space=vmem, size = 0x2000, scoped, tag = 'scratch operand']
  %s0 = inlined_call_operand.vmem [shape: bf16[16,64], index: 0, kind: input, shape index: {}]
  %s1 = inlined_call_operand.vmem [shape: bf16[5,64,256], index: 1, kind: input, shape index: {}]
  %s2 = inlined_call_operand.vmem [shape: f32[5,1,256], index: 2, kind: input, shape index: {}]
  %s3 = inlined_call_operand.vmem [shape: bf16[5,256,64], index: 3, kind: input, shape index: {}]
  %s4 = inlined_call_operand.vmem [shape: f32[5,1,64], index: 4, kind: input, shape index: {}]
  %s5 = inlined_call_operand.vmem [shape: f32[5,16,1], index: 5, kind: input, shape index: {}]
  %s6 = inlined_call_operand.vmem [shape: f32[16,64], index: 6, kind: input, shape index: {}]
  %s7 = inlined_call_operand.vmem [shape: f32[16,64], index: 7, kind: output, shape index: {}]
  %s8 = sld [smem:[#allocation0]]
  $region69: #{_lambda_.28} parent=0
    _
  %s10 = ssub.s32 1, %s8
  %s11 = scalar_select 0, %s10, %s8
  loop: start=0, step=1, limit=7
  $region2: #{_lambda_.28} parent=0 // loop_pre_header
    _
  $region3: #{_lambda_.28} parent=0 // loop_header
    %s13 = sphi 0, %s17
    %p14 = scmp.ge.s32.totalorder %s13, 7
    %s20 = sphi 0, %s39
    %s21 = sphi 0, %s35
    %s22 = sphi 0, %s31
    %s23 = sphi 0, %s20
    %s24 = sphi 0, %s21
    %s25 = sphi 0, %s22
    %s26 = sphi 0, %s23
    %s27 = sphi 0, %s24
    %s28 = sphi 0, %s25
    %s42 = sphi 0, %s44
    %s45 = sphi 0, %s42
    %s46 = sphi 0, %s45
    %s62 = sphi 0, %s46
    %s70 = sphi 0, %s72
    %s73 = sphi 0, %s70
    %s74 = sphi 0, %s73
    %s90 = sphi 0, %s74
    %s98 = sphi 0, %s100
    %s101 = sphi 0, %s98
    %s102 = sphi 0, %s101
    %s118 = sphi 0, %s102
    %s126 = sphi 0, %s128
    %s129 = sphi 0, %s126
    %s130 = sphi 0, %s129
    %s146 = sphi 0, %s130
    %s152 = sphi 0, %s154
    %s155 = sphi 0, %s152
    %s156 = sphi 0, %s155
    %s172 = sphi 0, %s156
    %s180 = sphi 0, %s182
    %s183 = sphi 0, %s180
    %s184 = sphi 0, %s183
    %s200 = sphi 0, %s184
    %s206 = sphi 0, %s208
    %s209 = sphi 0, %s206
    %s210 = sphi 0, %s209
    %s226 = sphi 0, %s210
    %s232 = sphi 0, %s234
    %s235 = sphi 0, %s232
    %s236 = sphi 0, %s235
    %s252 = sphi 0, %s236
  $region4: #{_lambda_.28} parent=0 // loop_header_branch
    %16 = sbr.rel (%p14) target = $region8
  $region5: #{_lambda_.28} parent=0 // loop_body
    %s18 = ssub.s32 %s13, 1
    %s19 = ssub.s32 %s13, 2
    %s29 = sadd.s32 1, %s22
    %p30 = scmp.ge.s32.totalorder %s29, 1
    %s31 = scalar_select %p30, 0, %s29
    %s32 = sadd.s32 1, %s21
    %s33 = scalar_select %p30, %s32, %s21
    %p34 = scmp.ge.s32.totalorder %s33, 5
    %s35 = scalar_select %p34, 0, %s33
    %s36 = sadd.s32 1, %s20
    %s37 = scalar_select %p34, %s36, %s20
    %p38 = scmp.ge.s32.totalorder %s37, 1
    %s39 = scalar_select %p38, 0, %s37
    %s40 = ssub.s32 %s20, %s39
    %p41 = scmp.eq.s32.totalorder %s40, 0
    %s43 = sadd.s32 %s42, 1
    %s44 = scalar_select %p41, %s42, %s43
    %p47 = pneg %p41
    %p48 = scmp.eq.s32.totalorder %s13, 4
    %p49 = por %p47, %p48
    %p50 = scmp.ne.s32.totalorder %s42, %s45
    %p51 = scmp.eq.s32.totalorder %s13, 0
    %p52 = por %p50, %p51
    %p53 = scmp.ne.s32.totalorder %s42, %s45
    %p54 = scmp.eq.s32.totalorder %s18, 4
    %p55 = por %p53, %p54
    %p56 = scmp.ne.s32.totalorder %s45, %s46
    %p57 = scmp.eq.s32.totalorder %s18, 0
    %p58 = por %p56, %p57
    %p59 = scmp.ne.s32.totalorder %s45, %s46
    %p60 = scmp.eq.s32.totalorder %s19, 4
    %p61 = por %p59, %p60
    %p63 = scmp.ne.s32.totalorder %s46, %s62
    %p64 = scmp.eq.s32.totalorder %s19, 0
    %p65 = por %p63, %p64
    %s66 = ssub.s32 %s21, %s35
    %s67 = ssub.s32 %s22, %s31
    %s68 = sor.u32 %s66, %s67
    %p69 = scmp.eq.s32.totalorder %s68, 0
    %s71 = sadd.s32 %s70, 1
    %s72 = scalar_select %p69, %s70, %s71
    %p75 = pneg %p69
    %p76 = scmp.eq.s32.totalorder %s13, 4
    %p77 = por %p75, %p76
    %p78 = scmp.ne.s32.totalorder %s70, %s73
    %p79 = scmp.eq.s32.totalorder %s13, 0
    %p80 = por %p78, %p79
    %p81 = scmp.ne.s32.totalorder %s70, %s73
    %p82 = scmp.eq.s32.totalorder %s18, 4
    %p83 = por %p81, %p82
    %p84 = scmp.ne.s32.totalorder %s73, %s74
    %p85 = scmp.eq.s32.totalorder %s18, 0
    %p86 = por %p84, %p85
    %p87 = scmp.ne.s32.totalorder %s73, %s74
    %p88 = scmp.eq.s32.totalorder %s19, 4
    %p89 = por %p87, %p88
    %p91 = scmp.ne.s32.totalorder %s74, %s90
    %p92 = scmp.eq.s32.totalorder %s19, 0
    %p93 = por %p91, %p92
    %s94 = ssub.s32 %s21, %s35
    %s95 = ssub.s32 %s22, %s31
    %s96 = sor.u32 %s94, %s95
    %p97 = scmp.eq.s32.totalorder %s96, 0
    %s99 = sadd.s32 %s98, 1
    %s100 = scalar_select %p97, %s98, %s99
    %p103 = pneg %p97
    %p104 = scmp.eq.s32.totalorder %s13, 4
    %p105 = por %p103, %p104
    %p106 = scmp.ne.s32.totalorder %s98, %s101
    %p107 = scmp.eq.s32.totalorder %s13, 0
    %p108 = por %p106, %p107
    %p109 = scmp.ne.s32.totalorder %s98, %s101
    %p110 = scmp.eq.s32.totalorder %s18, 4
    %p111 = por %p109, %p110
    %p112 = scmp.ne.s32.totalorder %s101, %s102
    %p113 = scmp.eq.s32.totalorder %s18, 0
    %p114 = por %p112, %p113
    %p115 = scmp.ne.s32.totalorder %s101, %s102
    %p116 = scmp.eq.s32.totalorder %s19, 4
    %p117 = por %p115, %p116
    %p119 = scmp.ne.s32.totalorder %s102, %s118
    %p120 = scmp.eq.s32.totalorder %s19, 0
    %p121 = por %p119, %p120
    %s122 = ssub.s32 %s21, %s35
    %s123 = ssub.s32 %s22, %s31
    %s124 = sor.u32 %s122, %s123
    %p125 = scmp.eq.s32.totalorder %s124, 0
    %s127 = sadd.s32 %s126, 1
    %s128 = scalar_select %p125, %s126, %s127
    %p131 = pneg %p125
    %p132 = scmp.eq.s32.totalorder %s13, 4
    %p133 = por %p131, %p132
    %p134 = scmp.ne.s32.totalorder %s126, %s129
    %p135 = scmp.eq.s32.totalorder %s13, 0
    %p136 = por %p134, %p135
    %p137 = scmp.ne.s32.totalorder %s126, %s129
    %p138 = scmp.eq.s32.totalorder %s18, 4
    %p139 = por %p137, %p138
    %p140 = scmp.ne.s32.totalorder %s129, %s130
    %p141 = scmp.eq.s32.totalorder %s18, 0
    %p142 = por %p140, %p141
    %p143 = scmp.ne.s32.totalorder %s129, %s130
    %p144 = scmp.eq.s32.totalorder %s19, 4
    %p145 = por %p143, %p144
    %p147 = scmp.ne.s32.totalorder %s130, %s146
    %p148 = scmp.eq.s32.totalorder %s19, 0
    %p149 = por %p147, %p148
    %s150 = ssub.s32 %s21, %s35
    %p151 = scmp.eq.s32.totalorder %s150, 0
    %s153 = sadd.s32 %s152, 1
    %s154 = scalar_select %p151, %s152, %s153
    %p157 = pneg %p151
    %p158 = scmp.eq.s32.totalorder %s13, 4
    %p159 = por %p157, %p158
    %p160 = scmp.ne.s32.totalorder %s152, %s155
    %p161 = scmp.eq.s32.totalorder %s13, 0
    %p162 = por %p160, %p161
    %p163 = scmp.ne.s32.totalorder %s152, %s155
    %p164 = scmp.eq.s32.totalorder %s18, 4
    %p165 = por %p163, %p164
    %p166 = scmp.ne.s32.totalorder %s155, %s156
    %p167 = scmp.eq.s32.totalorder %s18, 0
    %p168 = por %p166, %p167
    %p169 = scmp.ne.s32.totalorder %s155, %s156
    %p170 = scmp.eq.s32.totalorder %s19, 4
    %p171 = por %p169, %p170
    %p173 = scmp.ne.s32.totalorder %s156, %s172
    %p174 = scmp.eq.s32.totalorder %s19, 0
    %p175 = por %p173, %p174
    %s176 = ssub.s32 %s21, %s35
    %s177 = ssub.s32 %s20, %s39
    %s178 = sor.u32 %s176, %s177
    %p179 = scmp.eq.s32.totalorder %s178, 0
    %s181 = sadd.s32 %s180, 1
    %s182 = scalar_select %p179, %s180, %s181
    %p185 = pneg %p179
    %p186 = scmp.eq.s32.totalorder %s13, 4
    %p187 = por %p185, %p186
    %p188 = scmp.ne.s32.totalorder %s180, %s183
    %p189 = scmp.eq.s32.totalorder %s13, 0
    %p190 = por %p188, %p189
    %p191 = scmp.ne.s32.totalorder %s180, %s183
    %p192 = scmp.eq.s32.totalorder %s18, 4
    %p193 = por %p191, %p192
    %p194 = scmp.ne.s32.totalorder %s183, %s184
    %p195 = scmp.eq.s32.totalorder %s18, 0
    %p196 = por %p194, %p195
    %p197 = scmp.ne.s32.totalorder %s183, %s184
    %p198 = scmp.eq.s32.totalorder %s19, 4
    %p199 = por %p197, %p198
    %p201 = scmp.ne.s32.totalorder %s184, %s200
    %p202 = scmp.eq.s32.totalorder %s19, 0
    %p203 = por %p201, %p202
    %s204 = ssub.s32 %s20, %s39
    %p205 = scmp.eq.s32.totalorder %s204, 0
    %s207 = sadd.s32 %s206, 1
    %s208 = scalar_select %p205, %s206, %s207
    %p211 = pneg %p205
    %p212 = scmp.eq.s32.totalorder %s13, 4
    %p213 = por %p211, %p212
    %p214 = scmp.ne.s32.totalorder %s206, %s209
    %p215 = scmp.eq.s32.totalorder %s13, 0
    %p216 = por %p214, %p215
    %p217 = scmp.ne.s32.totalorder %s206, %s209
    %p218 = scmp.eq.s32.totalorder %s18, 4
    %p219 = por %p217, %p218
    %p220 = scmp.ne.s32.totalorder %s209, %s210
    %p221 = scmp.eq.s32.totalorder %s18, 0
    %p222 = por %p220, %p221
    %p223 = scmp.ne.s32.totalorder %s209, %s210
    %p224 = scmp.eq.s32.totalorder %s19, 4
    %p225 = por %p223, %p224
    %p227 = scmp.ne.s32.totalorder %s210, %s226
    %p228 = scmp.eq.s32.totalorder %s19, 0
    %p229 = por %p227, %p228
    %s230 = ssub.s32 %s20, %s39
    %p231 = scmp.eq.s32.totalorder %s230, 0
    %s233 = sadd.s32 %s232, 1
    %s234 = scalar_select %p231, %s232, %s233
    %p237 = pneg %p231
    %p238 = scmp.eq.s32.totalorder %s13, 4
    %p239 = por %p237, %p238
    %p240 = scmp.ne.s32.totalorder %s232, %s235
    %p241 = scmp.eq.s32.totalorder %s13, 0
    %p242 = por %p240, %p241
    %p243 = scmp.ne.s32.totalorder %s232, %s235
    %p244 = scmp.eq.s32.totalorder %s18, 4
    %p245 = por %p243, %p244
    %p246 = scmp.ne.s32.totalorder %s235, %s236
    %p247 = scmp.eq.s32.totalorder %s18, 0
    %p248 = por %p246, %p247
    %p249 = scmp.ne.s32.totalorder %s235, %s236
    %p250 = scmp.eq.s32.totalorder %s19, 4
    %p251 = por %p249, %p250
    %p253 = scmp.ne.s32.totalorder %s236, %s252
    %p254 = scmp.eq.s32.totalorder %s19, 0
    %p255 = por %p253, %p254
    %p256 = scmp.le.s32.totalorder 1, %s13
    %p257 = scmp.lt.s32.totalorder %s13, 6
    %p258 = pnand %p256, %p257
    %p259 = pneg %p258
    // Predicated region
    $region9: #{_lambda_.28} parent=5 // pred_check
      _
    $region10: #{_lambda_.28} parent=5 // pred_check_branch
      %261 = sbr.rel (%p258) target = $region12
    $region11: #{_lambda_.28} parent=5 // pred_region
      %s262 = ssub.s32 %s13, 1
      // Predicated region
      $region13: #{_lambda_.28} parent=11 // pred_check
        %p263 = pneg %p58
      $region14: #{_lambda_.28} parent=11 // pred_check_branch
        %265 = sbr.rel (%p263) target = $region16
      $region15: #{_lambda_.28} parent=11 // pred_region
        %s266 = smul.u32 2, %s23
        %p267 = scmp.lt.s32.totalorder %s266, 1
        %s268 = scalar_select %p267, %s266, 1
        %s269 = smul.addr %s268, 4
        %s270 = scalar_lea.vmem %s0, %s269
        %s271 = smul.u32 2, %s23
      $region16: #{_lambda_.28} parent=11 // pred_fallthru
        _
      // Predicated region
      $region17: #{_lambda_.28} parent=11 // pred_check
        %p272 = pneg %p222
      $region18: #{_lambda_.28} parent=11 // pred_check_branch
        %274 = sbr.rel (%p272) target = $region20
      $region19: #{_lambda_.28} parent=11 // pred_region
        %s275 = smul.u32 2, %s23
        %p276 = scmp.lt.s32.totalorder %s275, 1
        %s277 = scalar_select %p276, %s275, 1
        %s278 = smul.addr %s277, 8
        %s279 = scalar_lea.vmem %s6, %s278
        %s280 = smul.u32 2, %s23
      $region20: #{_lambda_.28} parent=11 // pred_fallthru
        _
    $region12: #{_lambda_.28} parent=5 // pred_fallthru
      _
    %p281 = scmp.lt.s32.totalorder %s13, 5
    // Predicated region
    $region21: #{_lambda_.28} parent=5 // pred_check
      %p282 = pneg %p281
    $region22: #{_lambda_.28} parent=5 // pred_check_branch
      %284 = sbr.rel (%p282) target = $region24
    $region23: #{_lambda_.28} parent=5 // pred_region
      // Predicated region
      $region25: #{_lambda_.28} parent=23 // pred_check
        %p285 = pneg %p80
      $region26: #{_lambda_.28} parent=23 // pred_check_branch
        %287 = sbr.rel (%p285) target = $region28
      $region27: #{_lambda_.28} parent=23 // pred_region
        %s288 = smul.u32 2, %s22
        %p289 = scmp.lt.s32.totalorder %s21, 4
        %s290 = scalar_select %p289, %s21, 4
        %p291 = scmp.lt.s32.totalorder %s288, 1
        %s292 = scalar_select %p291, %s288, 1
        %s293 = smul.addr %s290, 16
        %s294 = sadd.s32 %s292, %s293
        %s295 = smul.addr %s294, 4
        %s296 = scalar_lea.vmem %s1, %s295
        %s297 = smul.u32 2, %s22
      $region28: #{_lambda_.28} parent=23 // pred_fallthru
        _
      // Predicated region
      $region29: #{_lambda_.28} parent=23 // pred_check
        %p298 = pneg %p108
      $region30: #{_lambda_.28} parent=23 // pred_check_branch
        %300 = sbr.rel (%p298) target = $region32
      $region31: #{_lambda_.28} parent=23 // pred_region
        %s301 = smul.u32 2, %s22
        %p302 = scmp.lt.s32.totalorder %s21, 4
        %s303 = scalar_select %p302, %s21, 4
        %p304 = scmp.lt.s32.totalorder %s301, 1
        %s305 = scalar_select %p304, %s301, 1
        %s306 = smul.addr %s303, 2
        %s307 = sadd.s32 %s305, %s306
        %s308 = scalar_lea.vmem %s2, %s307
        %s309 = smul.u32 2, %s22
      $region32: #{_lambda_.28} parent=23 // pred_fallthru
        _
      // Predicated region
      $region33: #{_lambda_.28} parent=23 // pred_check
        %p310 = pneg %p136
      $region34: #{_lambda_.28} parent=23 // pred_check_branch
        %312 = sbr.rel (%p310) target = $region36
      $region35: #{_lambda_.28} parent=23 // pred_region
        %s313 = smul.u32 32, %s22
        %p314 = scmp.lt.s32.totalorder %s21, 4
        %s315 = scalar_select %p314, %s21, 4
        %p316 = scmp.lt.s32.totalorder %s313, 31
        %s317 = scalar_select %p316, %s313, 31
        %s318 = smul.addr %s315, 32
        %s319 = sadd.s32 %s317, %s318
        %s320 = smul.addr %s319, 4
        %s321 = scalar_lea.vmem %s3, %s320
        %s322 = smul.u32 32, %s22
      $region36: #{_lambda_.28} parent=23 // pred_fallthru
        _
      // Predicated region
      $region37: #{_lambda_.28} parent=23 // pred_check
        %p323 = pneg %p162
      $region38: #{_lambda_.28} parent=23 // pred_check_branch
        %325 = sbr.rel (%p323) target = $region40
      $region39: #{_lambda_.28} parent=23 // pred_region
        %p326 = scmp.lt.s32.totalorder %s21, 4
        %s327 = scalar_select %p326, %s21, 4
        %s328 = scalar_lea.vmem %s4, %s327
      $region40: #{_lambda_.28} parent=23 // pred_fallthru
        _
      // Predicated region
      $region41: #{_lambda_.28} parent=23 // pred_check
        %p329 = pneg %p190
      $region42: #{_lambda_.28} parent=23 // pred_check_branch
        %331 = sbr.rel (%p329) target = $region44
      $region43: #{_lambda_.28} parent=23 // pred_region
        %s332 = smul.u32 2, %s20
        %p333 = scmp.lt.s32.totalorder %s21, 4
        %s334 = scalar_select %p333, %s21, 4
        %p335 = scmp.lt.s32.totalorder %s332, 1
        %s336 = scalar_select %p335, %s332, 1
        %s337 = smul.addr %s334, 2
        %s338 = sadd.s32 %s336, %s337
        %s339 = smul.addr %s338, 8
        %s340 = scalar_lea.vmem %s5, %s339
        %s341 = smul.u32 2, %s20
      $region44: #{_lambda_.28} parent=23 // pred_fallthru
        _
    $region24: #{_lambda_.28} parent=5 // pred_fallthru
      _
    %p342 = scmp.le.s32.totalorder 1, %s13
    %p343 = scmp.lt.s32.totalorder %s13, 6
    %p344 = pnand %p342, %p343
    %p345 = pneg %p344
    // Predicated region
    $region45: #{_lambda_.28} parent=5 // pred_check
      _
    $region46: #{_lambda_.28} parent=5 // pred_check_branch
      %347 = sbr.rel (%p344) target = $region48
    $region47: #{_lambda_.28} parent=5 // pred_region
      %s348 = ssub.s32 %s13, 1
      %s349 = smul.u32 2, %s23
      %p350 = scmp.lt.s32.totalorder %s349, 1
      %s351 = scalar_select %p350, %s349, 1
      %s352 = smul.addr %s351, 4
      %s353 = scalar_lea.vmem %s0, %s352
      %p354 = pneg %p58
      %p355 = pneg %p55
      %s356 = smul.u32 2, %s25
      %p357 = scmp.lt.s32.totalorder %s24, 4
      %s358 = scalar_select %p357, %s24, 4
      %p359 = scmp.lt.s32.totalorder %s356, 1
      %s360 = scalar_select %p359, %s356, 1
      %s361 = smul.addr %s358, 16
      %s362 = sadd.s32 %s360, %s361
      %s363 = smul.addr %s362, 4
      %s364 = scalar_lea.vmem %s1, %s363
      %p365 = pneg %p86
      %p366 = pneg %p83
      %s367 = smul.u32 2, %s25
      %p368 = scmp.lt.s32.totalorder %s24, 4
      %s369 = scalar_select %p368, %s24, 4
      %p370 = scmp.lt.s32.totalorder %s367, 1
      %s371 = scalar_select %p370, %s367, 1
      %s372 = smul.addr %s369, 2
      %s373 = sadd.s32 %s371, %s372
      %s374 = scalar_lea.vmem %s2, %s373
      %p375 = pneg %p114
      %p376 = pneg %p111
      %s377 = smul.u32 32, %s25
      %p378 = scmp.lt.s32.totalorder %s24, 4
      %s379 = scalar_select %p378, %s24, 4
      %p380 = scmp.lt.s32.totalorder %s377, 31
      %s381 = scalar_select %p380, %s377, 31
      %s382 = smul.addr %s379, 32
      %s383 = sadd.s32 %s381, %s382
      %s384 = smul.addr %s383, 4
      %s385 = scalar_lea.vmem %s3, %s384
      %p386 = pneg %p142
      %p387 = pneg %p139
      %p388 = scmp.lt.s32.totalorder %s24, 4
      %s389 = scalar_select %p388, %s24, 4
      %s390 = scalar_lea.vmem %s4, %s389
      %p391 = pneg %p168
      %p392 = pneg %p165
      %s393 = smul.u32 2, %s23
      %p394 = scmp.lt.s32.totalorder %s24, 4
      %s395 = scalar_select %p394, %s24, 4
      %p396 = scmp.lt.s32.totalorder %s393, 1
      %s397 = scalar_select %p396, %s393, 1
      %s398 = smul.addr %s395, 2
      %s399 = sadd.s32 %s397, %s398
      %s400 = smul.addr %s399, 8
      %s401 = scalar_lea.vmem %s5, %s400
      %p402 = pneg %p196
      %p403 = pneg %p193
      %s404 = smul.u32 2, %s23
      %p405 = scmp.lt.s32.totalorder %s404, 1
      %s406 = scalar_select %p405, %s404, 1
      %s407 = smul.addr %s406, 8
      %s408 = scalar_lea.vmem %s6, %s407
      %p409 = pneg %p222
      %p410 = pneg %p219
      %p411 = pneg %p248
      %p412 = pneg %p245
      %s413 = smul.u32 2, %s23
      %p414 = scmp.lt.s32.totalorder %s413, 1
      %s415 = scalar_select %p414, %s413, 1
      %s416 = smul.addr %s415, 8
      %s417 = scalar_lea.vmem %s7, %s416
      %s418 = smul.u32 2, %s23
      %p419 = scmp.lt.s32.totalorder %s418, 1
      %s420 = scalar_select %p419, %s418, 1
      %s421 = smul.addr %s420, 4
      %s422 = scalar_lea.vmem %s0, %s421
      %s423 = smul.u32 2, %s23
      %s424 = smul.u32 2, %s25
      %p425 = scmp.lt.s32.totalorder %s24, 4
      %s426 = scalar_select %p425, %s24, 4
      %p427 = scmp.lt.s32.totalorder %s424, 1
      %s428 = scalar_select %p427, %s424, 1
      %s429 = smul.addr %s426, 16
      %s430 = sadd.s32 %s428, %s429
      %s431 = smul.addr %s430, 4
      %s432 = scalar_lea.vmem %s1, %s431
      %s433 = smul.u32 2, %s25
      %s434 = smul.u32 2, %s25
      %p435 = scmp.lt.s32.totalorder %s24, 4
      %s436 = scalar_select %p435, %s24, 4
      %p437 = scmp.lt.s32.totalorder %s434, 1
      %s438 = scalar_select %p437, %s434, 1
      %s439 = smul.addr %s436, 2
      %s440 = sadd.s32 %s438, %s439
      %s441 = scalar_lea.vmem %s2, %s440
      %s442 = smul.u32 2, %s25
      %s443 = smul.u32 32, %s25
      %p444 = scmp.lt.s32.totalorder %s24, 4
      %s445 = scalar_select %p444, %s24, 4
      %p446 = scmp.lt.s32.totalorder %s443, 31
      %s447 = scalar_select %p446, %s443, 31
      %s448 = smul.addr %s445, 32
      %s449 = sadd.s32 %s447, %s448
      %s450 = smul.addr %s449, 4
      %s451 = scalar_lea.vmem %s3, %s450
      %s452 = smul.u32 32, %s25
      %p453 = scmp.lt.s32.totalorder %s24, 4
      %s454 = scalar_select %p453, %s24, 4
      %s455 = scalar_lea.vmem %s4, %s454
      %s456 = smul.u32 2, %s23
      %p457 = scmp.lt.s32.totalorder %s24, 4
      %s458 = scalar_select %p457, %s24, 4
      %p459 = scmp.lt.s32.totalorder %s456, 1
      %s460 = scalar_select %p459, %s456, 1
      %s461 = smul.addr %s458, 2
      %s462 = sadd.s32 %s460, %s461
      %s463 = smul.addr %s462, 8
      %s464 = scalar_lea.vmem %s5, %s463
      %s465 = smul.u32 2, %s23
      %s466 = smul.u32 2, %s23
      %p467 = scmp.lt.s32.totalorder %s466, 1
      %s468 = scalar_select %p467, %s466, 1
      %s469 = smul.addr %s468, 8
      %s470 = scalar_lea.vmem %s6, %s469
      %s471 = smul.u32 2, %s23
      %s472 = smul.u32 2, %s23
      %p473 = scmp.lt.s32.totalorder %s472, 1
      %s474 = scalar_select %p473, %s472, 1
      %s475 = smul.addr %s474, 8
      %s476 = scalar_lea.vmem %s7, %s475
      %s477 = smul.u32 2, %s23
      %p479 = scmp.eq.s32.totalorder %s24, 0
      %p480 = scmp.eq.s32.totalorder %s25, 0
      %p481 = pnand %p479, %p480
      %p482 = pneg %p481
      // Predicated region
      $region49: #{_lambda_.28} parent=47 // pred_check
        _
      $region50: #{_lambda_.28} parent=47 // pred_check_branch
        %484 = sbr.rel (%p481) target = $region52
      $region51: #{_lambda_.28} parent=47 // pred_region
        %vm485 = vcmask 523264
        %486 = vst.msk [vmem:[#allocation2] sm:$0xff] %vm485, 0.0
        %487 = vst.msk [vmem:[#allocation2 + $0x8] sm:$0xff] %vm485, 0.0
      $region52: #{_lambda_.28} parent=47 // pred_fallthru
        _
      %v488 = vld [vmem:[%s422] sm:$0xf]
      %v489 = vld [vmem:[%s422 + $0x4] sm:$0xf]
      %v490 = vld [vmem:[%s432] sm:$0xff]
      %v491 = vld [vmem:[%s432 + $0x8] sm:$0xff]
      %v492 = vld [vmem:[%s432 + $0x10] sm:$0xff]
      %v493 = vld [vmem:[%s432 + $0x18] sm:$0xff]
      %v494 = vld [vmem:[%s432 + $0x20] sm:$0xff]
      %v495 = vld [vmem:[%s432 + $0x28] sm:$0xff]
      %v496 = vld [vmem:[%s432 + $0x30] sm:$0xff]
      %v497 = vld [vmem:[%s432 + $0x38] sm:$0xff]
      %v498 = vld [vmem:[%s441] sm:$0x3]
      %v500 = vlaneseq
      %v501 = vshrl.u32 %v500, 7
      %v502 = vsub.s32 0, %v501
      %v503 = vrot.slane %v498, %v502
      %v504 = vlaneseq
      %v505 = vshrl.u32 %v504, 7
      %v506 = vsub.s32 1, %v505
      %v507 = vrot.slane %v498, %v506
      %v512 = vunpack.c.l.b16 %v488
      %v513 = vunpack.c.l.b16 %v489
      %v514 = vpack.c.b16 %v513, %v512
      %v523 = vunpack.c.l.b16 %v490
      %v524 = vunpack.c.h.b16 %v490
      %v525 = vunpack.c.l.b16 %v491
      %v526 = vunpack.c.h.b16 %v491
      %v527 = vunpack.c.l.b16 %v492
      %v528 = vunpack.c.h.b16 %v492
      %v529 = vunpack.c.l.b16 %v493
      %v530 = vunpack.c.h.b16 %v493
      %v531 = vunpack.c.l.b16 %v494
      %v532 = vunpack.c.h.b16 %v494
      %v533 = vunpack.c.l.b16 %v495
      %v534 = vunpack.c.h.b16 %v495
      %v535 = vunpack.c.l.b16 %v496
      %v536 = vunpack.c.h.b16 %v496
      %v537 = vunpack.c.l.b16 %v497
      %v538 = vunpack.c.h.b16 %v497
      %v539 = vpack.c.b16 %v525, %v523
      %v540 = vpack.c.b16 %v526, %v524
      %v541 = vpack.c.b16 %v529, %v527
      %v542 = vpack.c.b16 %v530, %v528
      %v543 = vpack.c.b16 %v533, %v531
      %v544 = vpack.c.b16 %v534, %v532
      %v545 = vpack.c.b16 %v537, %v535
      %v546 = vpack.c.b16 %v538, %v536
      %vm555 = vcmask 523264
      %v557 = vsel %vm555, %v514, 0
      %559 = vmatprep.subr.bf16.mxu0 %v540
      %560 = vmatpush1.bf16.msra.mxu0 %v539
      %561 = vmatprep.subr.bf16.mxu0 %v542
      %562 = vmatpush1.bf16.msra.mxu0 %v541
      %563 = vmatprep.subr.bf16.mxu0 %v544
      %564 = vmatpush1.bf16.msra.mxu0 %v543
      %565 = vmatprep.subr.bf16.mxu0 %v546
      %566 = vmatpush1.bf16.msra.mxu0 %v545
      %567 = vmatprep.subr.bf16.mxu0 0
      %568 = vmatpush1.bf16.msra.mxu0 0
      %569 = vmatprep.subr.bf16.mxu0 0
      %570 = vmatpush1.bf16.msra.mxu0 0
      %571 = vmatprep.subr.bf16.mxu0 0
      %572 = vmatpush1.bf16.msra.mxu0 0
      %573 = vmatprep.subr.bf16.mxu0 0
      %574 = vmatpush1.bf16.msra.mxu0 0
      %575 = vmatprep.subr.bf16.mxu0 0
      %576 = vmatpush1.bf16.msra.mxu0 0
      %577 = vmatprep.subr.bf16.mxu0 0
      %578 = vmatpush1.bf16.msra.mxu0 0
      %579 = vmatprep.subr.bf16.mxu0 0
      %580 = vmatpush1.bf16.msra.mxu0 0
      %581 = vmatprep.subr.bf16.mxu0 0
      %582 = vmatpush1.bf16.msra.mxu0 0
      %583 = vmatprep.subr.bf16.mxu0 0
      %584 = vmatpush1.bf16.msra.mxu0 0
      %585 = vmatprep.subr.bf16.mxu0 0
      %586 = vmatpush1.bf16.msra.mxu0 0
      %587 = vmatprep.subr.bf16.mxu0 0
      %588 = vmatpush1.bf16.msra.mxu0 0
      %589 = vmatprep.subr.bf16.mxu0 0
      %590 = vmatpush1.bf16.msra.mxu0 0
      %591 = vmatprep.mubr.bf16.mxu0 0
      %592 = vmatmul.mubr.bf16.gmra.mrb[0].mxu0 %v557
      %v593 = vpop.f32.mrb[0].mxu0
      %v594 = vadd.f32 %v503, %v593
      %v595 = vpop.f32.mrb[0].mxu0
      %v596 = vadd.f32 %v507, %v595
      %v597 = vpop.f32.mrb[0].mxu0
      %v598 = vadd.f32 %v503, %v597
      %v599 = vpop.f32.mrb[0].mxu0
      %v600 = vadd.f32 %v507, %v599
      %601 = vdwg.mxu0
      %v602 = vmul.f32 %v594, 0.5
      %v603 = vmul.f32 %v596, 0.5
      %v604 = vmul.f32 %v598, 0.5
      %v605 = vmul.f32 %v600, 0.5
      %v606 = vmul.f32 %v594, 0.70710677
      %v607 = vmul.f32 %v596, 0.70710677
      %v608 = vmul.f32 %v598, 0.70710677
      %v609 = vmul.f32 %v600, 0.70710677
      %vm610 = vcmp.ge.f32.partialorder %v606, 0.0
      %vm611 = vcmp.ge.f32.partialorder %v607, 0.0
      %vm612 = vcmp.ge.f32.partialorder %v608, 0.0
      %vm613 = vcmp.ge.f32.partialorder %v609, 0.0
      %v614 = vsel %vm610, 1.0, -1.0
      %v615 = vsel %vm611, 1.0, -1.0
      %v616 = vsel %vm612, 1.0, -1.0
      %v617 = vsel %vm613, 1.0, -1.0
      %v618 = vand.u32 2147483647, %v606
      %v619 = vand.u32 2147483647, %v607
      %v620 = vand.u32 2147483647, %v608
      %v621 = vand.u32 2147483647, %v609
      %v622 = vmul.f32 %v618, 0.3275911
      %v623 = vmul.f32 %v619, 0.3275911
      %v624 = vmul.f32 %v620, 0.3275911
      %v625 = vmul.f32 %v621, 0.3275911
      %v626 = vadd.f32 %v622, 1.0
      %v627 = vadd.f32 %v623, 1.0
      %v628 = vadd.f32 %v624, 1.0
      %v629 = vadd.f32 %v625, 1.0
      %v630 = vrcp.pop %v626
      %v631 = vrcp.pop %v627
      %v632 = vrcp.pop %v628
      %v633 = vrcp.pop %v629
      %v634 = vmul.f32 %v630, 1.0614054
      %v635 = vmul.f32 %v631, 1.0614054
      %v636 = vmul.f32 %v632, 1.0614054
      %v637 = vmul.f32 %v633, 1.0614054
      %v638 = vadd.f32 %v634, -1.4531521
      %v639 = vadd.f32 %v635, -1.4531521
      %v640 = vadd.f32 %v636, -1.4531521
      %v641 = vadd.f32 %v637, -1.4531521
      %v642 = vmul.f32 %v638, %v630
      %v643 = vmul.f32 %v639, %v631
      %v644 = vmul.f32 %v640, %v632
      %v645 = vmul.f32 %v641, %v633
      %v646 = vadd.f32 %v642, 1.4214138
      %v647 = vadd.f32 %v643, 1.4214138
      %v648 = vadd.f32 %v644, 1.4214138
      %v649 = vadd.f32 %v645, 1.4214138
      %v650 = vmul.f32 %v646, %v630
      %v651 = vmul.f32 %v647, %v631
      %v652 = vmul.f32 %v648, %v632
      %v653 = vmul.f32 %v649, %v633
      %v654 = vadd.f32 %v650, -0.28449672
      %v655 = vadd.f32 %v651, -0.28449672
      %v656 = vadd.f32 %v652, -0.28449672
      %v657 = vadd.f32 %v653, -0.28449672
      %v658 = vmul.f32 %v654, %v630
      %v659 = vmul.f32 %v655, %v631
      %v660 = vmul.f32 %v656, %v632
      %v661 = vmul.f32 %v657, %v633
      %v662 = vadd.f32 %v658, 0.2548296
      %v663 = vadd.f32 %v659, 0.2548296
      %v664 = vadd.f32 %v660, 0.2548296
      %v665 = vadd.f32 %v661, 0.2548296
      %v666 = vmul.f32 %v662, %v630
      %v667 = vmul.f32 %v663, %v631
      %v668 = vmul.f32 %v664, %v632
      %v669 = vmul.f32 %v665, %v633
      %v670 = vsub.f32 0.0, %v618
      %v671 = vsub.f32 0.0, %v619
      %v672 = vsub.f32 0.0, %v620
      %v673 = vsub.f32 0.0, %v621
      %v674 = vmul.f32 %v670, %v618
      %v675 = vmul.f32 %v671, %v619
      %v676 = vmul.f32 %v672, %v620
      %v677 = vmul.f32 %v673, %v621
      %v678 = vmul.f32 %v674, 1.442695
      %v679 = vpow.pop %v678
      %v680 = vmul.f32 %v675, 1.442695
      %v681 = vpow.pop %v680
      %v682 = vmul.f32 %v676, 1.442695
      %v683 = vpow.pop %v682
      %v684 = vmul.f32 %v677, 1.442695
      %v685 = vpow.pop %v684
      %v686 = vmul.f32 %v666, %v679
      %v687 = vmul.f32 %v667, %v681
      %v688 = vmul.f32 %v668, %v683
      %v689 = vmul.f32 %v669, %v685
      %v690 = vsub.f32 1.0, %v686
      %v691 = vsub.f32 1.0, %v687
      %v692 = vsub.f32 1.0, %v688
      %v693 = vsub.f32 1.0, %v689
      %v694 = vmul.f32 %v614, %v690
      %v695 = vmul.f32 %v615, %v691
      %v696 = vmul.f32 %v616, %v692
      %v697 = vmul.f32 %v617, %v693
      %v698 = vadd.f32 %v694, 1.0
      %v699 = vadd.f32 %v695, 1.0
      %v700 = vadd.f32 %v696, 1.0
      %v701 = vadd.f32 %v697, 1.0
      %v702 = vmul.f32 %v602, %v698
      %v703 = vmul.f32 %v603, %v699
      %v704 = vmul.f32 %v604, %v700
      %v705 = vmul.f32 %v605, %v701
      %v706 = vpack.c.bf16 %v704, %v702
      %v707 = vpack.c.bf16 %v705, %v703
      %v708 = vld [vmem:[%s451] sm:$0xf]
      %v709 = vld [vmem:[%s451 + $0x4] sm:$0xf]
      %v710 = vld [vmem:[%s451 + $0x8] sm:$0xf]
      %v711 = vld [vmem:[%s451 + $0xc] sm:$0xf]
      %v712 = vld [vmem:[%s451 + $0x10] sm:$0xf]
      %v713 = vld [vmem:[%s451 + $0x14] sm:$0xf]
      %v714 = vld [vmem:[%s451 + $0x18] sm:$0xf]
      %v715 = vld [vmem:[%s451 + $0x1c] sm:$0xf]
      %v716 = vld [vmem:[%s451 + $0x20] sm:$0xf]
      %v717 = vld [vmem:[%s451 + $0x24] sm:$0xf]
      %v718 = vld [vmem:[%s451 + $0x28] sm:$0xf]
      %v719 = vld [vmem:[%s451 + $0x2c] sm:$0xf]
      %v720 = vld [vmem:[%s451 + $0x30] sm:$0xf]
      %v721 = vld [vmem:[%s451 + $0x34] sm:$0xf]
      %v722 = vld [vmem:[%s451 + $0x38] sm:$0xf]
      %v723 = vld [vmem:[%s451 + $0x3c] sm:$0xf]
      %v724 = vld [vmem:[%s451 + $0x40] sm:$0xf]
      %v725 = vld [vmem:[%s451 + $0x44] sm:$0xf]
      %v726 = vld [vmem:[%s451 + $0x48] sm:$0xf]
      %v727 = vld [vmem:[%s451 + $0x4c] sm:$0xf]
      %v728 = vld [vmem:[%s451 + $0x50] sm:$0xf]
      %v729 = vld [vmem:[%s451 + $0x54] sm:$0xf]
      %v730 = vld [vmem:[%s451 + $0x58] sm:$0xf]
      %v731 = vld [vmem:[%s451 + $0x5c] sm:$0xf]
      %v732 = vld [vmem:[%s451 + $0x60] sm:$0xf]
      %v733 = vld [vmem:[%s451 + $0x64] sm:$0xf]
      %v734 = vld [vmem:[%s451 + $0x68] sm:$0xf]
      %v735 = vld [vmem:[%s451 + $0x6c] sm:$0xf]
      %v736 = vld [vmem:[%s451 + $0x70] sm:$0xf]
      %v737 = vld [vmem:[%s451 + $0x74] sm:$0xf]
      %v738 = vld [vmem:[%s451 + $0x78] sm:$0xf]
      %v739 = vld [vmem:[%s451 + $0x7c] sm:$0xf]
      %s740 = scalar_select %p480, 1.0, 0.0
      %v741 = vld [vmem:[%s455] sm:$0x1]
      %v742 = vstv %s740
      %v743 = vmul.f32 %v742, %v741
      %v745 = vlaneseq
      %v746 = vshrl.u32 %v745, 7
      %v747 = vsub.s32 0, %v746
      %v748 = vrot.slane %v743, %v747
      %v782 = vunpack.c.l.b16 %v708
      %v783 = vunpack.c.l.b16 %v709
      %v784 = vunpack.c.l.b16 %v710
      %v785 = vunpack.c.l.b16 %v711
      %v786 = vunpack.c.l.b16 %v712
      %v787 = vunpack.c.l.b16 %v713
      %v788 = vunpack.c.l.b16 %v714
      %v789 = vunpack.c.l.b16 %v715
      %v790 = vunpack.c.l.b16 %v716
      %v791 = vunpack.c.l.b16 %v717
      %v792 = vunpack.c.l.b16 %v718
      %v793 = vunpack.c.l.b16 %v719
      %v794 = vunpack.c.l.b16 %v720
      %v795 = vunpack.c.l.b16 %v721
      %v796 = vunpack.c.l.b16 %v722
      %v797 = vunpack.c.l.b16 %v723
      %v798 = vunpack.c.l.b16 %v724
      %v799 = vunpack.c.l.b16 %v725
      %v800 = vunpack.c.l.b16 %v726
      %v801 = vunpack.c.l.b16 %v727
      %v802 = vunpack.c.l.b16 %v728
      %v803 = vunpack.c.l.b16 %v729
      %v804 = vunpack.c.l.b16 %v730
      %v805 = vunpack.c.l.b16 %v731
      %v806 = vunpack.c.l.b16 %v732
      %v807 = vunpack.c.l.b16 %v733
      %v808 = vunpack.c.l.b16 %v734
      %v809 = vunpack.c.l.b16 %v735
      %v810 = vunpack.c.l.b16 %v736
      %v811 = vunpack.c.l.b16 %v737
      %v812 = vunpack.c.l.b16 %v738
      %v813 = vunpack.c.l.b16 %v739
      %v814 = vpack.c.b16 %v783, %v782
      %v815 = vpack.c.b16 %v785, %v784
      %v816 = vpack.c.b16 %v787, %v786
      %v817 = vpack.c.b16 %v789, %v788
      %v818 = vpack.c.b16 %v791, %v790
      %v819 = vpack.c.b16 %v793, %v792
      %v820 = vpack.c.b16 %v795, %v794
      %v821 = vpack.c.b16 %v797, %v796
      %v822 = vpack.c.b16 %v799, %v798
      %v823 = vpack.c.b16 %v801, %v800
      %v824 = vpack.c.b16 %v803, %v802
      %v825 = vpack.c.b16 %v805, %v804
      %v826 = vpack.c.b16 %v807, %v806
      %v827 = vpack.c.b16 %v809, %v808
      %v828 = vpack.c.b16 %v811, %v810
      %v829 = vpack.c.b16 %v813, %v812
      %846 = vmatprep.subr.bf16.mxu0 0
      %847 = vmatpush1.bf16.msra.mxu0 %v814
      %848 = vmatprep.subr.bf16.mxu0 0
      %849 = vmatpush1.bf16.msra.mxu0 %v815
      %850 = vmatprep.subr.bf16.mxu0 0
      %851 = vmatpush1.bf16.msra.mxu0 %v816
      %852 = vmatprep.subr.bf16.mxu0 0
      %853 = vmatpush1.bf16.msra.mxu0 %v817
      %854 = vmatprep.subr.bf16.mxu0 0
      %855 = vmatpush1.bf16.msra.mxu0 %v818
      %856 = vmatprep.subr.bf16.mxu0 0
      %857 = vmatpush1.bf16.msra.mxu0 %v819
      %858 = vmatprep.subr.bf16.mxu0 0
      %859 = vmatpush1.bf16.msra.mxu0 %v820
      %860 = vmatprep.subr.bf16.mxu0 0
      %861 = vmatpush1.bf16.msra.mxu0 %v821
      %862 = vmatprep.subr.bf16.mxu0 0
      %863 = vmatpush1.bf16.msra.mxu0 %v822
      %864 = vmatprep.subr.bf16.mxu0 0
      %865 = vmatpush1.bf16.msra.mxu0 %v823
      %866 = vmatprep.subr.bf16.mxu0 0
      %867 = vmatpush1.bf16.msra.mxu0 %v824
      %868 = vmatprep.subr.bf16.mxu0 0
      %869 = vmatpush1.bf16.msra.mxu0 %v825
      %870 = vmatprep.subr.bf16.mxu0 0
      %871 = vmatpush1.bf16.msra.mxu0 %v826
      %872 = vmatprep.subr.bf16.mxu0 0
      %873 = vmatpush1.bf16.msra.mxu0 %v827
      %874 = vmatprep.subr.bf16.mxu0 0
      %875 = vmatpush1.bf16.msra.mxu0 %v828
      %876 = vmatprep.subr.bf16.mxu0 0
      %877 = vmatpush1.bf16.msra.mxu0 %v829
      %878 = vmatprep.mubr.bf16.mxu0 %v707
      %879 = vmatmul.mubr.bf16.gmra.mrb[0].mxu0 %v706
      %v880 = vpop.f32.mrb[0].mxu0
      %v881 = vadd.f32 %v748, %v880
      %v882 = vpop.f32.mrb[0].mxu0
      %v883 = vpop.f32.mrb[0].mxu0
      %v884 = vadd.f32 %v748, %v883
      %v885 = vpop.f32.mrb[0].mxu0
      %886 = vdwg.mxu0
      %v887 = vld [vmem:[#allocation2] sm:$0xff]
      %v888 = vld [vmem:[#allocation2 + $0x8] sm:$0xff]
      %v889 = vld [vmem:[%s464] sm:$0xff]
      %v890 = vld [vmem:[%s464 + $0x8] sm:$0xff]
      %892 = vset.pattern.permute.xlu0 0
      %893 = vperm.xlu0 %892, %v889
      %v894 = vpop.permute.xlu0 %893
      %897 = vset.pattern.permute.xlu0 0
      %898 = vperm.xlu0 %897, %v890
      %v899 = vpop.permute.xlu0 %898
      %v901 = vmul.f32 %v881, %v894
      %v902 = vmul.f32 %v884, %v899
      %v903 = vadd.f32 %v887, %v901
      %v904 = vadd.f32 %v888, %v902
      %905 = vst.msk [vmem:[#allocation2] sm:$0xff] %vm555, %v903
      %906 = vst.msk [vmem:[#allocation2 + $0x8] sm:$0xff] %vm555, %v904
      %p907 = scmp.eq.s32.totalorder %s24, 4
      %p908 = pnand %p907, %p480
      %p909 = pneg %p908
      // Predicated region
      $region53: #{_lambda_.28} parent=47 // pred_check
        _
      $region54: #{_lambda_.28} parent=47 // pred_check_branch
        %911 = sbr.rel (%p908) target = $region56
      $region55: #{_lambda_.28} parent=47 // pred_region
        %v912 = vld [vmem:[#allocation2] sm:$0xff]
        %v913 = vld [vmem:[#allocation2 + $0x8] sm:$0xff]
        %v914 = vand.u32 2147483647, %v912
        %v915 = vand.u32 2147483647, %v913
        %v916 = vsel %vm555, %v914, -inf
        %917 = vmax.xlane.f32.xlu0 %v916
        %v918 = vpop.xlane.xlu0 %917
        %v919 = vsel %vm555, %v915, -inf
        %920 = vmax.xlane.f32.xlu0 %v919
        %v921 = vpop.xlane.xlu0 %920
        %v922 = vadd.f32 %v918, 1e-06
        %v923 = vadd.f32 %v921, 1e-06
        %v924 = vld [vmem:[%s470] sm:$0xff]
        %v925 = vld [vmem:[%s470 + $0x8] sm:$0xff]
        %v926 = vrcp.pop %v922
        %v927 = vmul.f32 %v912, %v926
        %v928 = vrcp.pop %v923
        %v929 = vmul.f32 %v913, %v928
        %v930 = vadd.f32 %v924, %v927
        %v931 = vadd.f32 %v925, %v929
        %932 = vst.msk [vmem:[%s476] sm:$0xff] %vm555, %v930
        %933 = vst.msk [vmem:[%s476 + $0x8] sm:$0xff] %vm555, %v931
      $region56: #{_lambda_.28} parent=47 // pred_fallthru
        _
      %s934 = smul.u32 2, %s23
      %p935 = scmp.lt.s32.totalorder %s934, 1
      %s936 = scalar_select %p935, %s934, 1
      %s937 = smul.addr %s936, 8
      %s938 = scalar_lea.vmem %s7, %s937
      // Predicated region
      $region57: #{_lambda_.28} parent=47 // pred_check
        %p939 = pneg %p245
      $region58: #{_lambda_.28} parent=47 // pred_check_branch
        %941 = sbr.rel (%p939) target = $region60
      $region59: #{_lambda_.28} parent=47 // pred_region
        %s942 = smul.u32 2, %s23
      $region60: #{_lambda_.28} parent=47 // pred_fallthru
        _
      // Predicated region
      $region61: #{_lambda_.28} parent=47 // pred_check
        %p943 = pneg %p245
      $region62: #{_lambda_.28} parent=47 // pred_check_branch
        %945 = sbr.rel (%p943) target = $region64
      $region63: #{_lambda_.28} parent=47 // pred_region
        %s946 = smul.u32 2, %s23
        %p947 = scmp.lt.s32.totalorder %s946, 1
        %s948 = scalar_select %p947, %s946, 1
        %s949 = smul.addr %s948, 8
        %s950 = scalar_lea.vmem %s7, %s949
      $region64: #{_lambda_.28} parent=47 // pred_fallthru
        _
    $region48: #{_lambda_.28} parent=5 // pred_fallthru
      _
    %p951 = scmp.le.s32.totalorder 2, %s13
    // Predicated region
    $region65: #{_lambda_.28} parent=5 // pred_check
      %p952 = pneg %p951
    $region66: #{_lambda_.28} parent=5 // pred_check_branch
      %954 = sbr.rel (%p952) target = $region68
    $region67: #{_lambda_.28} parent=5 // pred_region
      %s955 = ssub.s32 %s13, 2
    $region68: #{_lambda_.28} parent=5 // pred_fallthru
      _
  $region6: #{_lambda_.28} parent=0 // loop_footer
    %s17 = sadd.s32 1, %s13
  $region7: #{_lambda_.28} parent=0 // loop_footer_branch
    %12 = sbr.rel target = $region3
  $region8: #{_lambda_.28} parent=0 // loop_exit
    _

// kernel: _lambda_.39
$region0: #{_lambda_.39}
  #allocation0 [shape = 'u32[]', space=smem, size = 0x4, offset = 0x4, fixed_abs, tag = 'smem constant byte address 0x4 - core index']
  #allocation1 [shape = 'u32[144,128]{1,0:T(1,128)}', space=vmem, size = 0x12000, scoped, tag = 'internal scratch']
  #allocation2 [shape = 'f32[16,128]{1,0:T(8,128)}', space=vmem, size = 0x2000, scoped, tag = 'scratch operand']
  %s0 = inlined_call_operand.vmem [shape: bf16[16,64], index: 0, kind: input, shape index: {}]
  %s1 = inlined_call_operand.vmem [shape: bf16[64,128], index: 1, kind: input, shape index: {}]
  %s2 = inlined_call_operand.vmem [shape: f32[1,128], index: 2, kind: input, shape index: {}]
  %s3 = inlined_call_operand.vmem [shape: f32[16,1], index: 3, kind: input, shape index: {}]
  %s4 = inlined_call_operand.vmem [shape: f32[1,128], index: 4, kind: input, shape index: {}]
  %s5 = inlined_call_operand.vmem [shape: bf16[16,128], index: 5, kind: output, shape index: {}]
  %s6 = sld [smem:[#allocation0]]
  $region38: #{_lambda_.39} parent=0
    _
  %s8 = ssub.s32 1, %s6
  %s9 = scalar_select 0, %s8, %s6
  // Predicated region
  $region2: #{_lambda_.39} parent=0 // pred_check
    _
  $region3: #{_lambda_.39} parent=0 // pred_check_branch
    %11 = sbr.rel (0) target = $region5
  $region4: #{_lambda_.39} parent=0 // pred_region
    _
  $region5: #{_lambda_.39} parent=0 // pred_fallthru
    _
  // Predicated region
  $region6: #{_lambda_.39} parent=0 // pred_check
    _
  $region7: #{_lambda_.39} parent=0 // pred_check_branch
    %13 = sbr.rel (0) target = $region9
  $region8: #{_lambda_.39} parent=0 // pred_region
    _
  $region9: #{_lambda_.39} parent=0 // pred_fallthru
    _
  // Predicated region
  $region10: #{_lambda_.39} parent=0 // pred_check
    _
  $region11: #{_lambda_.39} parent=0 // pred_check_branch
    %15 = sbr.rel (0) target = $region13
  $region12: #{_lambda_.39} parent=0 // pred_region
    _
  $region13: #{_lambda_.39} parent=0 // pred_fallthru
    _
  // Predicated region
  $region14: #{_lambda_.39} parent=0 // pred_check
    _
  $region15: #{_lambda_.39} parent=0 // pred_check_branch
    %17 = sbr.rel (0) target = $region17
  $region16: #{_lambda_.39} parent=0 // pred_region
    _
  $region17: #{_lambda_.39} parent=0 // pred_fallthru
    _
  // Predicated region
  $region18: #{_lambda_.39} parent=0 // pred_check
    _
  $region19: #{_lambda_.39} parent=0 // pred_check_branch
    %19 = sbr.rel (0) target = $region21
  $region20: #{_lambda_.39} parent=0 // pred_region
    _
  $region21: #{_lambda_.39} parent=0 // pred_fallthru
    _
  %p21 = scmp.eq.s32.totalorder 0, 0
  // Predicated region
  $region22: #{_lambda_.39} parent=0 // pred_check
    %p22 = pneg %p21
  $region23: #{_lambda_.39} parent=0 // pred_check_branch
    %24 = sbr.rel (%p22) target = $region25
  $region24: #{_lambda_.39} parent=0 // pred_region
    %25 = vst [vmem:[#allocation2] sm:$0xff] 0.0
    %26 = vst [vmem:[#allocation2 + $0x8] sm:$0xff] 0.0
  $region25: #{_lambda_.39} parent=0 // pred_fallthru
    _
  %v27 = vld [vmem:[#allocation2] sm:$0xff]
  %v28 = vld [vmem:[#allocation2 + $0x8] sm:$0xff]
  %v29 = vld [vmem:[%s0] sm:$0xf]
  %v30 = vld [vmem:[%s0 + $0x4] sm:$0xf]
  %v31 = vld [vmem:[%s1] sm:$0xf]
  %v32 = vld [vmem:[%s1 + $0x4] sm:$0xf]
  %v33 = vld [vmem:[%s1 + $0x8] sm:$0xf]
  %v34 = vld [vmem:[%s1 + $0xc] sm:$0xf]
  %v35 = vld [vmem:[%s1 + $0x10] sm:$0xf]
  %v36 = vld [vmem:[%s1 + $0x14] sm:$0xf]
  %v37 = vld [vmem:[%s1 + $0x18] sm:$0xf]
  %v38 = vld [vmem:[%s1 + $0x1c] sm:$0xf]
  %v41 = vunpack.c.l.b16 %v29
  %v42 = vunpack.c.l.b16 %v30
  %v43 = vpack.c.b16 %v42, %v41
  %v52 = vunpack.c.l.b16 %v31
  %v53 = vunpack.c.l.b16 %v32
  %v54 = vunpack.c.l.b16 %v33
  %v55 = vunpack.c.l.b16 %v34
  %v56 = vunpack.c.l.b16 %v35
  %v57 = vunpack.c.l.b16 %v36
  %v58 = vunpack.c.l.b16 %v37
  %v59 = vunpack.c.l.b16 %v38
  %v60 = vpack.c.b16 %v53, %v52
  %v61 = vpack.c.b16 %v55, %v54
  %v62 = vpack.c.b16 %v57, %v56
  %v63 = vpack.c.b16 %v59, %v58
  %vm68 = vcmask 523264
  %v70 = vsel %vm68, %v43, 0
  %72 = vmatprep.subr.bf16.mxu0 0
  %73 = vmatpush1.bf16.msra.mxu0 %v60
  %74 = vmatprep.subr.bf16.mxu0 0
  %75 = vmatpush1.bf16.msra.mxu0 %v61
  %76 = vmatprep.subr.bf16.mxu0 0
  %77 = vmatpush1.bf16.msra.mxu0 %v62
  %78 = vmatprep.subr.bf16.mxu0 0
  %79 = vmatpush1.bf16.msra.mxu0 %v63
  %80 = vmatprep.subr.bf16.mxu0 0
  %81 = vmatpush1.bf16.msra.mxu0 0
  %82 = vmatprep.subr.bf16.mxu0 0
  %83 = vmatpush1.bf16.msra.mxu0 0
  %84 = vmatprep.subr.bf16.mxu0 0
  %85 = vmatpush1.bf16.msra.mxu0 0
  %86 = vmatprep.subr.bf16.mxu0 0
  %87 = vmatpush1.bf16.msra.mxu0 0
  %88 = vmatprep.subr.bf16.mxu0 0
  %89 = vmatpush1.bf16.msra.mxu0 0
  %90 = vmatprep.subr.bf16.mxu0 0
  %91 = vmatpush1.bf16.msra.mxu0 0
  %92 = vmatprep.subr.bf16.mxu0 0
  %93 = vmatpush1.bf16.msra.mxu0 0
  %94 = vmatprep.subr.bf16.mxu0 0
  %95 = vmatpush1.bf16.msra.mxu0 0
  %96 = vmatprep.subr.bf16.mxu0 0
  %97 = vmatpush1.bf16.msra.mxu0 0
  %98 = vmatprep.subr.bf16.mxu0 0
  %99 = vmatpush1.bf16.msra.mxu0 0
  %100 = vmatprep.subr.bf16.mxu0 0
  %101 = vmatpush1.bf16.msra.mxu0 0
  %102 = vmatprep.subr.bf16.mxu0 0
  %103 = vmatpush1.bf16.msra.mxu0 0
  %104 = vmatprep.mubr.bf16.mxu0 0
  %105 = vmatmul.mubr.bf16.gmra.mrb[0].mxu0 %v70
  %v106 = vpop.f32.mrb[0].mxu0
  %v107 = vadd.f32 0.0, %v106
  %v108 = vpop.f32.mrb[0].mxu0
  %v109 = vpop.f32.mrb[0].mxu0
  %v110 = vadd.f32 0.0, %v109
  %v111 = vpop.f32.mrb[0].mxu0
  %112 = vdwg.mxu0
  %v113 = vadd.f32 %v27, %v107
  %v114 = vadd.f32 %v28, %v110
  %115 = vst [vmem:[#allocation2] sm:$0xff] %v113
  %116 = vst [vmem:[#allocation2 + $0x8] sm:$0xff] %v114
  // Predicated region
  $region26: #{_lambda_.39} parent=0 // pred_check
    %p117 = pneg %p21
  $region27: #{_lambda_.39} parent=0 // pred_check_branch
    %119 = sbr.rel (%p117) target = $region29
  $region28: #{_lambda_.39} parent=0 // pred_region
    %v120 = vld [vmem:[#allocation2] sm:$0xff]
    %v121 = vld [vmem:[#allocation2 + $0x8] sm:$0xff]
    %v122 = vld [vmem:[%s2] sm:$0x1]
    %v124 = vlaneseq
    %v125 = vshrl.u32 %v124, 7
    %v126 = vsub.s32 0, %v125
    %v127 = vrot.slane %v122, %v126
    %v129 = vadd.f32 %v120, %v127
    %v130 = vadd.f32 %v121, %v127
    %v131 = vld [vmem:[%s3] sm:$0xff]
    %v132 = vld [vmem:[%s3 + $0x8] sm:$0xff]
    %v133 = vld [vmem:[%s4] sm:$0x1]
    %135 = vset.pattern.permute.xlu0 0
    %136 = vperm.xlu0 %135, %v131
    %v137 = vpop.permute.xlu0 %136
    %140 = vset.pattern.permute.xlu0 0
    %141 = vperm.xlu0 %140, %v132
    %v142 = vpop.permute.xlu0 %141
    %v145 = vlaneseq
    %v146 = vshrl.u32 %v145, 7
    %v147 = vsub.s32 0, %v146
    %v148 = vrot.slane %v133, %v147
    %v150 = vmul.f32 %v137, %v148
    %v151 = vmul.f32 %v142, %v148
    %v152 = vadd.f32 %v129, %v150
    %v153 = vadd.f32 %v130, %v151
    %v154 = vmul.f32 %v152, 0.5
    %v155 = vmul.f32 %v153, 0.5
    %v156 = vmul.f32 %v152, 0.70710677
    %v157 = vmul.f32 %v153, 0.70710677
    %vm158 = vcmp.ge.f32.partialorder %v156, 0.0
    %vm159 = vcmp.ge.f32.partialorder %v157, 0.0
    %v160 = vsel %vm158, 1.0, -1.0
    %v161 = vsel %vm159, 1.0, -1.0
    %v162 = vand.u32 2147483647, %v156
    %v163 = vand.u32 2147483647, %v157
    %v164 = vmul.f32 %v162, 0.3275911
    %v165 = vmul.f32 %v163, 0.3275911
    %v166 = vadd.f32 %v164, 1.0
    %v167 = vadd.f32 %v165, 1.0
    %v168 = vrcp.pop %v166
    %v169 = vrcp.pop %v167
    %v170 = vmul.f32 %v168, 1.0614054
    %v171 = vmul.f32 %v169, 1.0614054
    %v172 = vadd.f32 %v170, -1.4531521
    %v173 = vadd.f32 %v171, -1.4531521
    %v174 = vmul.f32 %v172, %v168
    %v175 = vmul.f32 %v173, %v169
    %v176 = vadd.f32 %v174, 1.4214138
    %v177 = vadd.f32 %v175, 1.4214138
    %v178 = vmul.f32 %v176, %v168
    %v179 = vmul.f32 %v177, %v169
    %v180 = vadd.f32 %v178, -0.28449672
    %v181 = vadd.f32 %v179, -0.28449672
    %v182 = vmul.f32 %v180, %v168
    %v183 = vmul.f32 %v181, %v169
    %v184 = vadd.f32 %v182, 0.2548296
    %v185 = vadd.f32 %v183, 0.2548296
    %v186 = vmul.f32 %v184, %v168
    %v187 = vmul.f32 %v185, %v169
    %v188 = vsub.f32 0.0, %v162
    %v189 = vsub.f32 0.0, %v163
    %v190 = vmul.f32 %v188, %v162
    %v191 = vmul.f32 %v189, %v163
    %v192 = vmul.f32 %v190, 1.442695
    %v193 = vpow.pop %v192
    %v194 = vmul.f32 %v191, 1.442695
    %v195 = vpow.pop %v194
    %v196 = vmul.f32 %v186, %v193
    %v197 = vmul.f32 %v187, %v195
    %v198 = vsub.f32 1.0, %v196
    %v199 = vsub.f32 1.0, %v197
    %v200 = vmul.f32 %v160, %v198
    %v201 = vmul.f32 %v161, %v199
    %v202 = vadd.f32 %v200, 1.0
    %v203 = vadd.f32 %v201, 1.0
    %v204 = vmul.f32 %v154, %v202
    %v205 = vmul.f32 %v155, %v203
    %v206 = vpack.c.bf16 %v205, %v204
    %v208 = vunpack.c.l.b16 %v206
    %v209 = vunpack.c.h.b16 %v206
    %v210 = vpack.c.b16 %v208, %v208
    %v211 = vpack.c.b16 %v209, %v209
    %214 = vst [vmem:[%s5] sm:$0xf] %v210
    %215 = vst [vmem:[%s5 + $0x4] sm:$0xf] %v211
  $region29: #{_lambda_.39} parent=0 // pred_fallthru
    _
  // Predicated region
  $region30: #{_lambda_.39} parent=0 // pred_check
    _
  $region31: #{_lambda_.39} parent=0 // pred_check_branch
    %217 = sbr.rel (0) target = $region33
  $region32: #{_lambda_.39} parent=0 // pred_region
    _
  $region33: #{_lambda_.39} parent=0 // pred_fallthru
    _
  // Predicated region
  $region34: #{_lambda_.39} parent=0 // pred_check
    _
  $region35: #{_lambda_.39} parent=0 // pred_check_branch
    %219 = sbr.rel (0) target = $region37
  $region36: #{_lambda_.39} parent=0 // pred_region
    _
  $region37: #{_lambda_.39} parent=0 // pred_fallthru
    _

// kernel: _lambda_.41
$region0: #{_lambda_.41}
  #allocation0 [shape = 'u32[]', space=smem, size = 0x4, offset = 0x4, fixed_abs, tag = 'smem constant byte address 0x4 - core index']
  #allocation1 [shape = 'u32[144,128]{1,0:T(1,128)}', space=vmem, size = 0x12000, scoped, tag = 'internal scratch']
  %s0 = inlined_call_operand.vmem [shape: bf16[16,64], index: 0, kind: input, shape index: {}]
  %s1 = inlined_call_operand.vmem [shape: f32[1,64], index: 1, kind: input, shape index: {}]
  %s2 = inlined_call_operand.vmem [shape: f32[1,64], index: 2, kind: input, shape index: {}]
  %s3 = inlined_call_operand.hbm [shape: f32[16,64], index: 3, kind: output, shape index: {}]
  %s4 = sld [smem:[#allocation0]]
  $region22: #{_lambda_.41} parent=0
    _
  %s6 = ssub.s32 1, %s4
  %s7 = scalar_select 0, %s6, %s4
  $region1: #{_lambda_.41} parent=0
    #allocation2 [shape = 'u8[8192]{0}', space=vmem, size = 0x2000, scoped, tag = 'output window, operand 0, single buffered']
    #allocation3 [shape = 's32[1]{0}', space=sflag, size = 0x4, scoped, tag = 'scoped memory for _lambda_.41']
    %8 = vsyncpa [#allocation3], 0
    // Predicated region
    $region2: #{_lambda_.41} parent=1 // pred_check
      _
    $region3: #{_lambda_.41} parent=1 // pred_check_branch
      %10 = sbr.rel (0) target = $region5
    $region4: #{_lambda_.41} parent=1 // pred_region
      _
    $region5: #{_lambda_.41} parent=1 // pred_fallthru
      _
    // Predicated region
    $region6: #{_lambda_.41} parent=1 // pred_check
      _
    $region7: #{_lambda_.41} parent=1 // pred_check_branch
      %12 = sbr.rel (0) target = $region9
    $region8: #{_lambda_.41} parent=1 // pred_region
      _
    $region9: #{_lambda_.41} parent=1 // pred_fallthru
      _
    // Predicated region
    $region10: #{_lambda_.41} parent=1 // pred_check
      _
    $region11: #{_lambda_.41} parent=1 // pred_check_branch
      %14 = sbr.rel (0) target = $region13
    $region12: #{_lambda_.41} parent=1 // pred_region
      _
    $region13: #{_lambda_.41} parent=1 // pred_fallthru
      _
    %v15 = vld [vmem:[%s0] sm:$0xf]
    %v16 = vld [vmem:[%s0 + $0x4] sm:$0xf]
    %v17 = vunpack.c.l.bf16 %v15
    %v18 = vunpack.c.l.bf16 %v16
    %vm19 = vcmask 523264
    %v20 = vsel %vm19, %v17, 0.0
    %21 = vadd.xlane.f32.xlu0 %v20
    %v22 = vpop.xlane.xlu0 %21
    %v23 = vsel %vm19, %v18, 0.0
    %24 = vadd.xlane.f32.xlu0 %v23
    %v25 = vpop.xlane.xlu0 %24
    %v26 = vrcp.pop 64.0
    %v27 = vmul.f32 %v22, %v26
    %v28 = vmul.f32 %v25, %v26
    %v29 = vsub.f32 %v17, %v27
    %v30 = vsub.f32 %v18, %v28
    %v31 = vmul.f32 %v29, %v29
    %v32 = vmul.f32 %v30, %v30
    %v33 = vsel %vm19, %v31, 0.0
    %34 = vadd.xlane.f32.xlu0 %v33
    %v35 = vpop.xlane.xlu0 %34
    %v36 = vsel %vm19, %v32, 0.0
    %37 = vadd.xlane.f32.xlu0 %v36
    %v38 = vpop.xlane.xlu0 %37
    %v39 = vmul.f32 %v35, %v26
    %v40 = vmul.f32 %v38, %v26
    %v41 = vadd.f32 %v39, 1e-05
    %v42 = vadd.f32 %v40, 1e-05
    %v43 = vrsqrt.pop %v41
    %v44 = vrsqrt.pop %v42
    %v45 = vmul.f32 %v29, %v43
    %v46 = vmul.f32 %v30, %v44
    %v47 = vld [vmem:[%s1] sm:$0x1]
    %v49 = vlaneseq
    %v50 = vshrl.u32 %v49, 7
    %v51 = vsub.s32 0, %v50
    %v52 = vrot.slane %v47, %v51
    %v54 = vmul.f32 %v45, %v52
    %v55 = vmul.f32 %v46, %v52
    %v56 = vld [vmem:[%s2] sm:$0x1]
    %v58 = vlaneseq
    %v59 = vshrl.u32 %v58, 7
    %v60 = vsub.s32 0, %v59
    %v61 = vrot.slane %v56, %v60
    %v63 = vadd.f32 %v54, %v61
    %v64 = vadd.f32 %v55, %v61
    %65 = vst.msk [vmem:[#allocation2] sm:$0xff] %vm19, %v63
    %66 = vst.msk [vmem:[#allocation2 + $0x8] sm:$0xff] %vm19, %v64
    // Predicated region
    $region14: #{_lambda_.41} parent=1 // pred_check
      _
    $region15: #{_lambda_.41} parent=1 // pred_check_branch
      %68 = sbr.rel (0) target = $region17
    $region16: #{_lambda_.41} parent=1 // pred_region
      %s70 = ssub.s32 256, 256
      %71 = vsyncadd [#allocation3], %s70
      %s72 = sshll.u32 [#allocation2], 4
      %s73 = int_to_ptr.vmem [resolvable:$true] %s72
      %78 = dma.vmem_to_hbm [thread:$0]  %s73, 256, %s3, [#allocation3], 128, 128, 8
    $region17: #{_lambda_.41} parent=1 // pred_fallthru
      _
    // Predicated region
    $region18: #{_lambda_.41} parent=1 // pred_check
      _
    $region19: #{_lambda_.41} parent=1 // pred_check_branch
      %80 = sbr.rel (0) target = $region21
    $region20: #{_lambda_.41} parent=1 // pred_region
      %81 = dma.done [#allocation3], 256
    $region21: #{_lambda_.41} parent=1 // pred_fallthru
      _
    %82 = vsyncpa [#allocation3], 1

// kernel: _lambda_.40
$region0: #{_lambda_.40}
  #allocation0 [shape = 'u32[]', space=smem, size = 0x4, offset = 0x4, fixed_abs, tag = 'smem constant byte address 0x4 - core index']
  #allocation1 [shape = 'u32[144,128]{1,0:T(1,128)}', space=vmem, size = 0x12000, scoped, tag = 'internal scratch']
  #allocation2 [shape = 'f32[16,64]{1,0:T(8,128)}', space=vmem, size = 0x2000, scoped, tag = 'scratch operand']
  %s0 = inlined_call_operand.vmem [shape: bf16[16,128], index: 0, kind: input, shape index: {}]
  %s1 = inlined_call_operand.vmem [shape: bf16[128,64], index: 1, kind: input, shape index: {}]
  %s2 = inlined_call_operand.vmem [shape: f32[1,64], index: 2, kind: input, shape index: {}]
  %s3 = inlined_call_operand.vmem [shape: bf16[16,64], index: 3, kind: output, shape index: {}]
  %s4 = sld [smem:[#allocation0]]
  $region30: #{_lambda_.40} parent=0
    _
  %s6 = ssub.s32 1, %s4
  %s7 = scalar_select 0, %s6, %s4
  // Predicated region
  $region2: #{_lambda_.40} parent=0 // pred_check
    _
  $region3: #{_lambda_.40} parent=0 // pred_check_branch
    %9 = sbr.rel (0) target = $region5
  $region4: #{_lambda_.40} parent=0 // pred_region
    _
  $region5: #{_lambda_.40} parent=0 // pred_fallthru
    _
  // Predicated region
  $region6: #{_lambda_.40} parent=0 // pred_check
    _
  $region7: #{_lambda_.40} parent=0 // pred_check_branch
    %11 = sbr.rel (0) target = $region9
  $region8: #{_lambda_.40} parent=0 // pred_region
    _
  $region9: #{_lambda_.40} parent=0 // pred_fallthru
    _
  // Predicated region
  $region10: #{_lambda_.40} parent=0 // pred_check
    _
  $region11: #{_lambda_.40} parent=0 // pred_check_branch
    %13 = sbr.rel (0) target = $region13
  $region12: #{_lambda_.40} parent=0 // pred_region
    _
  $region13: #{_lambda_.40} parent=0 // pred_fallthru
    _
  %p15 = scmp.eq.s32.totalorder 0, 0
  // Predicated region
  $region14: #{_lambda_.40} parent=0 // pred_check
    %p16 = pneg %p15
  $region15: #{_lambda_.40} parent=0 // pred_check_branch
    %18 = sbr.rel (%p16) target = $region17
  $region16: #{_lambda_.40} parent=0 // pred_region
    %vm19 = vcmask 523264
    %20 = vst.msk [vmem:[#allocation2] sm:$0xff] %vm19, 0.0
    %21 = vst.msk [vmem:[#allocation2 + $0x8] sm:$0xff] %vm19, 0.0
  $region17: #{_lambda_.40} parent=0 // pred_fallthru
    _
  %v22 = vld [vmem:[#allocation2] sm:$0xff]
  %v23 = vld [vmem:[#allocation2 + $0x8] sm:$0xff]
  %v24 = vld [vmem:[%s0] sm:$0xf]
  %v25 = vld [vmem:[%s0 + $0x4] sm:$0xf]
  %v26 = vld [vmem:[%s1] sm:$0xf]
  %v27 = vld [vmem:[%s1 + $0x4] sm:$0xf]
  %v28 = vld [vmem:[%s1 + $0x8] sm:$0xf]
  %v29 = vld [vmem:[%s1 + $0xc] sm:$0xf]
  %v30 = vld [vmem:[%s1 + $0x10] sm:$0xf]
  %v31 = vld [vmem:[%s1 + $0x14] sm:$0xf]
  %v32 = vld [vmem:[%s1 + $0x18] sm:$0xf]
  %v33 = vld [vmem:[%s1 + $0x1c] sm:$0xf]
  %v34 = vld [vmem:[%s1 + $0x20] sm:$0xf]
  %v35 = vld [vmem:[%s1 + $0x24] sm:$0xf]
  %v36 = vld [vmem:[%s1 + $0x28] sm:$0xf]
  %v37 = vld [vmem:[%s1 + $0x2c] sm:$0xf]
  %v38 = vld [vmem:[%s1 + $0x30] sm:$0xf]
  %v39 = vld [vmem:[%s1 + $0x34] sm:$0xf]
  %v40 = vld [vmem:[%s1 + $0x38] sm:$0xf]
  %v41 = vld [vmem:[%s1 + $0x3c] sm:$0xf]
  %v44 = vunpack.c.l.b16 %v24
  %v45 = vunpack.c.l.b16 %v25
  %v46 = vpack.c.b16 %v45, %v44
  %v64 = vunpack.c.l.b16 %v26
  %v65 = vunpack.c.l.b16 %v27
  %v66 = vunpack.c.l.b16 %v28
  %v67 = vunpack.c.l.b16 %v29
  %v68 = vunpack.c.l.b16 %v30
  %v69 = vunpack.c.l.b16 %v31
  %v70 = vunpack.c.l.b16 %v32
  %v71 = vunpack.c.l.b16 %v33
  %v72 = vunpack.c.l.b16 %v34
  %v73 = vunpack.c.l.b16 %v35
  %v74 = vunpack.c.l.b16 %v36
  %v75 = vunpack.c.l.b16 %v37
  %v76 = vunpack.c.l.b16 %v38
  %v77 = vunpack.c.l.b16 %v39
  %v78 = vunpack.c.l.b16 %v40
  %v79 = vunpack.c.l.b16 %v41
  %v80 = vpack.c.b16 %v65, %v64
  %v81 = vpack.c.b16 %v67, %v66
  %v82 = vpack.c.b16 %v69, %v68
  %v83 = vpack.c.b16 %v71, %v70
  %v84 = vpack.c.b16 %v73, %v72
  %v85 = vpack.c.b16 %v75, %v74
  %v86 = vpack.c.b16 %v77, %v76
  %v87 = vpack.c.b16 %v79, %v78
  %96 = vmatprep.subr.bf16.mxu0 0
  %97 = vmatpush1.bf16.msra.mxu0 %v80
  %98 = vmatprep.subr.bf16.mxu0 0
  %99 = vmatpush1.bf16.msra.mxu0 %v81
  %100 = vmatprep.subr.bf16.mxu0 0
  %101 = vmatpush1.bf16.msra.mxu0 %v82
  %102 = vmatprep.subr.bf16.mxu0 0
  %103 = vmatpush1.bf16.msra.mxu0 %v83
  %104 = vmatprep.subr.bf16.mxu0 0
  %105 = vmatpush1.bf16.msra.mxu0 %v84
  %106 = vmatprep.subr.bf16.mxu0 0
  %107 = vmatpush1.bf16.msra.mxu0 %v85
  %108 = vmatprep.subr.bf16.mxu0 0
  %109 = vmatpush1.bf16.msra.mxu0 %v86
  %110 = vmatprep.subr.bf16.mxu0 0
  %111 = vmatpush1.bf16.msra.mxu0 %v87
  %112 = vmatprep.subr.bf16.mxu0 0
  %113 = vmatpush1.bf16.msra.mxu0 0
  %114 = vmatprep.subr.bf16.mxu0 0
  %115 = vmatpush1.bf16.msra.mxu0 0
  %116 = vmatprep.subr.bf16.mxu0 0
  %117 = vmatpush1.bf16.msra.mxu0 0
  %118 = vmatprep.subr.bf16.mxu0 0
  %119 = vmatpush1.bf16.msra.mxu0 0
  %120 = vmatprep.subr.bf16.mxu0 0
  %121 = vmatpush1.bf16.msra.mxu0 0
  %122 = vmatprep.subr.bf16.mxu0 0
  %123 = vmatpush1.bf16.msra.mxu0 0
  %124 = vmatprep.subr.bf16.mxu0 0
  %125 = vmatpush1.bf16.msra.mxu0 0
  %126 = vmatprep.subr.bf16.mxu0 0
  %127 = vmatpush1.bf16.msra.mxu0 0
  %128 = vmatprep.mubr.bf16.mxu0 0
  %129 = vmatmul.mubr.bf16.gmra.mrb[0].mxu0 %v46
  %v130 = vpop.f32.mrb[0].mxu0
  %v131 = vadd.f32 0.0, %v130
  %v132 = vpop.f32.mrb[0].mxu0
  %v133 = vpop.f32.mrb[0].mxu0
  %v134 = vadd.f32 0.0, %v133
  %v135 = vpop.f32.mrb[0].mxu0
  %136 = vdwg.mxu0
  %v137 = vadd.f32 %v22, %v131
  %v138 = vadd.f32 %v23, %v134
  %vm139 = vcmask 523264
  %140 = vst.msk [vmem:[#allocation2] sm:$0xff] %vm139, %v137
  %141 = vst.msk [vmem:[#allocation2 + $0x8] sm:$0xff] %vm139, %v138
  // Predicated region
  $region18: #{_lambda_.40} parent=0 // pred_check
    %p142 = pneg %p15
  $region19: #{_lambda_.40} parent=0 // pred_check_branch
    %144 = sbr.rel (%p142) target = $region21
  $region20: #{_lambda_.40} parent=0 // pred_region
    %v145 = vld [vmem:[#allocation2] sm:$0xff]
    %v146 = vld [vmem:[#allocation2 + $0x8] sm:$0xff]
    %v147 = vld [vmem:[%s2] sm:$0x1]
    %v149 = vlaneseq
    %v150 = vshrl.u32 %v149, 7
    %v151 = vsub.s32 0, %v150
    %v152 = vrot.slane %v147, %v151
    %v154 = vadd.f32 %v145, %v152
    %v155 = vadd.f32 %v146, %v152
    %v156 = vpack.c.bf16 %v155, %v154
    %v158 = vunpack.c.l.b16 %v156
    %v159 = vunpack.c.h.b16 %v156
    %v160 = vpack.c.b16 %v158, %v158
    %v161 = vpack.c.b16 %v159, %v159
    %vm164 = vcmask 519168
    %165 = vst.msk [vmem:[%s3] sm:$0xf] %vm164, %v160
    %166 = vst.msk [vmem:[%s3 + $0x4] sm:$0xf] %vm164, %v161
  $region21: #{_lambda_.40} parent=0 // pred_fallthru
    _
  // Predicated region
  $region22: #{_lambda_.40} parent=0 // pred_check
    _
  $region23: #{_lambda_.40} parent=0 // pred_check_branch
    %168 = sbr.rel (0) target = $region25
  $region24: #{_lambda_.40} parent=0 // pred_region
    _
  $region25: #{_lambda_.40} parent=0 // pred_fallthru
    _
  // Predicated region
  $region26: #{_lambda_.40} parent=0 // pred_check
    _
  $region27: #{_lambda_.40} parent=0 // pred_check_branch
    %170 = sbr.rel (0) target = $region29
  $region28: #{_lambda_.40} parent=0 // pred_region
    _
  $region29: #{_lambda_.40} parent=0 // pred_fallthru
    _

// kernel: _lambda_.38
$region0: #{_lambda_.38}
  #allocation0 [shape = 'u32[]', space=smem, size = 0x4, offset = 0x4, fixed_abs, tag = 'smem constant byte address 0x4 - core index']
  #allocation1 [shape = 'u32[144,128]{1,0:T(1,128)}', space=vmem, size = 0x12000, scoped, tag = 'internal scratch']
  #allocation2 [shape = 'f32[16,128]{1,0:T(8,128)}', space=vmem, size = 0x2000, scoped, tag = 'scratch operand']
  %s0 = inlined_call_operand.vmem [shape: bf16[16,64], index: 0, kind: input, shape index: {}]
  %s1 = inlined_call_operand.vmem [shape: bf16[64,128], index: 1, kind: input, shape index: {}]
  %s2 = inlined_call_operand.vmem [shape: f32[1,128], index: 2, kind: input, shape index: {}]
  %s3 = inlined_call_operand.hbm [shape: f32[16,128], index: 3, kind: output, shape index: {}]
  %s4 = sld [smem:[#allocation0]]
  $region30: #{_lambda_.38} parent=0
    _
  %s6 = ssub.s32 1, %s4
  %s7 = scalar_select 0, %s6, %s4
  $region1: #{_lambda_.38} parent=0
    #allocation3 [shape = 'u8[8192]{0}', space=vmem, size = 0x2000, scoped, tag = 'output window, operand 0, single buffered']
    #allocation4 [shape = 's32[1]{0}', space=sflag, size = 0x4, scoped, tag = 'scoped memory for _lambda_.38']
    %8 = vsyncpa [#allocation4], 0
    // Predicated region
    $region2: #{_lambda_.38} parent=1 // pred_check
      _
    $region3: #{_lambda_.38} parent=1 // pred_check_branch
      %10 = sbr.rel (0) target = $region5
    $region4: #{_lambda_.38} parent=1 // pred_region
      _
    $region5: #{_lambda_.38} parent=1 // pred_fallthru
      _
    // Predicated region
    $region6: #{_lambda_.38} parent=1 // pred_check
      _
    $region7: #{_lambda_.38} parent=1 // pred_check_branch
      %12 = sbr.rel (0) target = $region9
    $region8: #{_lambda_.38} parent=1 // pred_region
      _
    $region9: #{_lambda_.38} parent=1 // pred_fallthru
      _
    // Predicated region
    $region10: #{_lambda_.38} parent=1 // pred_check
      _
    $region11: #{_lambda_.38} parent=1 // pred_check_branch
      %14 = sbr.rel (0) target = $region13
    $region12: #{_lambda_.38} parent=1 // pred_region
      _
    $region13: #{_lambda_.38} parent=1 // pred_fallthru
      _
    %p16 = scmp.eq.s32.totalorder 0, 0
    // Predicated region
    $region14: #{_lambda_.38} parent=1 // pred_check
      %p17 = pneg %p16
    $region15: #{_lambda_.38} parent=1 // pred_check_branch
      %19 = sbr.rel (%p17) target = $region17
    $region16: #{_lambda_.38} parent=1 // pred_region
      %20 = vst [vmem:[#allocation2] sm:$0xff] 0.0
      %21 = vst [vmem:[#allocation2 + $0x8] sm:$0xff] 0.0
    $region17: #{_lambda_.38} parent=1 // pred_fallthru
      _
    %v22 = vld [vmem:[#allocation2] sm:$0xff]
    %v23 = vld [vmem:[#allocation2 + $0x8] sm:$0xff]
    %v24 = vld [vmem:[%s0] sm:$0xf]
    %v25 = vld [vmem:[%s0 + $0x4] sm:$0xf]
    %v26 = vld [vmem:[%s1] sm:$0xf]
    %v27 = vld [vmem:[%s1 + $0x4] sm:$0xf]
    %v28 = vld [vmem:[%s1 + $0x8] sm:$0xf]
    %v29 = vld [vmem:[%s1 + $0xc] sm:$0xf]
    %v30 = vld [vmem:[%s1 + $0x10] sm:$0xf]
    %v31 = vld [vmem:[%s1 + $0x14] sm:$0xf]
    %v32 = vld [vmem:[%s1 + $0x18] sm:$0xf]
    %v33 = vld [vmem:[%s1 + $0x1c] sm:$0xf]
    %v36 = vunpack.c.l.b16 %v24
    %v37 = vunpack.c.l.b16 %v25
    %v38 = vpack.c.b16 %v37, %v36
    %v47 = vunpack.c.l.b16 %v26
    %v48 = vunpack.c.l.b16 %v27
    %v49 = vunpack.c.l.b16 %v28
    %v50 = vunpack.c.l.b16 %v29
    %v51 = vunpack.c.l.b16 %v30
    %v52 = vunpack.c.l.b16 %v31
    %v53 = vunpack.c.l.b16 %v32
    %v54 = vunpack.c.l.b16 %v33
    %v55 = vpack.c.b16 %v48, %v47
    %v56 = vpack.c.b16 %v50, %v49
    %v57 = vpack.c.b16 %v52, %v51
    %v58 = vpack.c.b16 %v54, %v53
    %vm63 = vcmask 523264
    %v65 = vsel %vm63, %v38, 0
    %67 = vmatprep.subr.bf16.mxu0 0
    %68 = vmatpush1.bf16.msra.mxu0 %v55
    %69 = vmatprep.subr.bf16.mxu0 0
    %70 = vmatpush1.bf16.msra.mxu0 %v56
    %71 = vmatprep.subr.bf16.mxu0 0
    %72 = vmatpush1.bf16.msra.mxu0 %v57
    %73 = vmatprep.subr.bf16.mxu0 0
    %74 = vmatpush1.bf16.msra.mxu0 %v58
    %75 = vmatprep.subr.bf16.mxu0 0
    %76 = vmatpush1.bf16.msra.mxu0 0
    %77 = vmatprep.subr.bf16.mxu0 0
    %78 = vmatpush1.bf16.msra.mxu0 0
    %79 = vmatprep.subr.bf16.mxu0 0
    %80 = vmatpush1.bf16.msra.mxu0 0
    %81 = vmatprep.subr.bf16.mxu0 0
    %82 = vmatpush1.bf16.msra.mxu0 0
    %83 = vmatprep.subr.bf16.mxu0 0
    %84 = vmatpush1.bf16.msra.mxu0 0
    %85 = vmatprep.subr.bf16.mxu0 0
    %86 = vmatpush1.bf16.msra.mxu0 0
    %87 = vmatprep.subr.bf16.mxu0 0
    %88 = vmatpush1.bf16.msra.mxu0 0
    %89 = vmatprep.subr.bf16.mxu0 0
    %90 = vmatpush1.bf16.msra.mxu0 0
    %91 = vmatprep.subr.bf16.mxu0 0
    %92 = vmatpush1.bf16.msra.mxu0 0
    %93 = vmatprep.subr.bf16.mxu0 0
    %94 = vmatpush1.bf16.msra.mxu0 0
    %95 = vmatprep.subr.bf16.mxu0 0
    %96 = vmatpush1.bf16.msra.mxu0 0
    %97 = vmatprep.subr.bf16.mxu0 0
    %98 = vmatpush1.bf16.msra.mxu0 0
    %99 = vmatprep.mubr.bf16.mxu0 0
    %100 = vmatmul.mubr.bf16.gmra.mrb[0].mxu0 %v65
    %v101 = vpop.f32.mrb[0].mxu0
    %v102 = vadd.f32 0.0, %v101
    %v103 = vpop.f32.mrb[0].mxu0
    %v104 = vpop.f32.mrb[0].mxu0
    %v105 = vadd.f32 0.0, %v104
    %v106 = vpop.f32.mrb[0].mxu0
    %107 = vdwg.mxu0
    %v108 = vadd.f32 %v22, %v102
    %v109 = vadd.f32 %v23, %v105
    %110 = vst [vmem:[#allocation2] sm:$0xff] %v108
    %111 = vst [vmem:[#allocation2 + $0x8] sm:$0xff] %v109
    // Predicated region
    $region18: #{_lambda_.38} parent=1 // pred_check
      %p112 = pneg %p16
    $region19: #{_lambda_.38} parent=1 // pred_check_branch
      %114 = sbr.rel (%p112) target = $region21
    $region20: #{_lambda_.38} parent=1 // pred_region
      %v115 = vld [vmem:[#allocation2] sm:$0xff]
      %v116 = vld [vmem:[#allocation2 + $0x8] sm:$0xff]
      %v117 = vld [vmem:[%s2] sm:$0x1]
      %v119 = vlaneseq
      %v120 = vshrl.u32 %v119, 7
      %v121 = vsub.s32 0, %v120
      %v122 = vrot.slane %v117, %v121
      %v124 = vadd.f32 %v115, %v122
      %v125 = vadd.f32 %v116, %v122
      %126 = vadd.xlane.f32.xlu0 %v124
      %v127 = vpop.xlane.xlu0 %126
      %128 = vadd.xlane.f32.xlu0 %v125
      %v129 = vpop.xlane.xlu0 %128
      %v130 = vrcp.pop 128.0
      %v131 = vmul.f32 %v127, %v130
      %v132 = vmul.f32 %v129, %v130
      %v133 = vsub.f32 %v124, %v131
      %v134 = vsub.f32 %v125, %v132
      %135 = vst [vmem:[#allocation3] sm:$0xff] %v133
      %136 = vst [vmem:[#allocation3 + $0x8] sm:$0xff] %v134
    $region21: #{_lambda_.38} parent=1 // pred_fallthru
      _
    // Predicated region
    $region22: #{_lambda_.38} parent=1 // pred_check
      _
    $region23: #{_lambda_.38} parent=1 // pred_check_branch
      %138 = sbr.rel (0) target = $region25
    $region24: #{_lambda_.38} parent=1 // pred_region
      %s140 = ssub.s32 256, 256
      %141 = vsyncadd [#allocation4], %s140
      %s142 = sshll.u32 [#allocation3], 4
      %s143 = int_to_ptr.vmem [resolvable:$true] %s142
      %148 = dma.vmem_to_hbm [thread:$0]  %s143, 256, %s3, [#allocation4], 128, 128, 8
    $region25: #{_lambda_.38} parent=1 // pred_fallthru
      _
    // Predicated region
    $region26: #{_lambda_.38} parent=1 // pred_check
      _
    $region27: #{_lambda_.38} parent=1 // pred_check_branch
      %150 = sbr.rel (0) target = $region29
    $region28: #{_lambda_.38} parent=1 // pred_region
      %151 = dma.done [#allocation4], 256
    $region29: #{_lambda_.38} parent=1 // pred_fallthru
      _
    %152 = vsyncpa [#allocation4], 1

</llo_original>
